<compile_context>
chip_gen: v6e
topology: v6e:2x2x1
jax: 0.10.0
libtpu: 0.0.40
codegen_flags: <defaults>
</compile_context>

<pallas_src>
import functools
import math

import jax
import jax.numpy as jnp
from jax import lax
from jax.experimental import pallas as pl
from jax.experimental.pallas import tpu as pltpu

_VMEM_LIMIT = 48 * 1024 * 1024  # explicit scoped-VMEM budget (safe on v5e/v6e/v7x)


# ----------------------------- Pallas kernels -------------------------------

def _encoder_layer_kernel(x_ref, maskneg_ref, wqkv_ref, bqkv_ref, wo_ref, bo_ref,
                          ln1g_ref, ln1b_ref, w1_ref, b1_ref, w2_ref, b2_ref,
                          ln2g_ref, ln2b_ref, out_ref, *, num_heads):
    """One post-norm nn.TransformerEncoderLayer (eval-mode), whole thing in VMEM."""
    B, S, E = x_ref.shape
    H = num_heads
    dh = E // H
    scale = 1.0 / math.sqrt(dh)

    x = x_ref[...]                                        # (B, S, E) f32
    x2 = x.reshape(B * S, E)
    qkv = jnp.dot(x2, wqkv_ref[...], preferred_element_type=jnp.float32) + bqkv_ref[...]
    q = qkv[:, 0 * E:1 * E].reshape(B, S, E)
    k = qkv[:, 1 * E:2 * E].reshape(B, S, E)
    v = qkv[:, 2 * E:3 * E].reshape(B, S, E)
    neg = maskneg_ref[...].reshape(B, 1, S)               # additive key-padding mask

    ctx_heads = []
    for h in range(H):                                    # batched over B per head
        qh = q[:, :, h * dh:(h + 1) * dh] * scale
        kh = k[:, :, h * dh:(h + 1) * dh]
        vh = v[:, :, h * dh:(h + 1) * dh]
        s = jnp.einsum("bqd,bkd->bqk", qh, kh,
                       preferred_element_type=jnp.float32)        # (B, S, S)
        s = s + neg
        s = s - jnp.max(s, axis=-1, keepdims=True)
        p = jnp.exp(s)
        p = p / jnp.sum(p, axis=-1, keepdims=True)
        ctx_heads.append(jnp.einsum("bqk,bkd->bqd", p, vh,
                                    preferred_element_type=jnp.float32))
    ctx = jnp.concatenate(ctx_heads, axis=-1).reshape(B * S, E)   # single full-width write

    a = jnp.dot(ctx, wo_ref[...], preferred_element_type=jnp.float32) + bo_ref[...]
    h1 = x2 + a                                    # TODO(synk): dropout = identity (eval)
    mu1 = jnp.mean(h1, axis=-1, keepdims=True)
    var1 = jnp.mean((h1 - mu1) ** 2, axis=-1, keepdims=True)
    h1 = (h1 - mu1) * lax.rsqrt(var1 + 1e-5) * ln1g_ref[...] + ln1b_ref[...]

    f = jnp.dot(h1, w1_ref[...], preferred_element_type=jnp.float32) + b1_ref[...]
    f = jnp.maximum(f, 0.0)
    f = jnp.dot(f, w2_ref[...], preferred_element_type=jnp.float32) + b2_ref[...]
    h2 = h1 + f
    mu2 = jnp.mean(h2, axis=-1, keepdims=True)
    var2 = jnp.mean((h2 - mu2) ** 2, axis=-1, keepdims=True)
    h2 = (h2 - mu2) * lax.rsqrt(var2 + 1e-5) * ln2g_ref[...] + ln2b_ref[...]

    out_ref[...] = h2.reshape(B, S, E)


def _latent_decode_kernel(enc_ref, maskf_ref, eps_ref,
                          wmu_ref, bmu_ref, wlv_ref, blv_ref,
                          wd0_ref, bd0_ref, wc1_ref, bc1_ref,
                          mu_ref, lv_ref, z_ref, y1_ref):
    """Fused: masked mean-pool -> mu/logvar -> reparameterize -> initial decoder
    linear (ReLU) -> convt1 expressed as one dense matmul (ReLU)."""
    enc = enc_ref[...]                                       # (B, S, E)
    B = enc.shape[0]
    summed = jnp.sum(enc, axis=1)                            # (B, E) (sum includes pads, like PyTorch)
    counts = jnp.sum(1.0 - maskf_ref[...], axis=1, keepdims=True)   # (B, 1) #valid words
    pooled = summed / counts
    mu = jnp.dot(pooled, wmu_ref[...], preferred_element_type=jnp.float32) + bmu_ref[...]
    lv = jnp.dot(pooled, wlv_ref[...], preferred_element_type=jnp.float32) + blv_ref[...]
    z = mu + eps_ref[...] * jnp.exp(0.5 * lv)

    h = jnp.dot(z, wd0_ref[...], preferred_element_type=jnp.float32) + bd0_ref[...]
    h = jnp.maximum(h, 0.0)                                  # (B, 3200), pixel-major columns
    h2 = h.reshape(B * 25, 128)                              # (B*25 pixels, 128 channels)
    y1 = jnp.dot(h2, wc1_ref[...], preferred_element_type=jnp.float32) + bc1_ref[...]
    y1 = jnp.maximum(y1, 0.0)                                # (B*25, 64*25)

    mu_ref[...] = mu
    lv_ref[...] = lv
    z_ref[...] = z
    y1_ref[...] = y1.astype(y1_ref.dtype)


def _convt_rows_kernel(x_ref, w_ref, b_ref, o_ref, *, k, act):
    """Direct conv (flipped kernel) on a (1, Hp, Cin_p, Wp) padded image.
    One output row per fori_loop step; the (kw, cin) reduction is a single MXU
    matmul per kh (K = k*Cin_p).  No im2col buffer."""
    _, Hp, Cin_p, Wp = x_ref.shape
    _, OH, Cout, OW = o_ref.shape
    bias = b_ref[...]                                        # (Cout, 1) f32

    def row(oh, carry):
        acc = jnp.zeros((Cout, OW), jnp.float32)
        for kh in range(k):
            xrow = x_ref[0, oh + kh, :, :]                   # (Cin_p, Wp) bf16
            xs = jnp.concatenate([xrow[:, kw:kw + OW] for kw in range(k)], axis=0)
            acc = acc + jnp.dot(w_ref[kh], xs,               # (Cout, k*Cin_p) @ (k*Cin_p, OW)
                                preferred_element_type=jnp.float32)
        acc = acc + bias
        if act == "relu":
            acc = jnp.maximum(acc, 0.0)
        else:
            acc = jax.nn.sigmoid(acc)                        # numerically stable sigmoid
        o_ref[0, oh, :, :] = acc.astype(o_ref.dtype)
        return carry

    lax.fori_loop(0, OH, row, 0)


# ------------------------------ Wrappers / glue ------------------------------

def encoder_layer(x, maskneg, lp, num_heads):
    B, S, E = x.shape
    return pl.pallas_call(
        functools.partial(_encoder_layer_kernel, num_heads=num_heads),
        out_shape=jax.ShapeDtypeStruct((B, S, E), jnp.float32),
        compiler_params=pltpu.CompilerParams(vmem_limit_bytes=_VMEM_LIMIT),
    )(x, maskneg,
      lp["wqkv"], lp["bqkv"].reshape(1, -1),
      lp["wo"], lp["bo"].reshape(1, -1),
      lp["ln1g"].reshape(1, -1), lp["ln1b"].reshape(1, -1),
      lp["w1"], lp["b1"].reshape(1, -1),
      lp["w2"], lp["b2"].reshape(1, -1),
      lp["ln2g"].reshape(1, -1), lp["ln2b"].reshape(1, -1))


def conv_transpose_hcw(x, w_pt, b, stride, padding, act, out_dtype):
    """ConvTranspose2d on a (B, H, C, W) bf16 activation.
    Dilation / edge padding / channel padding happen in one cheap JAX scatter;
    the (kh, kw, cin) reduction runs inside the Pallas kernel (no im2col)."""
    B, H, Cin, W = x.shape
    Cout, k = w_pt.shape[1], w_pt.shape[2]
    Cin_p = ((Cin + 15) // 16) * 16                       # sublane-aligned channels (bf16)

    if stride > 1:
        Hd, Wd = (H - 1) * stride + 1, (W - 1) * stride + 1
    else:
        Hd, Wd = H, W
    pad = k - 1 - padding
    Hp, Wp = Hd + 2 * pad, Wd + 2 * pad
    OH, OW = Hp - k + 1, Wp - k + 1

    xp = jnp.zeros((B, Hp, Cin_p, Wp), jnp.bfloat16)
    xp = xp.at[:, pad:pad + Hd:stride, :Cin, pad:pad + Wd:stride].set(
        x.astype(jnp.bfloat16))

    # flipped kernel, laid out as (kh, cout, kw*Cin_p)
    wf = jnp.flip(w_pt, axis=(2, 3))                       # (Cin, Cout, k, k)
    wk = jnp.transpose(wf, (2, 1, 3, 0))                   # (k, Cout, k, Cin)
    wk = jnp.pad(wk, ((0, 0), (0, 0), (0, 0), (0, Cin_p - Cin)))
    wk = wk.reshape(k, Cout, k * Cin_p).astype(jnp.bfloat16)
    bias = b.reshape(Cout, 1).astype(jnp.float32)

    return pl.pallas_call(
        functools.partial(_convt_rows_kernel, k=k, act=act),
        out_shape=jax.ShapeDtypeStruct((B, OH, Cout, OW), out_dtype),
        grid=(B,),
        in_specs=[
            pl.BlockSpec((1, Hp, Cin_p, Wp), lambda bb: (bb, 0, 0, 0)),
            pl.BlockSpec((k, Cout, k * Cin_p), lambda bb: (0, 0, 0)),
            pl.BlockSpec((Cout, 1), lambda bb: (0, 0)),
        ],
        out_specs=pl.BlockSpec((1, OH, Cout, OW), lambda bb: (bb, 0, 0, 0)),
        compiler_params=pltpu.CompilerParams(
            dimension_semantics=("parallel",),
            vmem_limit_bytes=_VMEM_LIMIT),
    )(xp, wk, bias)


def forward(params, tokens, mask, eps, num_heads):
    B, S = tokens.shape
    z_dim = params["w_mu"].shape[1]

    # ---- encode ----
    emb = jnp.take(params["embedding"], tokens, axis=0)          # (B, S, E)
    maskf = mask.astype(jnp.float32)                             # 1.0 where padded
    maskneg = maskf * jnp.float32(-1e30)
    h = emb
    for lp in params["layers"]:
        h = encoder_layer(h, maskneg, lp, num_heads)

    # ---- pool + heads + reparameterize + dec0 + convt1 (one fused launch) ----
    cols = jnp.arange(5 * 5 * 128)
    perm = (cols % 128) * 25 + cols // 128                       # (ci, pix) -> (pix, ci) columns
    w_d0p = params["w_dec0"][:, perm]
    b_d0p = params["b_dec0"][perm]
    ct1 = params["convt1"]
    w_c1 = ct1["w"].reshape(128, 64 * 25)                        # [ci, co*25 + ky*5 + kx]
    b_c1 = jnp.repeat(ct1["b"], 25)

    mu, logvar, z, y1 = pl.pallas_call(
        _latent_decode_kernel,
        out_shape=(jax.ShapeDtypeStruct((B, z_dim), jnp.float32),
                   jax.ShapeDtypeStruct((B, z_dim), jnp.float32),
                   jax.ShapeDtypeStruct((B, z_dim), jnp.float32),
                   jax.ShapeDtypeStruct((B * 25, 64 * 25), jnp.bfloat16)),
        compiler_params=pltpu.CompilerParams(vmem_limit_bytes=_VMEM_LIMIT),
    )(h, maskf, eps,
      params["w_mu"], params["b_mu"].reshape(1, -1),
      params["w_lv"], params["b_lv"].reshape(1, -1),
      w_d0p, b_d0p.reshape(1, -1),
      w_c1, b_c1.reshape(1, -1))

    # pixel-shuffle convt1's matmul output (k == stride == 5) -> (B, H, C, W)
    y = y1.reshape(B, 5, 5, 64, 5, 5)                 # [b, iy, ix, co, ky, kx]
    y = jnp.transpose(y, (0, 1, 4, 3, 2, 5))          # [b, iy, ky, co, ix, kx]
    y = y.reshape(B, 25, 64, 25)                      # (B, 25, 64, 25)  bf16

    # ---- remaining transposed convolutions ----
    n_conv = len(params["convts"])
    for i, ct in enumerate(params["convts"]):
        out_dtype = jnp.float32 if i == n_conv - 1 else jnp.bfloat16
        y = conv_transpose_hcw(y, ct["w"], ct["b"], ct["stride"], ct["padding"],
                               ct["act"], out_dtype)

    # (B, H, C, W) -> PyTorch NCHW.transpose(1, 3) == (B, W, H, C)
    y = jnp.transpose(y, (0, 3, 1, 2))
    return y, mu, logvar, z


# ------------------------------ Parameters -----------------------------------

class KeyGen:
    def __init__(self, key):
        self.key = key

    def __call__(self):
        self.key, sub = jax.random.split(self.key)
        return sub


def _uniform(key, shape, scale):
    return jax.random.uniform(key, shape, jnp.float32, -scale, scale)


def init_params(key, vocab_size, embedding_size, z_dim, num_layers, ffn=2048):
    E = embedding_size
    kg = KeyGen(key)
    emb = jax.random.normal(kg(), (vocab_size, E), jnp.float32)
    emb = emb.at[0].set(0.0)                                   # padding_idx = 0
    s_e = 1.0 / math.sqrt(E)
    s_f = 1.0 / math.sqrt(ffn)
    layers = []
    for _ in range(num_layers):
        layers.append(dict(
            wqkv=_uniform(kg(), (E, 3 * E), s_e), bqkv=_uniform(kg(), (3 * E,), s_e),
            wo=_uniform(kg(), (E, E), s_e), bo=_uniform(kg(), (E,), s_e),
            ln1g=jnp.ones((E,), jnp.float32), ln1b=jnp.zeros((E,), jnp.float32),
            w1=_uniform(kg(), (E, ffn), s_e), b1=_uniform(kg(), (ffn,), s_e),
            w2=_uniform(kg(), (ffn, E), s_f), b2=_uniform(kg(), (E,), s_f),
            ln2g=jnp.ones((E,), jnp.float32), ln2b=jnp.zeros((E,), jnp.float32),
        ))
    w_mu = _uniform(kg(), (E, z_dim), s_e); b_mu = _uniform(kg(), (z_dim,), s_e)
    w_lv = _uniform(kg(), (E, z_dim), s_e); b_lv = _uniform(kg(), (z_dim,), s_e)
    s_z = 1.0 / math.sqrt(z_dim)
    w_dec0 = _uniform(kg(), (z_dim, 5 * 5 * 128), s_z)
    b_dec0 = _uniform(kg(), (5 * 5 * 128,), s_z)
    convt_cfg = [  # (cin, cout, k, stride, padding, activation)
        (128, 64, 5, 5, 0, "relu"),
        (64, 32, 5, 1, 2, "relu"),
        (32, 16, 7, 3, 2, "relu"),
        (16, 8, 5, 1, 2, "relu"),
        (8, 4, 4, 2, 1, "relu"),
        (4, 3, 4, 2, 1, "sigmoid"),
    ]
    convts = []
    for cin, cout, k, st, pad, act in convt_cfg:
        sc = 1.0 / math.sqrt(cin * k * k)
        convts.append(dict(w=_uniform(kg(), (cin, cout, k, k), sc),
                           b=_uniform(kg(), (cout,), sc),
                           stride=st, padding=pad, act=act))
    return dict(embedding=emb, layers=layers, w_mu=w_mu, b_mu=b_mu,
                w_lv=w_lv, b_lv=b_lv, w_dec0=w_dec0, b_dec0=b_dec0,
                convt1=convts[0], convts=convts[1:])


# --------------------------------- Main ---------------------------------------

if __name__ == "__main__":
    vocab_size, embedding_size, z_dim = 50, 32, 16
    num_heads, num_layers = 8, 3
    B, S = 2, 8

    key = jax.random.PRNGKey(0)
    k_params, k_tok, k_eps = jax.random.split(key, 3)

    params = init_params(k_params, vocab_size, embedding_size, z_dim, num_layers)

    tokens = jax.random.randint(k_tok, (B, S), 1, vocab_size).astype(jnp.int32)
    mask = jnp.zeros((B, S), dtype=bool).at[:, -2:].set(True)   # True = padding
    tokens = jnp.where(mask, 0, tokens)
    eps = jax.random.normal(k_eps, (B, z_dim), jnp.float32)

    y, mu, logvar, z = forward(params, tokens, mask, eps, num_heads)
    (y, mu, logvar, z) = jax.block_until_ready((y, mu, logvar, z))

    assert y.shape == (B, 300, 300, 3)
    assert mu.shape == (B, z_dim)
    assert logvar.shape == (B, z_dim)
    assert z.shape == (B, z_dim)
    assert jnp.all(jnp.isfinite(y)) and jnp.all(jnp.isfinite(z))
    print("KERNEL_OK")
</pallas_src>

<mosaic_0001>
module attributes {stable_mosaic.version = 11 : i64} {
  func.func @_encoder_layer_kernel(%arg0: memref<2x8x32xf32, #tpu.memory_space<vmem>>, %arg1: memref<2x8xf32, #tpu.memory_space<vmem>>, %arg2: memref<32x96xf32, #tpu.memory_space<vmem>>, %arg3: memref<1x96xf32, #tpu.memory_space<vmem>>, %arg4: memref<32x32xf32, #tpu.memory_space<vmem>>, %arg5: memref<1x32xf32, #tpu.memory_space<vmem>>, %arg6: memref<1x32xf32, #tpu.memory_space<vmem>>, %arg7: memref<1x32xf32, #tpu.memory_space<vmem>>, %arg8: memref<32x2048xf32, #tpu.memory_space<vmem>>, %arg9: memref<1x2048xf32, #tpu.memory_space<vmem>>, %arg10: memref<2048x32xf32, #tpu.memory_space<vmem>>, %arg11: memref<1x32xf32, #tpu.memory_space<vmem>>, %arg12: memref<1x32xf32, #tpu.memory_space<vmem>>, %arg13: memref<1x32xf32, #tpu.memory_space<vmem>>, %arg14: memref<2x8x32xf32, #tpu.memory_space<vmem>>) attributes {dimension_semantics = [], scalar_prefetch = 0 : i64, scratch_operands = 0 : i64, tpu.core_type = #tpu.core_type<tc>} {
    %c0 = arith.constant 0 : index
    %c0_0 = arith.constant 0 : index
    %c0_1 = arith.constant 0 : index
    %0 = vector.load %arg0[%c0, %c0_0, %c0_1] : memref<2x8x32xf32, #tpu.memory_space<vmem>>, vector<2x8x32xf32>
    %1 = vector.shape_cast %0 : vector<2x8x32xf32> to vector<16x32xf32>
    %c0_2 = arith.constant 0 : index
    %c0_3 = arith.constant 0 : index
    %2 = vector.load %arg2[%c0_2, %c0_3] : memref<32x96xf32, #tpu.memory_space<vmem>>, vector<32x96xf32>
    %cst = arith.constant dense<0.000000e+00> : vector<16x96xf32>
    %3 = tpu.matmul %1, %2, %cst {dimension_numbers = #tpu.dot_dimension_numbers<[1], [0], [0], [1], [0, 0, 1, 1], [], []>} : vector<16x32xf32>, vector<32x96xf32>, vector<16x96xf32> -> vector<16x96xf32>
    %c0_4 = arith.constant 0 : index
    %c0_5 = arith.constant 0 : index
    %4 = vector.load %arg3[%c0_4, %c0_5] : memref<1x96xf32, #tpu.memory_space<vmem>>, vector<1x96xf32>
    %5 = vector.broadcast %4 : vector<1x96xf32> to vector<16x96xf32>
    %6 = arith.addf %3, %5 : vector<16x96xf32>
    %7 = vector.extract_strided_slice %6 {offsets = [0, 0], sizes = [16, 32], strides = [1, 1]} : vector<16x96xf32> to vector<16x32xf32>
    %8 = vector.shape_cast %7 : vector<16x32xf32> to vector<2x8x32xf32>
    %9 = vector.extract_strided_slice %6 {offsets = [0, 32], sizes = [16, 32], strides = [1, 1]} : vector<16x96xf32> to vector<16x32xf32>
    %10 = vector.shape_cast %9 : vector<16x32xf32> to vector<2x8x32xf32>
    %11 = vector.extract_strided_slice %6 {offsets = [0, 64], sizes = [16, 32], strides = [1, 1]} : vector<16x96xf32> to vector<16x32xf32>
    %12 = vector.shape_cast %11 : vector<16x32xf32> to vector<2x8x32xf32>
    %c0_6 = arith.constant 0 : index
    %c0_7 = arith.constant 0 : index
    %13 = vector.load %arg1[%c0_6, %c0_7] : memref<2x8xf32, #tpu.memory_space<vmem>>, vector<2x8xf32>
    %14 = vector.shape_cast %13 : vector<2x8xf32> to vector<2x1x8xf32>
    %15 = vector.extract_strided_slice %8 {offsets = [0, 0, 0], sizes = [2, 8, 4], strides = [1, 1, 1]} : vector<2x8x32xf32> to vector<2x8x4xf32>
    %cst_8 = arith.constant 5.000000e-01 : f32
    %16 = vector.broadcast %cst_8 : f32 to vector<2x8x4xf32>
    %17 = arith.mulf %15, %16 : vector<2x8x4xf32>
    %18 = vector.extract_strided_slice %10 {offsets = [0, 0, 0], sizes = [2, 8, 4], strides = [1, 1, 1]} : vector<2x8x32xf32> to vector<2x8x4xf32>
    %19 = vector.extract_strided_slice %12 {offsets = [0, 0, 0], sizes = [2, 8, 4], strides = [1, 1, 1]} : vector<2x8x32xf32> to vector<2x8x4xf32>
    "tpu.trace_start"() <{level = 10 : i32, message = "bqd,bkd->bqk"}> : () -> ()
    %cst_9 = arith.constant dense<0.000000e+00> : vector<2x8x8xf32>
    %20 = tpu.matmul %17, %18, %cst_9 {dimension_numbers = #tpu.dot_dimension_numbers<[2], [2], [1], [1], [0, 0, 0, 1, 1, 1], [0], [0]>} : vector<2x8x4xf32>, vector<2x8x4xf32>, vector<2x8x8xf32> -> vector<2x8x8xf32>
    "tpu.trace_stop"() : () -> ()
    %21 = vector.broadcast %14 : vector<2x1x8xf32> to vector<2x8x8xf32>
    %22 = arith.addf %20, %21 : vector<2x8x8xf32>
    %cst_10 = arith.constant dense<0xFF800000> : vector<2x8xf32>
    %23 = vector.multi_reduction <maximumf>, %22, %cst_10 [2] : vector<2x8x8xf32> to vector<2x8xf32>
    %24 = vector.shape_cast %23 : vector<2x8xf32> to vector<2x8x1xf32>
    %25 = vector.broadcast %24 : vector<2x8x1xf32> to vector<2x8x8xf32>
    %26 = arith.subf %22, %25 : vector<2x8x8xf32>
    %27 = math.exp %26 : vector<2x8x8xf32>
    %cst_11 = arith.constant dense<0.000000e+00> : vector<2x8xf32>
    %28 = vector.multi_reduction <add>, %27, %cst_11 [2] : vector<2x8x8xf32> to vector<2x8xf32>
    %29 = vector.shape_cast %28 : vector<2x8xf32> to vector<2x8x1xf32>
    %30 = vector.broadcast %29 : vector<2x8x1xf32> to vector<2x8x8xf32>
    %31 = arith.divf %27, %30 : vector<2x8x8xf32>
    "tpu.trace_start"() <{level = 10 : i32, message = "bqk,bkd->bqd"}> : () -> ()
    %cst_12 = arith.constant dense<0.000000e+00> : vector<2x8x4xf32>
    %32 = tpu.matmul %31, %19, %cst_12 {dimension_numbers = #tpu.dot_dimension_numbers<[2], [1], [1], [2], [0, 0, 0, 1, 1, 2], [0], [0]>} : vector<2x8x8xf32>, vector<2x8x4xf32>, vector<2x8x4xf32> -> vector<2x8x4xf32>
    "tpu.trace_stop"() : () -> ()
    %33 = vector.extract_strided_slice %8 {offsets = [0, 0, 4], sizes = [2, 8, 4], strides = [1, 1, 1]} : vector<2x8x32xf32> to vector<2x8x4xf32>
    %cst_13 = arith.constant 5.000000e-01 : f32
    %34 = vector.broadcast %cst_13 : f32 to vector<2x8x4xf32>
    %35 = arith.mulf %33, %34 : vector<2x8x4xf32>
    %36 = vector.extract_strided_slice %10 {offsets = [0, 0, 4], sizes = [2, 8, 4], strides = [1, 1, 1]} : vector<2x8x32xf32> to vector<2x8x4xf32>
    %37 = vector.extract_strided_slice %12 {offsets = [0, 0, 4], sizes = [2, 8, 4], strides = [1, 1, 1]} : vector<2x8x32xf32> to vector<2x8x4xf32>
    "tpu.trace_start"() <{level = 10 : i32, message = "bqd,bkd->bqk"}> : () -> ()
    %cst_14 = arith.constant dense<0.000000e+00> : vector<2x8x8xf32>
    %38 = tpu.matmul %35, %36, %cst_14 {dimension_numbers = #tpu.dot_dimension_numbers<[2], [2], [1], [1], [0, 0, 0, 1, 1, 1], [0], [0]>} : vector<2x8x4xf32>, vector<2x8x4xf32>, vector<2x8x8xf32> -> vector<2x8x8xf32>
    "tpu.trace_stop"() : () -> ()
    %39 = vector.broadcast %14 : vector<2x1x8xf32> to vector<2x8x8xf32>
    %40 = arith.addf %38, %39 : vector<2x8x8xf32>
    %cst_15 = arith.constant dense<0xFF800000> : vector<2x8xf32>
    %41 = vector.multi_reduction <maximumf>, %40, %cst_15 [2] : vector<2x8x8xf32> to vector<2x8xf32>
    %42 = vector.shape_cast %41 : vector<2x8xf32> to vector<2x8x1xf32>
    %43 = vector.broadcast %42 : vector<2x8x1xf32> to vector<2x8x8xf32>
    %44 = arith.subf %40, %43 : vector<2x8x8xf32>
    %45 = math.exp %44 : vector<2x8x8xf32>
    %cst_16 = arith.constant dense<0.000000e+00> : vector<2x8xf32>
    %46 = vector.multi_reduction <add>, %45, %cst_16 [2] : vector<2x8x8xf32> to vector<2x8xf32>
    %47 = vector.shape_cast %46 : vector<2x8xf32> to vector<2x8x1xf32>
    %48 = vector.broadcast %47 : vector<2x8x1xf32> to vector<2x8x8xf32>
    %49 = arith.divf %45, %48 : vector<2x8x8xf32>
    "tpu.trace_start"() <{level = 10 : i32, message = "bqk,bkd->bqd"}> : () -> ()
    %cst_17 = arith.constant dense<0.000000e+00> : vector<2x8x4xf32>
    %50 = tpu.matmul %49, %37, %cst_17 {dimension_numbers = #tpu.dot_dimension_numbers<[2], [1], [1], [2], [0, 0, 0, 1, 1, 2], [0], [0]>} : vector<2x8x8xf32>, vector<2x8x4xf32>, vector<2x8x4xf32> -> vector<2x8x4xf32>
    "tpu.trace_stop"() : () -> ()
    %51 = vector.extract_strided_slice %8 {offsets = [0, 0, 8], sizes = [2, 8, 4], strides = [1, 1, 1]} : vector<2x8x32xf32> to vector<2x8x4xf32>
    %cst_18 = arith.constant 5.000000e-01 : f32
    %52 = vector.broadcast %cst_18 : f32 to vector<2x8x4xf32>
    %53 = arith.mulf %51, %52 : vector<2x8x4xf32>
    %54 = vector.extract_strided_slice %10 {offsets = [0, 0, 8], sizes = [2, 8, 4], strides = [1, 1, 1]} : vector<2x8x32xf32> to vector<2x8x4xf32>
    %55 = vector.extract_strided_slice %12 {offsets = [0, 0, 8], sizes = [2, 8, 4], strides = [1, 1, 1]} : vector<2x8x32xf32> to vector<2x8x4xf32>
    "tpu.trace_start"() <{level = 10 : i32, message = "bqd,bkd->bqk"}> : () -> ()
    %cst_19 = arith.constant dense<0.000000e+00> : vector<2x8x8xf32>
    %56 = tpu.matmul %53, %54, %cst_19 {dimension_numbers = #tpu.dot_dimension_numbers<[2], [2], [1], [1], [0, 0, 0, 1, 1, 1], [0], [0]>} : vector<2x8x4xf32>, vector<2x8x4xf32>, vector<2x8x8xf32> -> vector<2x8x8xf32>
    "tpu.trace_stop"() : () -> ()
    %57 = vector.broadcast %14 : vector<2x1x8xf32> to vector<2x8x8xf32>
    %58 = arith.addf %56, %57 : vector<2x8x8xf32>
    %cst_20 = arith.constant dense<0xFF800000> : vector<2x8xf32>
    %59 = vector.multi_reduction <maximumf>, %58, %cst_20 [2] : vector<2x8x8xf32> to vector<2x8xf32>
    %60 = vector.shape_cast %59 : vector<2x8xf32> to vector<2x8x1xf32>
    %61 = vector.broadcast %60 : vector<2x8x1xf32> to vector<2x8x8xf32>
    %62 = arith.subf %58, %61 : vector<2x8x8xf32>
    %63 = math.exp %62 : vector<2x8x8xf32>
    %cst_21 = arith.constant dense<0.000000e+00> : vector<2x8xf32>
    %64 = vector.multi_reduction <add>, %63, %cst_21 [2] : vector<2x8x8xf32> to vector<2x8xf32>
    %65 = vector.shape_cast %64 : vector<2x8xf32> to vector<2x8x1xf32>
    %66 = vector.broadcast %65 : vector<2x8x1xf32> to vector<2x8x8xf32>
    %67 = arith.divf %63, %66 : vector<2x8x8xf32>
    "tpu.trace_start"() <{level = 10 : i32, message = "bqk,bkd->bqd"}> : () -> ()
    %cst_22 = arith.constant dense<0.000000e+00> : vector<2x8x4xf32>
    %68 = tpu.matmul %67, %55, %cst_22 {dimension_numbers = #tpu.dot_dimension_numbers<[2], [1], [1], [2], [0, 0, 0, 1, 1, 2], [0], [0]>} : vector<2x8x8xf32>, vector<2x8x4xf32>, vector<2x8x4xf32> -> vector<2x8x4xf32>
    "tpu.trace_stop"() : () -> ()
    %69 = vector.extract_strided_slice %8 {offsets = [0, 0, 12], sizes = [2, 8, 4], strides = [1, 1, 1]} : vector<2x8x32xf32> to vector<2x8x4xf32>
    %cst_23 = arith.constant 5.000000e-01 : f32
    %70 = vector.broadcast %cst_23 : f32 to vector<2x8x4xf32>
    %71 = arith.mulf %69, %70 : vector<2x8x4xf32>
    %72 = vector.extract_strided_slice %10 {offsets = [0, 0, 12], sizes = [2, 8, 4], strides = [1, 1, 1]} : vector<2x8x32xf32> to vector<2x8x4xf32>
    %73 = vector.extract_strided_slice %12 {offsets = [0, 0, 12], sizes = [2, 8, 4], strides = [1, 1, 1]} : vector<2x8x32xf32> to vector<2x8x4xf32>
    "tpu.trace_start"() <{level = 10 : i32, message = "bqd,bkd->bqk"}> : () -> ()
    %cst_24 = arith.constant dense<0.000000e+00> : vector<2x8x8xf32>
    %74 = tpu.matmul %71, %72, %cst_24 {dimension_numbers = #tpu.dot_dimension_numbers<[2], [2], [1], [1], [0, 0, 0, 1, 1, 1], [0], [0]>} : vector<2x8x4xf32>, vector<2x8x4xf32>, vector<2x8x8xf32> -> vector<2x8x8xf32>
    "tpu.trace_stop"() : () -> ()
    %75 = vector.broadcast %14 : vector<2x1x8xf32> to vector<2x8x8xf32>
    %76 = arith.addf %74, %75 : vector<2x8x8xf32>
    %cst_25 = arith.constant dense<0xFF800000> : vector<2x8xf32>
    %77 = vector.multi_reduction <maximumf>, %76, %cst_25 [2] : vector<2x8x8xf32> to vector<2x8xf32>
    %78 = vector.shape_cast %77 : vector<2x8xf32> to vector<2x8x1xf32>
    %79 = vector.broadcast %78 : vector<2x8x1xf32> to vector<2x8x8xf32>
    %80 = arith.subf %76, %79 : vector<2x8x8xf32>
    %81 = math.exp %80 : vector<2x8x8xf32>
    %cst_26 = arith.constant dense<0.000000e+00> : vector<2x8xf32>
    %82 = vector.multi_reduction <add>, %81, %cst_26 [2] : vector<2x8x8xf32> to vector<2x8xf32>
    %83 = vector.shape_cast %82 : vector<2x8xf32> to vector<2x8x1xf32>
    %84 = vector.broadcast %83 : vector<2x8x1xf32> to vector<2x8x8xf32>
    %85 = arith.divf %81, %84 : vector<2x8x8xf32>
    "tpu.trace_start"() <{level = 10 : i32, message = "bqk,bkd->bqd"}> : () -> ()
    %cst_27 = arith.constant dense<0.000000e+00> : vector<2x8x4xf32>
    %86 = tpu.matmul %85, %73, %cst_27 {dimension_numbers = #tpu.dot_dimension_numbers<[2], [1], [1], [2], [0, 0, 0, 1, 1, 2], [0], [0]>} : vector<2x8x8xf32>, vector<2x8x4xf32>, vector<2x8x4xf32> -> vector<2x8x4xf32>
    "tpu.trace_stop"() : () -> ()
    %87 = vector.extract_strided_slice %8 {offsets = [0, 0, 16], sizes = [2, 8, 4], strides = [1, 1, 1]} : vector<2x8x32xf32> to vector<2x8x4xf32>
    %cst_28 = arith.constant 5.000000e-01 : f32
    %88 = vector.broadcast %cst_28 : f32 to vector<2x8x4xf32>
    %89 = arith.mulf %87, %88 : vector<2x8x4xf32>
    %90 = vector.extract_strided_slice %10 {offsets = [0, 0, 16], sizes = [2, 8, 4], strides = [1, 1, 1]} : vector<2x8x32xf32> to vector<2x8x4xf32>
    %91 = vector.extract_strided_slice %12 {offsets = [0, 0, 16], sizes = [2, 8, 4], strides = [1, 1, 1]} : vector<2x8x32xf32> to vector<2x8x4xf32>
    "tpu.trace_start"() <{level = 10 : i32, message = "bqd,bkd->bqk"}> : () -> ()
    %cst_29 = arith.constant dense<0.000000e+00> : vector<2x8x8xf32>
    %92 = tpu.matmul %89, %90, %cst_29 {dimension_numbers = #tpu.dot_dimension_numbers<[2], [2], [1], [1], [0, 0, 0, 1, 1, 1], [0], [0]>} : vector<2x8x4xf32>, vector<2x8x4xf32>, vector<2x8x8xf32> -> vector<2x8x8xf32>
    "tpu.trace_stop"() : () -> ()
    %93 = vector.broadcast %14 : vector<2x1x8xf32> to vector<2x8x8xf32>
    %94 = arith.addf %92, %93 : vector<2x8x8xf32>
    %cst_30 = arith.constant dense<0xFF800000> : vector<2x8xf32>
    %95 = vector.multi_reduction <maximumf>, %94, %cst_30 [2] : vector<2x8x8xf32> to vector<2x8xf32>
    %96 = vector.shape_cast %95 : vector<2x8xf32> to vector<2x8x1xf32>
    %97 = vector.broadcast %96 : vector<2x8x1xf32> to vector<2x8x8xf32>
    %98 = arith.subf %94, %97 : vector<2x8x8xf32>
    %99 = math.exp %98 : vector<2x8x8xf32>
    %cst_31 = arith.constant dense<0.000000e+00> : vector<2x8xf32>
    %100 = vector.multi_reduction <add>, %99, %cst_31 [2] : vector<2x8x8xf32> to vector<2x8xf32>
    %101 = vector.shape_cast %100 : vector<2x8xf32> to vector<2x8x1xf32>
    %102 = vector.broadcast %101 : vector<2x8x1xf32> to vector<2x8x8xf32>
    %103 = arith.divf %99, %102 : vector<2x8x8xf32>
    "tpu.trace_start"() <{level = 10 : i32, message = "bqk,bkd->bqd"}> : () -> ()
    %cst_32 = arith.constant dense<0.000000e+00> : vector<2x8x4xf32>
    %104 = tpu.matmul %103, %91, %cst_32 {dimension_numbers = #tpu.dot_dimension_numbers<[2], [1], [1], [2], [0, 0, 0, 1, 1, 2], [0], [0]>} : vector<2x8x8xf32>, vector<2x8x4xf32>, vector<2x8x4xf32> -> vector<2x8x4xf32>
    "tpu.trace_stop"() : () -> ()
    %105 = vector.extract_strided_slice %8 {offsets = [0, 0, 20], sizes = [2, 8, 4], strides = [1, 1, 1]} : vector<2x8x32xf32> to vector<2x8x4xf32>
    %cst_33 = arith.constant 5.000000e-01 : f32
    %106 = vector.broadcast %cst_33 : f32 to vector<2x8x4xf32>
    %107 = arith.mulf %105, %106 : vector<2x8x4xf32>
    %108 = vector.extract_strided_slice %10 {offsets = [0, 0, 20], sizes = [2, 8, 4], strides = [1, 1, 1]} : vector<2x8x32xf32> to vector<2x8x4xf32>
    %109 = vector.extract_strided_slice %12 {offsets = [0, 0, 20], sizes = [2, 8, 4], strides = [1, 1, 1]} : vector<2x8x32xf32> to vector<2x8x4xf32>
    "tpu.trace_start"() <{level = 10 : i32, message = "bqd,bkd->bqk"}> : () -> ()
    %cst_34 = arith.constant dense<0.000000e+00> : vector<2x8x8xf32>
    %110 = tpu.matmul %107, %108, %cst_34 {dimension_numbers = #tpu.dot_dimension_numbers<[2], [2], [1], [1], [0, 0, 0, 1, 1, 1], [0], [0]>} : vector<2x8x4xf32>, vector<2x8x4xf32>, vector<2x8x8xf32> -> vector<2x8x8xf32>
    "tpu.trace_stop"() : () -> ()
    %111 = vector.broadcast %14 : vector<2x1x8xf32> to vector<2x8x8xf32>
    %112 = arith.addf %110, %111 : vector<2x8x8xf32>
    %cst_35 = arith.constant dense<0xFF800000> : vector<2x8xf32>
    %113 = vector.multi_reduction <maximumf>, %112, %cst_35 [2] : vector<2x8x8xf32> to vector<2x8xf32>
    %114 = vector.shape_cast %113 : vector<2x8xf32> to vector<2x8x1xf32>
    %115 = vector.broadcast %114 : vector<2x8x1xf32> to vector<2x8x8xf32>
    %116 = arith.subf %112, %115 : vector<2x8x8xf32>
    %117 = math.exp %116 : vector<2x8x8xf32>
    %cst_36 = arith.constant dense<0.000000e+00> : vector<2x8xf32>
    %118 = vector.multi_reduction <add>, %117, %cst_36 [2] : vector<2x8x8xf32> to vector<2x8xf32>
    %119 = vector.shape_cast %118 : vector<2x8xf32> to vector<2x8x1xf32>
    %120 = vector.broadcast %119 : vector<2x8x1xf32> to vector<2x8x8xf32>
    %121 = arith.divf %117, %120 : vector<2x8x8xf32>
    "tpu.trace_start"() <{level = 10 : i32, message = "bqk,bkd->bqd"}> : () -> ()
    %cst_37 = arith.constant dense<0.000000e+00> : vector<2x8x4xf32>
    %122 = tpu.matmul %121, %109, %cst_37 {dimension_numbers = #tpu.dot_dimension_numbers<[2], [1], [1], [2], [0, 0, 0, 1, 1, 2], [0], [0]>} : vector<2x8x8xf32>, vector<2x8x4xf32>, vector<2x8x4xf32> -> vector<2x8x4xf32>
    "tpu.trace_stop"() : () -> ()
    %123 = vector.extract_strided_slice %8 {offsets = [0, 0, 24], sizes = [2, 8, 4], strides = [1, 1, 1]} : vector<2x8x32xf32> to vector<2x8x4xf32>
    %cst_38 = arith.constant 5.000000e-01 : f32
    %124 = vector.broadcast %cst_38 : f32 to vector<2x8x4xf32>
    %125 = arith.mulf %123, %124 : vector<2x8x4xf32>
    %126 = vector.extract_strided_slice %10 {offsets = [0, 0, 24], sizes = [2, 8, 4], strides = [1, 1, 1]} : vector<2x8x32xf32> to vector<2x8x4xf32>
    %127 = vector.extract_strided_slice %12 {offsets = [0, 0, 24], sizes = [2, 8, 4], strides = [1, 1, 1]} : vector<2x8x32xf32> to vector<2x8x4xf32>
    "tpu.trace_start"() <{level = 10 : i32, message = "bqd,bkd->bqk"}> : () -> ()
    %cst_39 = arith.constant dense<0.000000e+00> : vector<2x8x8xf32>
    %128 = tpu.matmul %125, %126, %cst_39 {dimension_numbers = #tpu.dot_dimension_numbers<[2], [2], [1], [1], [0, 0, 0, 1, 1, 1], [0], [0]>} : vector<2x8x4xf32>, vector<2x8x4xf32>, vector<2x8x8xf32> -> vector<2x8x8xf32>
    "tpu.trace_stop"() : () -> ()
    %129 = vector.broadcast %14 : vector<2x1x8xf32> to vector<2x8x8xf32>
    %130 = arith.addf %128, %129 : vector<2x8x8xf32>
    %cst_40 = arith.constant dense<0xFF800000> : vector<2x8xf32>
    %131 = vector.multi_reduction <maximumf>, %130, %cst_40 [2] : vector<2x8x8xf32> to vector<2x8xf32>
    %132 = vector.shape_cast %131 : vector<2x8xf32> to vector<2x8x1xf32>
    %133 = vector.broadcast %132 : vector<2x8x1xf32> to vector<2x8x8xf32>
    %134 = arith.subf %130, %133 : vector<2x8x8xf32>
    %135 = math.exp %134 : vector<2x8x8xf32>
    %cst_41 = arith.constant dense<0.000000e+00> : vector<2x8xf32>
    %136 = vector.multi_reduction <add>, %135, %cst_41 [2] : vector<2x8x8xf32> to vector<2x8xf32>
    %137 = vector.shape_cast %136 : vector<2x8xf32> to vector<2x8x1xf32>
    %138 = vector.broadcast %137 : vector<2x8x1xf32> to vector<2x8x8xf32>
    %139 = arith.divf %135, %138 : vector<2x8x8xf32>
    "tpu.trace_start"() <{level = 10 : i32, message = "bqk,bkd->bqd"}> : () -> ()
    %cst_42 = arith.constant dense<0.000000e+00> : vector<2x8x4xf32>
    %140 = tpu.matmul %139, %127, %cst_42 {dimension_numbers = #tpu.dot_dimension_numbers<[2], [1], [1], [2], [0, 0, 0, 1, 1, 2], [0], [0]>} : vector<2x8x8xf32>, vector<2x8x4xf32>, vector<2x8x4xf32> -> vector<2x8x4xf32>
    "tpu.trace_stop"() : () -> ()
    %141 = vector.extract_strided_slice %8 {offsets = [0, 0, 28], sizes = [2, 8, 4], strides = [1, 1, 1]} : vector<2x8x32xf32> to vector<2x8x4xf32>
    %cst_43 = arith.constant 5.000000e-01 : f32
    %142 = vector.broadcast %cst_43 : f32 to vector<2x8x4xf32>
    %143 = arith.mulf %141, %142 : vector<2x8x4xf32>
    %144 = vector.extract_strided_slice %10 {offsets = [0, 0, 28], sizes = [2, 8, 4], strides = [1, 1, 1]} : vector<2x8x32xf32> to vector<2x8x4xf32>
    %145 = vector.extract_strided_slice %12 {offsets = [0, 0, 28], sizes = [2, 8, 4], strides = [1, 1, 1]} : vector<2x8x32xf32> to vector<2x8x4xf32>
    "tpu.trace_start"() <{level = 10 : i32, message = "bqd,bkd->bqk"}> : () -> ()
    %cst_44 = arith.constant dense<0.000000e+00> : vector<2x8x8xf32>
    %146 = tpu.matmul %143, %144, %cst_44 {dimension_numbers = #tpu.dot_dimension_numbers<[2], [2], [1], [1], [0, 0, 0, 1, 1, 1], [0], [0]>} : vector<2x8x4xf32>, vector<2x8x4xf32>, vector<2x8x8xf32> -> vector<2x8x8xf32>
    "tpu.trace_stop"() : () -> ()
    %147 = vector.broadcast %14 : vector<2x1x8xf32> to vector<2x8x8xf32>
    %148 = arith.addf %146, %147 : vector<2x8x8xf32>
    %cst_45 = arith.constant dense<0xFF800000> : vector<2x8xf32>
    %149 = vector.multi_reduction <maximumf>, %148, %cst_45 [2] : vector<2x8x8xf32> to vector<2x8xf32>
    %150 = vector.shape_cast %149 : vector<2x8xf32> to vector<2x8x1xf32>
    %151 = vector.broadcast %150 : vector<2x8x1xf32> to vector<2x8x8xf32>
    %152 = arith.subf %148, %151 : vector<2x8x8xf32>
    %153 = math.exp %152 : vector<2x8x8xf32>
    %cst_46 = arith.constant dense<0.000000e+00> : vector<2x8xf32>
    %154 = vector.multi_reduction <add>, %153, %cst_46 [2] : vector<2x8x8xf32> to vector<2x8xf32>
    %155 = vector.shape_cast %154 : vector<2x8xf32> to vector<2x8x1xf32>
    %156 = vector.broadcast %155 : vector<2x8x1xf32> to vector<2x8x8xf32>
    %157 = arith.divf %153, %156 : vector<2x8x8xf32>
    "tpu.trace_start"() <{level = 10 : i32, message = "bqk,bkd->bqd"}> : () -> ()
    %cst_47 = arith.constant dense<0.000000e+00> : vector<2x8x4xf32>
    %158 = tpu.matmul %157, %145, %cst_47 {dimension_numbers = #tpu.dot_dimension_numbers<[2], [1], [1], [2], [0, 0, 0, 1, 1, 2], [0], [0]>} : vector<2x8x8xf32>, vector<2x8x4xf32>, vector<2x8x4xf32> -> vector<2x8x4xf32>
    "tpu.trace_stop"() : () -> ()
    %159 = tpu.concatenate %32, %50, %68, %86, %104, %122, %140, %158 in 2 : vector<2x8x4xf32>, vector<2x8x4xf32>, vector<2x8x4xf32>, vector<2x8x4xf32>, vector<2x8x4xf32>, vector<2x8x4xf32>, vector<2x8x4xf32>, vector<2x8x4xf32> -> vector<2x8x32xf32>
    %160 = vector.shape_cast %159 : vector<2x8x32xf32> to vector<16x32xf32>
    %c0_48 = arith.constant 0 : index
    %c0_49 = arith.constant 0 : index
    %161 = vector.load %arg4[%c0_48, %c0_49] : memref<32x32xf32, #tpu.memory_space<vmem>>, vector<32x32xf32>
    %cst_50 = arith.constant dense<0.000000e+00> : vector<16x32xf32>
    %162 = tpu.matmul %160, %161, %cst_50 {dimension_numbers = #tpu.dot_dimension_numbers<[1], [0], [0], [1], [0, 0, 1, 1], [], []>} : vector<16x32xf32>, vector<32x32xf32>, vector<16x32xf32> -> vector<16x32xf32>
    %c0_51 = arith.constant 0 : index
    %c0_52 = arith.constant 0 : index
    %163 = vector.load %arg5[%c0_51, %c0_52] : memref<1x32xf32, #tpu.memory_space<vmem>>, vector<1x32xf32>
    %164 = vector.broadcast %163 : vector<1x32xf32> to vector<16x32xf32>
    %165 = arith.addf %162, %164 : vector<16x32xf32>
    %166 = arith.addf %1, %165 : vector<16x32xf32>
    %cst_53 = arith.constant dense<0.000000e+00> : vector<16xf32>
    %167 = vector.multi_reduction <add>, %166, %cst_53 [1] : vector<16x32xf32> to vector<16xf32>
    %168 = vector.shape_cast %167 : vector<16xf32> to vector<16x1xf32>
    %cst_54 = arith.constant 3.200000e+01 : f32
    %169 = vector.broadcast %cst_54 : f32 to vector<16x1xf32>
    %170 = arith.divf %168, %169 : vector<16x1xf32>
    %171 = vector.broadcast %170 : vector<16x1xf32> to vector<16x32xf32>
    %172 = arith.subf %166, %171 : vector<16x32xf32>
    %173 = arith.mulf %172, %172 : vector<16x32xf32>
    %cst_55 = arith.constant dense<0.000000e+00> : vector<16xf32>
    %174 = vector.multi_reduction <add>, %173, %cst_55 [1] : vector<16x32xf32> to vector<16xf32>
    %175 = vector.shape_cast %174 : vector<16xf32> to vector<16x1xf32>
    %cst_56 = arith.constant 3.200000e+01 : f32
    %176 = vector.broadcast %cst_56 : f32 to vector<16x1xf32>
    %177 = arith.divf %175, %176 : vector<16x1xf32>
    %178 = vector.broadcast %170 : vector<16x1xf32> to vector<16x32xf32>
    %179 = arith.subf %166, %178 : vector<16x32xf32>
    %cst_57 = arith.constant 9.99999974E-6 : f32
    %180 = vector.broadcast %cst_57 : f32 to vector<16x1xf32>
    %181 = arith.addf %177, %180 : vector<16x1xf32>
    %182 = math.rsqrt %181 : vector<16x1xf32>
    %183 = vector.broadcast %182 : vector<16x1xf32> to vector<16x32xf32>
    %184 = arith.mulf %179, %183 : vector<16x32xf32>
    %c0_58 = arith.constant 0 : index
    %c0_59 = arith.constant 0 : index
    %185 = vector.load %arg6[%c0_58, %c0_59] : memref<1x32xf32, #tpu.memory_space<vmem>>, vector<1x32xf32>
    %186 = vector.broadcast %185 : vector<1x32xf32> to vector<16x32xf32>
    %187 = arith.mulf %184, %186 : vector<16x32xf32>
    %c0_60 = arith.constant 0 : index
    %c0_61 = arith.constant 0 : index
    %188 = vector.load %arg7[%c0_60, %c0_61] : memref<1x32xf32, #tpu.memory_space<vmem>>, vector<1x32xf32>
    %189 = vector.broadcast %188 : vector<1x32xf32> to vector<16x32xf32>
    %190 = arith.addf %187, %189 : vector<16x32xf32>
    %c0_62 = arith.constant 0 : index
    %c0_63 = arith.constant 0 : index
    %191 = vector.load %arg8[%c0_62, %c0_63] : memref<32x2048xf32, #tpu.memory_space<vmem>>, vector<32x2048xf32>
    %cst_64 = arith.constant dense<0.000000e+00> : vector<16x2048xf32>
    %192 = tpu.matmul %190, %191, %cst_64 {dimension_numbers = #tpu.dot_dimension_numbers<[1], [0], [0], [1], [0, 0, 1, 1], [], []>} : vector<16x32xf32>, vector<32x2048xf32>, vector<16x2048xf32> -> vector<16x2048xf32>
    %c0_65 = arith.constant 0 : index
    %c0_66 = arith.constant 0 : index
    %193 = vector.load %arg9[%c0_65, %c0_66] : memref<1x2048xf32, #tpu.memory_space<vmem>>, vector<1x2048xf32>
    %194 = vector.broadcast %193 : vector<1x2048xf32> to vector<16x2048xf32>
    %195 = arith.addf %192, %194 : vector<16x2048xf32>
    %cst_67 = arith.constant 0.000000e+00 : f32
    %196 = vector.broadcast %cst_67 : f32 to vector<16x2048xf32>
    %197 = arith.maximumf %195, %196 : vector<16x2048xf32>
    %c0_68 = arith.constant 0 : index
    %c0_69 = arith.constant 0 : index
    %198 = vector.load %arg10[%c0_68, %c0_69] : memref<2048x32xf32, #tpu.memory_space<vmem>>, vector<2048x32xf32>
    %cst_70 = arith.constant dense<0.000000e+00> : vector<16x32xf32>
    %199 = tpu.matmul %197, %198, %cst_70 {dimension_numbers = #tpu.dot_dimension_numbers<[1], [0], [0], [1], [0, 0, 1, 1], [], []>} : vector<16x2048xf32>, vector<2048x32xf32>, vector<16x32xf32> -> vector<16x32xf32>
    %c0_71 = arith.constant 0 : index
    %c0_72 = arith.constant 0 : index
    %200 = vector.load %arg11[%c0_71, %c0_72] : memref<1x32xf32, #tpu.memory_space<vmem>>, vector<1x32xf32>
    %201 = vector.broadcast %200 : vector<1x32xf32> to vector<16x32xf32>
    %202 = arith.addf %199, %201 : vector<16x32xf32>
    %203 = arith.addf %190, %202 : vector<16x32xf32>
    %cst_73 = arith.constant dense<0.000000e+00> : vector<16xf32>
    %204 = vector.multi_reduction <add>, %203, %cst_73 [1] : vector<16x32xf32> to vector<16xf32>
    %205 = vector.shape_cast %204 : vector<16xf32> to vector<16x1xf32>
    %cst_74 = arith.constant 3.200000e+01 : f32
    %206 = vector.broadcast %cst_74 : f32 to vector<16x1xf32>
    %207 = arith.divf %205, %206 : vector<16x1xf32>
    %208 = vector.broadcast %207 : vector<16x1xf32> to vector<16x32xf32>
    %209 = arith.subf %203, %208 : vector<16x32xf32>
    %210 = arith.mulf %209, %209 : vector<16x32xf32>
    %cst_75 = arith.constant dense<0.000000e+00> : vector<16xf32>
    %211 = vector.multi_reduction <add>, %210, %cst_75 [1] : vector<16x32xf32> to vector<16xf32>
    %212 = vector.shape_cast %211 : vector<16xf32> to vector<16x1xf32>
    %cst_76 = arith.constant 3.200000e+01 : f32
    %213 = vector.broadcast %cst_76 : f32 to vector<16x1xf32>
    %214 = arith.divf %212, %213 : vector<16x1xf32>
    %215 = vector.broadcast %207 : vector<16x1xf32> to vector<16x32xf32>
    %216 = arith.subf %203, %215 : vector<16x32xf32>
    %cst_77 = arith.constant 9.99999974E-6 : f32
    %217 = vector.broadcast %cst_77 : f32 to vector<16x1xf32>
    %218 = arith.addf %214, %217 : vector<16x1xf32>
    %219 = math.rsqrt %218 : vector<16x1xf32>
    %220 = vector.broadcast %219 : vector<16x1xf32> to vector<16x32xf32>
    %221 = arith.mulf %216, %220 : vector<16x32xf32>
    %c0_78 = arith.constant 0 : index
    %c0_79 = arith.constant 0 : index
    %222 = vector.load %arg12[%c0_78, %c0_79] : memref<1x32xf32, #tpu.memory_space<vmem>>, vector<1x32xf32>
    %223 = vector.broadcast %222 : vector<1x32xf32> to vector<16x32xf32>
    %224 = arith.mulf %221, %223 : vector<16x32xf32>
    %c0_80 = arith.constant 0 : index
    %c0_81 = arith.constant 0 : index
    %225 = vector.load %arg13[%c0_80, %c0_81] : memref<1x32xf32, #tpu.memory_space<vmem>>, vector<1x32xf32>
    %226 = vector.broadcast %225 : vector<1x32xf32> to vector<16x32xf32>
    %227 = arith.addf %224, %226 : vector<16x32xf32>
    %228 = vector.shape_cast %227 : vector<16x32xf32> to vector<2x8x32xf32>
    %c0_82 = arith.constant 0 : index
    %c0_83 = arith.constant 0 : index
    %c0_84 = arith.constant 0 : index
    %229 = vector.load %arg14[%c0_82, %c0_83, %c0_84] : memref<2x8x32xf32, #tpu.memory_space<vmem>>, vector<2x8x32xf32>
    tpu.vector_store %arg14[%c0_82, %c0_83, %c0_84], %228 {strides = array<i32>} : memref<2x8x32xf32, #tpu.memory_space<vmem>>, vector<2x8x32xf32>,
    return
  }
}

</mosaic_0001>

<llo_original>
// kernel: tpu_custom_call.1
$region0: #{tpu_custom_call.1}
  #allocation0 [shape = 'u32[]', space=smem, size = 0x4, offset = 0x4, fixed_abs, tag = 'smem constant byte address 0x4 - core index']
  #allocation1 [shape = 'u32[144,128]{1,0:T(1,128)}', space=vmem, size = 0x12000, scoped, tag = 'internal scratch']
  %s0 = inlined_call_operand.vmem [shape: f32[2,8,32], index: 0, kind: input, shape index: {}]
  %s1 = inlined_call_operand.vmem [shape: f32[2,8], index: 1, kind: input, shape index: {}]
  %s2 = inlined_call_operand.vmem [shape: f32[32,96], index: 2, kind: input, shape index: {}]
  %s3 = inlined_call_operand.vmem [shape: f32[1,96], index: 3, kind: input, shape index: {}]
  %s4 = inlined_call_operand.vmem [shape: f32[32,32], index: 4, kind: input, shape index: {}]
  %s5 = inlined_call_operand.vmem [shape: f32[1,32], index: 5, kind: input, shape index: {}]
  %s6 = inlined_call_operand.vmem [shape: f32[1,32], index: 6, kind: input, shape index: {}]
  %s7 = inlined_call_operand.vmem [shape: f32[1,32], index: 7, kind: input, shape index: {}]
  %s8 = inlined_call_operand.vmem [shape: f32[32,2048], index: 8, kind: input, shape index: {}]
  %s9 = inlined_call_operand.vmem [shape: f32[1,2048], index: 9, kind: input, shape index: {}]
  %s10 = inlined_call_operand.vmem [shape: f32[2048,32], index: 10, kind: input, shape index: {}]
  %s11 = inlined_call_operand.vmem [shape: f32[1,32], index: 11, kind: input, shape index: {}]
  %s12 = inlined_call_operand.vmem [shape: f32[1,32], index: 12, kind: input, shape index: {}]
  %s13 = inlined_call_operand.vmem [shape: f32[1,32], index: 13, kind: input, shape index: {}]
  %s14 = inlined_call_operand.hbm [shape: f32[2,8,32], index: 14, kind: output, shape index: {}]
  %s15 = sld [smem:[#allocation0]]
  $region66: #{tpu_custom_call.1} parent=0
    _
  %s17 = ssub.s32 1, %s15
  %s18 = scalar_select 0, %s17, %s15
  $region1: #{tpu_custom_call.1} parent=0
    #allocation2 [shape = 'u8[8192]{0}', space=vmem, size = 0x2000, scoped, tag = 'output window, operand 0, single buffered']
    #allocation3 [shape = 's32[1]{0}', space=sflag, size = 0x4, scoped, tag = 'scoped memory for tpu_custom_call.1']
    %19 = vsyncpa [#allocation3], 0
    // Predicated region
    $region2: #{tpu_custom_call.1} parent=1 // pred_check
      _
    $region3: #{tpu_custom_call.1} parent=1 // pred_check_branch
      %21 = sbr.rel (0) target = $region5
    $region4: #{tpu_custom_call.1} parent=1 // pred_region
      _
    $region5: #{tpu_custom_call.1} parent=1 // pred_fallthru
      _
    // Predicated region
    $region6: #{tpu_custom_call.1} parent=1 // pred_check
      _
    $region7: #{tpu_custom_call.1} parent=1 // pred_check_branch
      %23 = sbr.rel (0) target = $region9
    $region8: #{tpu_custom_call.1} parent=1 // pred_region
      _
    $region9: #{tpu_custom_call.1} parent=1 // pred_fallthru
      _
    // Predicated region
    $region10: #{tpu_custom_call.1} parent=1 // pred_check
      _
    $region11: #{tpu_custom_call.1} parent=1 // pred_check_branch
      %25 = sbr.rel (0) target = $region13
    $region12: #{tpu_custom_call.1} parent=1 // pred_region
      _
    $region13: #{tpu_custom_call.1} parent=1 // pred_fallthru
      _
    // Predicated region
    $region14: #{tpu_custom_call.1} parent=1 // pred_check
      _
    $region15: #{tpu_custom_call.1} parent=1 // pred_check_branch
      %27 = sbr.rel (0) target = $region17
    $region16: #{tpu_custom_call.1} parent=1 // pred_region
      _
    $region17: #{tpu_custom_call.1} parent=1 // pred_fallthru
      _
    // Predicated region
    $region18: #{tpu_custom_call.1} parent=1 // pred_check
      _
    $region19: #{tpu_custom_call.1} parent=1 // pred_check_branch
      %29 = sbr.rel (0) target = $region21
    $region20: #{tpu_custom_call.1} parent=1 // pred_region
      _
    $region21: #{tpu_custom_call.1} parent=1 // pred_fallthru
      _
    // Predicated region
    $region22: #{tpu_custom_call.1} parent=1 // pred_check
      _
    $region23: #{tpu_custom_call.1} parent=1 // pred_check_branch
      %31 = sbr.rel (0) target = $region25
    $region24: #{tpu_custom_call.1} parent=1 // pred_region
      _
    $region25: #{tpu_custom_call.1} parent=1 // pred_fallthru
      _
    // Predicated region
    $region26: #{tpu_custom_call.1} parent=1 // pred_check
      _
    $region27: #{tpu_custom_call.1} parent=1 // pred_check_branch
      %33 = sbr.rel (0) target = $region29
    $region28: #{tpu_custom_call.1} parent=1 // pred_region
      _
    $region29: #{tpu_custom_call.1} parent=1 // pred_fallthru
      _
    // Predicated region
    $region30: #{tpu_custom_call.1} parent=1 // pred_check
      _
    $region31: #{tpu_custom_call.1} parent=1 // pred_check_branch
      %35 = sbr.rel (0) target = $region33
    $region32: #{tpu_custom_call.1} parent=1 // pred_region
      _
    $region33: #{tpu_custom_call.1} parent=1 // pred_fallthru
      _
    // Predicated region
    $region34: #{tpu_custom_call.1} parent=1 // pred_check
      _
    $region35: #{tpu_custom_call.1} parent=1 // pred_check_branch
      %37 = sbr.rel (0) target = $region37
    $region36: #{tpu_custom_call.1} parent=1 // pred_region
      _
    $region37: #{tpu_custom_call.1} parent=1 // pred_fallthru
      _
    // Predicated region
    $region38: #{tpu_custom_call.1} parent=1 // pred_check
      _
    $region39: #{tpu_custom_call.1} parent=1 // pred_check_branch
      %39 = sbr.rel (0) target = $region41
    $region40: #{tpu_custom_call.1} parent=1 // pred_region
      _
    $region41: #{tpu_custom_call.1} parent=1 // pred_fallthru
      _
    // Predicated region
    $region42: #{tpu_custom_call.1} parent=1 // pred_check
      _
    $region43: #{tpu_custom_call.1} parent=1 // pred_check_branch
      %41 = sbr.rel (0) target = $region45
    $region44: #{tpu_custom_call.1} parent=1 // pred_region
      _
    $region45: #{tpu_custom_call.1} parent=1 // pred_fallthru
      _
    // Predicated region
    $region46: #{tpu_custom_call.1} parent=1 // pred_check
      _
    $region47: #{tpu_custom_call.1} parent=1 // pred_check_branch
      %43 = sbr.rel (0) target = $region49
    $region48: #{tpu_custom_call.1} parent=1 // pred_region
      _
    $region49: #{tpu_custom_call.1} parent=1 // pred_fallthru
      _
    // Predicated region
    $region50: #{tpu_custom_call.1} parent=1 // pred_check
      _
    $region51: #{tpu_custom_call.1} parent=1 // pred_check_branch
      %45 = sbr.rel (0) target = $region53
    $region52: #{tpu_custom_call.1} parent=1 // pred_region
      _
    $region53: #{tpu_custom_call.1} parent=1 // pred_fallthru
      _
    // Predicated region
    $region54: #{tpu_custom_call.1} parent=1 // pred_check
      _
    $region55: #{tpu_custom_call.1} parent=1 // pred_check_branch
      %47 = sbr.rel (0) target = $region57
    $region56: #{tpu_custom_call.1} parent=1 // pred_region
      _
    $region57: #{tpu_custom_call.1} parent=1 // pred_fallthru
      _
    %v48 = vld [vmem:[%s0] sm:$0xff]
    %v49 = vld [vmem:[%s0 + $0x8] sm:$0xff]
    %v50 = vld [vmem:[%s2] sm:$0xff]
    %v51 = vld [vmem:[%s2 + $0x8] sm:$0xff]
    %v52 = vld [vmem:[%s2 + $0x10] sm:$0xff]
    %v53 = vld [vmem:[%s2 + $0x18] sm:$0xff]
    %v54 = vld [vmem:[%s3] sm:$0x1]
    %v56 = vlaneseq
    %v57 = vshrl.u32 %v56, 7
    %v58 = vsub.s32 0, %v57
    %v59 = vrot.slane %v54, %v58
    %vm61 = vcmask 261120
    %v63 = vsel %vm61, %v48, 0
    %v66 = vsel %vm61, %v49, 0
    %68 = vmatprep.subr.mxu0 0.0
    %69 = vmatpush1.msra.mxu0 0.0
    %70 = vmatprep.subr.mxu0 0.0
    %71 = vmatpush1.msra.mxu0 0.0
    %72 = vmatprep.subr.mxu0 0.0
    %73 = vmatpush1.msra.mxu0 0.0
    %74 = vmatprep.subr.mxu0 0.0
    %75 = vmatpush1.msra.mxu0 0.0
    %76 = vmatprep.subr.mxu0 0.0
    %77 = vmatpush1.msra.mxu0 0.0
    %78 = vmatprep.subr.mxu0 0.0
    %79 = vmatpush1.msra.mxu0 0.0
    %80 = vmatprep.subr.mxu0 0.0
    %81 = vmatpush1.msra.mxu0 0.0
    %82 = vmatprep.subr.mxu0 0.0
    %83 = vmatpush1.msra.mxu0 0.0
    %84 = vmatprep.subr.mxu0 0.0
    %85 = vmatpush1.msra.mxu0 0.0
    %86 = vmatprep.subr.mxu0 0.0
    %87 = vmatpush1.msra.mxu0 0.0
    %88 = vmatprep.subr.mxu0 0.0
    %89 = vmatpush1.msra.mxu0 0.0
    %90 = vmatprep.subr.mxu0 0.0
    %91 = vmatpush1.msra.mxu0 0.0
    %92 = vmatprep.subr.mxu0 0.0
    %93 = vmatpush1.msra.mxu0 %v53
    %94 = vmatprep.subr.mxu0 0.0
    %95 = vmatpush1.msra.mxu0 %v52
    %96 = vmatprep.subr.mxu0 0.0
    %97 = vmatpush1.msra.mxu0 %v51
    %98 = vmatprep.subr.mxu0 0.0
    %99 = vmatpush1.msra.mxu0 %v50
    %100 = vmatprep.subr.mxu0 0.0
    %101 = vmatpush2.msra.mxu0 0.0
    %102 = vmatprep.subr.mxu0 0.0
    %103 = vmatpush2.msra.mxu0 0.0
    %104 = vmatprep.subr.mxu0 0.0
    %105 = vmatpush2.msra.mxu0 0.0
    %106 = vmatprep.subr.mxu0 0.0
    %107 = vmatpush2.msra.mxu0 0.0
    %108 = vmatprep.subr.mxu0 0.0
    %109 = vmatpush2.msra.mxu0 0.0
    %110 = vmatprep.subr.mxu0 0.0
    %111 = vmatpush2.msra.mxu0 0.0
    %112 = vmatprep.subr.mxu0 0.0
    %113 = vmatpush2.msra.mxu0 0.0
    %114 = vmatprep.subr.mxu0 0.0
    %115 = vmatpush2.msra.mxu0 0.0
    %116 = vmatprep.subr.mxu0 0.0
    %117 = vmatpush2.msra.mxu0 0.0
    %118 = vmatprep.subr.mxu0 0.0
    %119 = vmatpush2.msra.mxu0 0.0
    %120 = vmatprep.subr.mxu0 0.0
    %121 = vmatpush2.msra.mxu0 0.0
    %122 = vmatprep.subr.mxu0 0.0
    %123 = vmatpush2.msra.mxu0 0.0
    %124 = vmatprep.subr.mxu0 0.0
    %125 = vmatpush2.msra.mxu0 0.0
    %126 = vmatprep.subr.mxu0 0.0
    %127 = vmatpush2.msra.mxu0 0.0
    %128 = vmatprep.subr.mxu0 0.0
    %129 = vmatpush2.msra.mxu0 0.0
    %130 = vmatprep.subr.mxu0 0.0
    %131 = vmatpush2.msra.mxu0 0.0
    %132 = vmatprep.mubr.f32.mxu0 0.0
    %133 = vmatmul.mubr.f32.gmra.mxu0 %v63
    %v134 = vpop.f32.mrf.mxu0
    %v135 = vadd.f32 %v59, %v134
    %v136 = vpop.f32.mrf.mxu0
    %137 = vmatprep.mubr.f32.mxu0 0.0
    %138 = vmatmul.mubr.f32.gmra.mxu0 %v66
    %v139 = vpop.f32.mrf.mxu0
    %v140 = vadd.f32 %v59, %v139
    %v141 = vpop.f32.mrf.mxu0
    %142 = vdwg.mxu0
    %v143 = vld [vmem:[%s1] sm:$0x3]
    %v146 = vunpack.c.l.s4 1966171168
    %v147 = vunpack.c.0.s8 %v146
    %v148 = vlaneseq
    %v149 = vshrl.u32 %v148, 7
    %v150 = vsub.s32 %v147, %v149
    %v151 = vrot.slane %v143, %v150
    %v152 = vcombine.high %v151, %v151
    %v154 = vunpack.c.l.s4 1966171168
    %v155 = vunpack.c.0.s8 %v154
    %v156 = vlaneseq
    %v157 = vshrl.u32 %v156, 7
    %v158 = vsub.s32 %v155, %v157
    %v159 = vrot.slane %v151, %v158
    %v161 = vunpack.c.l.s4 1966171168
    %v162 = vunpack.c.0.s8 %v161
    %v163 = vlaneseq
    %v164 = vshrl.u32 %v163, 7
    %v165 = vsub.s32 %v162, %v164
    %v166 = vrot.slane %v152, %v165
    %v167 = vmul.f32 %v135, 0.5
    %v168 = vmul.f32 %v140, 0.5
    %v169 = vlaneseq
    %v170 = vshrl.u32 %v169, 7
    %v171 = vsub.s32 0, %v170
    %v172 = vrot.slane %v159, %v171
    %v173 = vlaneseq
    %v174 = vshrl.u32 %v173, 7
    %v175 = vsub.s32 0, %v174
    %v176 = vrot.slane %v166, %v175
    %180 = vrot.lane.b32.xlu0 %v135, 96
    %v181 = vpop.permute.xlu0 %180
    %vm182 = vcmask 31744
    %v184 = vsel %vm182, %v167, 0
    %v186 = vsel %vm182, %v181, 0
    %188 = vmatprep.subr.mxu0 0.0
    %189 = vmatpush1.xpose.msra.mxu0 0.0
    %190 = vmatprep.subr.mxu0 0.0
    %191 = vmatpush1.xpose.msra.mxu0 0.0
    %192 = vmatprep.subr.mxu0 0.0
    %193 = vmatpush1.xpose.msra.mxu0 0.0
    %194 = vmatprep.subr.mxu0 0.0
    %195 = vmatpush1.xpose.msra.mxu0 0.0
    %196 = vmatprep.subr.mxu0 0.0
    %197 = vmatpush1.xpose.msra.mxu0 0.0
    %198 = vmatprep.subr.mxu0 0.0
    %199 = vmatpush1.xpose.msra.mxu0 0.0
    %200 = vmatprep.subr.mxu0 0.0
    %201 = vmatpush1.xpose.msra.mxu0 0.0
    %202 = vmatprep.subr.mxu0 0.0
    %203 = vmatpush1.xpose.msra.mxu0 0.0
    %204 = vmatprep.subr.mxu0 0.0
    %205 = vmatpush1.xpose.msra.mxu0 0.0
    %206 = vmatprep.subr.mxu0 0.0
    %207 = vmatpush1.xpose.msra.mxu0 0.0
    %208 = vmatprep.subr.mxu0 0.0
    %209 = vmatpush1.xpose.msra.mxu0 0.0
    %210 = vmatprep.subr.mxu0 0.0
    %211 = vmatpush1.xpose.msra.mxu0 0.0
    %212 = vmatprep.subr.mxu0 0.0
    %213 = vmatpush1.xpose.msra.mxu0 0.0
    %214 = vmatprep.subr.mxu0 0.0
    %215 = vmatpush1.xpose.msra.mxu0 0.0
    %216 = vmatprep.subr.mxu0 0.0
    %217 = vmatpush1.xpose.msra.mxu0 0.0
    %218 = vmatprep.subr.mxu0 0.0
    %219 = vmatpush1.xpose.msra.mxu0 %v186
    %220 = vmatprep.subr.mxu0 0.0
    %221 = vmatpush2.xpose.msra.mxu0 0.0
    %222 = vmatprep.subr.mxu0 0.0
    %223 = vmatpush2.xpose.msra.mxu0 0.0
    %224 = vmatprep.subr.mxu0 0.0
    %225 = vmatpush2.xpose.msra.mxu0 0.0
    %226 = vmatprep.subr.mxu0 0.0
    %227 = vmatpush2.xpose.msra.mxu0 0.0
    %228 = vmatprep.subr.mxu0 0.0
    %229 = vmatpush2.xpose.msra.mxu0 0.0
    %230 = vmatprep.subr.mxu0 0.0
    %231 = vmatpush2.xpose.msra.mxu0 0.0
    %232 = vmatprep.subr.mxu0 0.0
    %233 = vmatpush2.xpose.msra.mxu0 0.0
    %234 = vmatprep.subr.mxu0 0.0
    %235 = vmatpush2.xpose.msra.mxu0 0.0
    %236 = vmatprep.subr.mxu0 0.0
    %237 = vmatpush2.xpose.msra.mxu0 0.0
    %238 = vmatprep.subr.mxu0 0.0
    %239 = vmatpush2.xpose.msra.mxu0 0.0
    %240 = vmatprep.subr.mxu0 0.0
    %241 = vmatpush2.xpose.msra.mxu0 0.0
    %242 = vmatprep.subr.mxu0 0.0
    %243 = vmatpush2.xpose.msra.mxu0 0.0
    %244 = vmatprep.subr.mxu0 0.0
    %245 = vmatpush2.xpose.msra.mxu0 0.0
    %246 = vmatprep.subr.mxu0 0.0
    %247 = vmatpush2.xpose.msra.mxu0 0.0
    %248 = vmatprep.subr.mxu0 0.0
    %249 = vmatpush2.xpose.msra.mxu0 0.0
    %250 = vmatprep.subr.mxu0 0.0
    %251 = vmatpush2.xpose.msra.mxu0 0.0
    %252 = vmatprep.mubr.f32.mxu0 0.0
    %253 = vmatmul.mubr.f32.gmra.mxu0 %v184
    %v254 = vpop.f32.mrf.mxu0
    %v255 = vadd.f32 %v172, %v254
    %v256 = vpop.f32.mrf.mxu0
    %257 = vdwg.mxu0
    %259 = vrot.lane.b32.xlu0 %v140, 96
    %v260 = vpop.permute.xlu0 %259
    %v262 = vsel %vm182, %v168, 0
    %v264 = vsel %vm182, %v260, 0
    %266 = vmatprep.subr.mxu0 0.0
    %267 = vmatpush1.xpose.msra.mxu0 0.0
    %268 = vmatprep.subr.mxu0 0.0
    %269 = vmatpush1.xpose.msra.mxu0 0.0
    %270 = vmatprep.subr.mxu0 0.0
    %271 = vmatpush1.xpose.msra.mxu0 0.0
    %272 = vmatprep.subr.mxu0 0.0
    %273 = vmatpush1.xpose.msra.mxu0 0.0
    %274 = vmatprep.subr.mxu0 0.0
    %275 = vmatpush1.xpose.msra.mxu0 0.0
    %276 = vmatprep.subr.mxu0 0.0
    %277 = vmatpush1.xpose.msra.mxu0 0.0
    %278 = vmatprep.subr.mxu0 0.0
    %279 = vmatpush1.xpose.msra.mxu0 0.0
    %280 = vmatprep.subr.mxu0 0.0
    %281 = vmatpush1.xpose.msra.mxu0 0.0
    %282 = vmatprep.subr.mxu0 0.0
    %283 = vmatpush1.xpose.msra.mxu0 0.0
    %284 = vmatprep.subr.mxu0 0.0
    %285 = vmatpush1.xpose.msra.mxu0 0.0
    %286 = vmatprep.subr.mxu0 0.0
    %287 = vmatpush1.xpose.msra.mxu0 0.0
    %288 = vmatprep.subr.mxu0 0.0
    %289 = vmatpush1.xpose.msra.mxu0 0.0
    %290 = vmatprep.subr.mxu0 0.0
    %291 = vmatpush1.xpose.msra.mxu0 0.0
    %292 = vmatprep.subr.mxu0 0.0
    %293 = vmatpush1.xpose.msra.mxu0 0.0
    %294 = vmatprep.subr.mxu0 0.0
    %295 = vmatpush1.xpose.msra.mxu0 0.0
    %296 = vmatprep.subr.mxu0 0.0
    %297 = vmatpush1.xpose.msra.mxu0 %v264
    %298 = vmatprep.subr.mxu0 0.0
    %299 = vmatpush2.xpose.msra.mxu0 0.0
    %300 = vmatprep.subr.mxu0 0.0
    %301 = vmatpush2.xpose.msra.mxu0 0.0
    %302 = vmatprep.subr.mxu0 0.0
    %303 = vmatpush2.xpose.msra.mxu0 0.0
    %304 = vmatprep.subr.mxu0 0.0
    %305 = vmatpush2.xpose.msra.mxu0 0.0
    %306 = vmatprep.subr.mxu0 0.0
    %307 = vmatpush2.xpose.msra.mxu0 0.0
    %308 = vmatprep.subr.mxu0 0.0
    %309 = vmatpush2.xpose.msra.mxu0 0.0
    %310 = vmatprep.subr.mxu0 0.0
    %311 = vmatpush2.xpose.msra.mxu0 0.0
    %312 = vmatprep.subr.mxu0 0.0
    %313 = vmatpush2.xpose.msra.mxu0 0.0
    %314 = vmatprep.subr.mxu0 0.0
    %315 = vmatpush2.xpose.msra.mxu0 0.0
    %316 = vmatprep.subr.mxu0 0.0
    %317 = vmatpush2.xpose.msra.mxu0 0.0
    %318 = vmatprep.subr.mxu0 0.0
    %319 = vmatpush2.xpose.msra.mxu0 0.0
    %320 = vmatprep.subr.mxu0 0.0
    %321 = vmatpush2.xpose.msra.mxu0 0.0
    %322 = vmatprep.subr.mxu0 0.0
    %323 = vmatpush2.xpose.msra.mxu0 0.0
    %324 = vmatprep.subr.mxu0 0.0
    %325 = vmatpush2.xpose.msra.mxu0 0.0
    %326 = vmatprep.subr.mxu0 0.0
    %327 = vmatpush2.xpose.msra.mxu0 0.0
    %328 = vmatprep.subr.mxu0 0.0
    %329 = vmatpush2.xpose.msra.mxu0 0.0
    %330 = vmatprep.mubr.f32.mxu0 0.0
    %331 = vmatmul.mubr.f32.gmra.mxu0 %v262
    %v332 = vpop.f32.mrf.mxu0
    %v333 = vadd.f32 %v176, %v332
    %v334 = vpop.f32.mrf.mxu0
    %335 = vdwg.mxu0
    %vm336 = vcmask 64512
    %v337 = vsel %vm336, %v255, -inf
    %338 = vmax.xlane.f32.xlu0 %v337
    %v339 = vpop.xlane.xlu0 %338
    %v340 = vsel %vm336, %v333, -inf
    %341 = vmax.xlane.f32.xlu0 %v340
    %v342 = vpop.xlane.xlu0 %341
    %v343 = vsub.f32 %v255, %v339
    %v344 = vsub.f32 %v333, %v342
    %v345 = vmul.f32 %v343, 1.442695
    %v346 = vpow.pop %v345
    %v347 = vmul.f32 %v344, 1.442695
    %v348 = vpow.pop %v347
    %v349 = vsel %vm336, %v346, 0.0
    %350 = vadd.xlane.f32.xlu0 %v349
    %v351 = vpop.xlane.xlu0 %350
    %v352 = vsel %vm336, %v348, 0.0
    %353 = vadd.xlane.f32.xlu0 %v352
    %v354 = vpop.xlane.xlu0 %353
    %v355 = vrcp.pop %v351
    %v356 = vmul.f32 %v346, %v355
    %v357 = vrcp.pop %v354
    %v358 = vmul.f32 %v348, %v357
    %359 = vrot.lane.b32.xlu0 %v135, 64
    %v360 = vpop.permute.xlu0 %359
    %v363 = vsel %vm336, %v356, 0
    %365 = vmatprep.subr.mxu0 0.0
    %366 = vmatpush1.msra.mxu0 0.0
    %367 = vmatprep.subr.mxu0 0.0
    %368 = vmatpush1.msra.mxu0 0.0
    %369 = vmatprep.subr.mxu0 0.0
    %370 = vmatpush1.msra.mxu0 0.0
    %371 = vmatprep.subr.mxu0 0.0
    %372 = vmatpush1.msra.mxu0 0.0
    %373 = vmatprep.subr.mxu0 0.0
    %374 = vmatpush1.msra.mxu0 0.0
    %375 = vmatprep.subr.mxu0 0.0
    %376 = vmatpush1.msra.mxu0 0.0
    %377 = vmatprep.subr.mxu0 0.0
    %378 = vmatpush1.msra.mxu0 0.0
    %379 = vmatprep.subr.mxu0 0.0
    %380 = vmatpush1.msra.mxu0 0.0
    %381 = vmatprep.subr.mxu0 0.0
    %382 = vmatpush1.msra.mxu0 0.0
    %383 = vmatprep.subr.mxu0 0.0
    %384 = vmatpush1.msra.mxu0 0.0
    %385 = vmatprep.subr.mxu0 0.0
    %386 = vmatpush1.msra.mxu0 0.0
    %387 = vmatprep.subr.mxu0 0.0
    %388 = vmatpush1.msra.mxu0 0.0
    %389 = vmatprep.subr.mxu0 0.0
    %390 = vmatpush1.msra.mxu0 0.0
    %391 = vmatprep.subr.mxu0 0.0
    %392 = vmatpush1.msra.mxu0 0.0
    %393 = vmatprep.subr.mxu0 0.0
    %394 = vmatpush1.msra.mxu0 0.0
    %395 = vmatprep.subr.mxu0 0.0
    %396 = vmatpush1.msra.mxu0 %v360
    %397 = vmatprep.subr.mxu0 0.0
    %398 = vmatpush2.msra.mxu0 0.0
    %399 = vmatprep.subr.mxu0 0.0
    %400 = vmatpush2.msra.mxu0 0.0
    %401 = vmatprep.subr.mxu0 0.0
    %402 = vmatpush2.msra.mxu0 0.0
    %403 = vmatprep.subr.mxu0 0.0
    %404 = vmatpush2.msra.mxu0 0.0
    %405 = vmatprep.subr.mxu0 0.0
    %406 = vmatpush2.msra.mxu0 0.0
    %407 = vmatprep.subr.mxu0 0.0
    %408 = vmatpush2.msra.mxu0 0.0
    %409 = vmatprep.subr.mxu0 0.0
    %410 = vmatpush2.msra.mxu0 0.0
    %411 = vmatprep.subr.mxu0 0.0
    %412 = vmatpush2.msra.mxu0 0.0
    %413 = vmatprep.subr.mxu0 0.0
    %414 = vmatpush2.msra.mxu0 0.0
    %415 = vmatprep.subr.mxu0 0.0
    %416 = vmatpush2.msra.mxu0 0.0
    %417 = vmatprep.subr.mxu0 0.0
    %418 = vmatpush2.msra.mxu0 0.0
    %419 = vmatprep.subr.mxu0 0.0
    %420 = vmatpush2.msra.mxu0 0.0
    %421 = vmatprep.subr.mxu0 0.0
    %422 = vmatpush2.msra.mxu0 0.0
    %423 = vmatprep.subr.mxu0 0.0
    %424 = vmatpush2.msra.mxu0 0.0
    %425 = vmatprep.subr.mxu0 0.0
    %426 = vmatpush2.msra.mxu0 0.0
    %427 = vmatprep.subr.mxu0 0.0
    %428 = vmatpush2.msra.mxu0 0.0
    %429 = vmatprep.mubr.f32.mxu0 0.0
    %430 = vmatmul.mubr.f32.gmra.mxu0 %v363
    %v431 = vpop.f32.mrf.mxu0
    %v432 = vadd.f32 0.0, %v431
    %v433 = vpop.f32.mrf.mxu0
    %434 = vdwg.mxu0
    %435 = vrot.lane.b32.xlu0 %v140, 64
    %v436 = vpop.permute.xlu0 %435
    %v439 = vsel %vm336, %v358, 0
    %441 = vmatprep.subr.mxu0 0.0
    %442 = vmatpush1.msra.mxu0 0.0
    %443 = vmatprep.subr.mxu0 0.0
    %444 = vmatpush1.msra.mxu0 0.0
    %445 = vmatprep.subr.mxu0 0.0
    %446 = vmatpush1.msra.mxu0 0.0
    %447 = vmatprep.subr.mxu0 0.0
    %448 = vmatpush1.msra.mxu0 0.0
    %449 = vmatprep.subr.mxu0 0.0
    %450 = vmatpush1.msra.mxu0 0.0
    %451 = vmatprep.subr.mxu0 0.0
    %452 = vmatpush1.msra.mxu0 0.0
    %453 = vmatprep.subr.mxu0 0.0
    %454 = vmatpush1.msra.mxu0 0.0
    %455 = vmatprep.subr.mxu0 0.0
    %456 = vmatpush1.msra.mxu0 0.0
    %457 = vmatprep.subr.mxu0 0.0
    %458 = vmatpush1.msra.mxu0 0.0
    %459 = vmatprep.subr.mxu0 0.0
    %460 = vmatpush1.msra.mxu0 0.0
    %461 = vmatprep.subr.mxu0 0.0
    %462 = vmatpush1.msra.mxu0 0.0
    %463 = vmatprep.subr.mxu0 0.0
    %464 = vmatpush1.msra.mxu0 0.0
    %465 = vmatprep.subr.mxu0 0.0
    %466 = vmatpush1.msra.mxu0 0.0
    %467 = vmatprep.subr.mxu0 0.0
    %468 = vmatpush1.msra.mxu0 0.0
    %469 = vmatprep.subr.mxu0 0.0
    %470 = vmatpush1.msra.mxu0 0.0
    %471 = vmatprep.subr.mxu0 0.0
    %472 = vmatpush1.msra.mxu0 %v436
    %473 = vmatprep.subr.mxu0 0.0
    %474 = vmatpush2.msra.mxu0 0.0
    %475 = vmatprep.subr.mxu0 0.0
    %476 = vmatpush2.msra.mxu0 0.0
    %477 = vmatprep.subr.mxu0 0.0
    %478 = vmatpush2.msra.mxu0 0.0
    %479 = vmatprep.subr.mxu0 0.0
    %480 = vmatpush2.msra.mxu0 0.0
    %481 = vmatprep.subr.mxu0 0.0
    %482 = vmatpush2.msra.mxu0 0.0
    %483 = vmatprep.subr.mxu0 0.0
    %484 = vmatpush2.msra.mxu0 0.0
    %485 = vmatprep.subr.mxu0 0.0
    %486 = vmatpush2.msra.mxu0 0.0
    %487 = vmatprep.subr.mxu0 0.0
    %488 = vmatpush2.msra.mxu0 0.0
    %489 = vmatprep.subr.mxu0 0.0
    %490 = vmatpush2.msra.mxu0 0.0
    %491 = vmatprep.subr.mxu0 0.0
    %492 = vmatpush2.msra.mxu0 0.0
    %493 = vmatprep.subr.mxu0 0.0
    %494 = vmatpush2.msra.mxu0 0.0
    %495 = vmatprep.subr.mxu0 0.0
    %496 = vmatpush2.msra.mxu0 0.0
    %497 = vmatprep.subr.mxu0 0.0
    %498 = vmatpush2.msra.mxu0 0.0
    %499 = vmatprep.subr.mxu0 0.0
    %500 = vmatpush2.msra.mxu0 0.0
    %501 = vmatprep.subr.mxu0 0.0
    %502 = vmatpush2.msra.mxu0 0.0
    %503 = vmatprep.subr.mxu0 0.0
    %504 = vmatpush2.msra.mxu0 0.0
    %505 = vmatprep.mubr.f32.mxu0 0.0
    %506 = vmatmul.mubr.f32.gmra.mxu0 %v439
    %v507 = vpop.f32.mrf.mxu0
    %v508 = vadd.f32 0.0, %v507
    %v509 = vpop.f32.mrf.mxu0
    %510 = vdwg.mxu0
    %511 = vrot.lane.b32.xlu0 %v167, 124
    %v512 = vpop.permute.xlu0 %511
    %513 = vrot.lane.b32.xlu0 %v135, 92
    %v514 = vpop.permute.xlu0 %513
    %v515 = vsel %vm182, %v512, 0
    %v517 = vsel %vm182, %v514, 0
    %519 = vmatprep.subr.mxu0 0.0
    %520 = vmatpush1.xpose.msra.mxu0 0.0
    %521 = vmatprep.subr.mxu0 0.0
    %522 = vmatpush1.xpose.msra.mxu0 0.0
    %523 = vmatprep.subr.mxu0 0.0
    %524 = vmatpush1.xpose.msra.mxu0 0.0
    %525 = vmatprep.subr.mxu0 0.0
    %526 = vmatpush1.xpose.msra.mxu0 0.0
    %527 = vmatprep.subr.mxu0 0.0
    %528 = vmatpush1.xpose.msra.mxu0 0.0
    %529 = vmatprep.subr.mxu0 0.0
    %530 = vmatpush1.xpose.msra.mxu0 0.0
    %531 = vmatprep.subr.mxu0 0.0
    %532 = vmatpush1.xpose.msra.mxu0 0.0
    %533 = vmatprep.subr.mxu0 0.0
    %534 = vmatpush1.xpose.msra.mxu0 0.0
    %535 = vmatprep.subr.mxu0 0.0
    %536 = vmatpush1.xpose.msra.mxu0 0.0
    %537 = vmatprep.subr.mxu0 0.0
    %538 = vmatpush1.xpose.msra.mxu0 0.0
    %539 = vmatprep.subr.mxu0 0.0
    %540 = vmatpush1.xpose.msra.mxu0 0.0
    %541 = vmatprep.subr.mxu0 0.0
    %542 = vmatpush1.xpose.msra.mxu0 0.0
    %543 = vmatprep.subr.mxu0 0.0
    %544 = vmatpush1.xpose.msra.mxu0 0.0
    %545 = vmatprep.subr.mxu0 0.0
    %546 = vmatpush1.xpose.msra.mxu0 0.0
    %547 = vmatprep.subr.mxu0 0.0
    %548 = vmatpush1.xpose.msra.mxu0 0.0
    %549 = vmatprep.subr.mxu0 0.0
    %550 = vmatpush1.xpose.msra.mxu0 %v517
    %551 = vmatprep.subr.mxu0 0.0
    %552 = vmatpush2.xpose.msra.mxu0 0.0
    %553 = vmatprep.subr.mxu0 0.0
    %554 = vmatpush2.xpose.msra.mxu0 0.0
    %555 = vmatprep.subr.mxu0 0.0
    %556 = vmatpush2.xpose.msra.mxu0 0.0
    %557 = vmatprep.subr.mxu0 0.0
    %558 = vmatpush2.xpose.msra.mxu0 0.0
    %559 = vmatprep.subr.mxu0 0.0
    %560 = vmatpush2.xpose.msra.mxu0 0.0
    %561 = vmatprep.subr.mxu0 0.0
    %562 = vmatpush2.xpose.msra.mxu0 0.0
    %563 = vmatprep.subr.mxu0 0.0
    %564 = vmatpush2.xpose.msra.mxu0 0.0
    %565 = vmatprep.subr.mxu0 0.0
    %566 = vmatpush2.xpose.msra.mxu0 0.0
    %567 = vmatprep.subr.mxu0 0.0
    %568 = vmatpush2.xpose.msra.mxu0 0.0
    %569 = vmatprep.subr.mxu0 0.0
    %570 = vmatpush2.xpose.msra.mxu0 0.0
    %571 = vmatprep.subr.mxu0 0.0
    %572 = vmatpush2.xpose.msra.mxu0 0.0
    %573 = vmatprep.subr.mxu0 0.0
    %574 = vmatpush2.xpose.msra.mxu0 0.0
    %575 = vmatprep.subr.mxu0 0.0
    %576 = vmatpush2.xpose.msra.mxu0 0.0
    %577 = vmatprep.subr.mxu0 0.0
    %578 = vmatpush2.xpose.msra.mxu0 0.0
    %579 = vmatprep.subr.mxu0 0.0
    %580 = vmatpush2.xpose.msra.mxu0 0.0
    %581 = vmatprep.subr.mxu0 0.0
    %582 = vmatpush2.xpose.msra.mxu0 0.0
    %583 = vmatprep.mubr.f32.mxu0 0.0
    %584 = vmatmul.mubr.f32.gmra.mxu0 %v515
    %v585 = vpop.f32.mrf.mxu0
    %v586 = vadd.f32 %v172, %v585
    %v587 = vpop.f32.mrf.mxu0
    %588 = vdwg.mxu0
    %589 = vrot.lane.b32.xlu0 %v168, 124
    %v590 = vpop.permute.xlu0 %589
    %591 = vrot.lane.b32.xlu0 %v140, 92
    %v592 = vpop.permute.xlu0 %591
    %v593 = vsel %vm182, %v590, 0
    %v595 = vsel %vm182, %v592, 0
    %597 = vmatprep.subr.mxu0 0.0
    %598 = vmatpush1.xpose.msra.mxu0 0.0
    %599 = vmatprep.subr.mxu0 0.0
    %600 = vmatpush1.xpose.msra.mxu0 0.0
    %601 = vmatprep.subr.mxu0 0.0
    %602 = vmatpush1.xpose.msra.mxu0 0.0
    %603 = vmatprep.subr.mxu0 0.0
    %604 = vmatpush1.xpose.msra.mxu0 0.0
    %605 = vmatprep.subr.mxu0 0.0
    %606 = vmatpush1.xpose.msra.mxu0 0.0
    %607 = vmatprep.subr.mxu0 0.0
    %608 = vmatpush1.xpose.msra.mxu0 0.0
    %609 = vmatprep.subr.mxu0 0.0
    %610 = vmatpush1.xpose.msra.mxu0 0.0
    %611 = vmatprep.subr.mxu0 0.0
    %612 = vmatpush1.xpose.msra.mxu0 0.0
    %613 = vmatprep.subr.mxu0 0.0
    %614 = vmatpush1.xpose.msra.mxu0 0.0
    %615 = vmatprep.subr.mxu0 0.0
    %616 = vmatpush1.xpose.msra.mxu0 0.0
    %617 = vmatprep.subr.mxu0 0.0
    %618 = vmatpush1.xpose.msra.mxu0 0.0
    %619 = vmatprep.subr.mxu0 0.0
    %620 = vmatpush1.xpose.msra.mxu0 0.0
    %621 = vmatprep.subr.mxu0 0.0
    %622 = vmatpush1.xpose.msra.mxu0 0.0
    %623 = vmatprep.subr.mxu0 0.0
    %624 = vmatpush1.xpose.msra.mxu0 0.0
    %625 = vmatprep.subr.mxu0 0.0
    %626 = vmatpush1.xpose.msra.mxu0 0.0
    %627 = vmatprep.subr.mxu0 0.0
    %628 = vmatpush1.xpose.msra.mxu0 %v595
    %629 = vmatprep.subr.mxu0 0.0
    %630 = vmatpush2.xpose.msra.mxu0 0.0
    %631 = vmatprep.subr.mxu0 0.0
    %632 = vmatpush2.xpose.msra.mxu0 0.0
    %633 = vmatprep.subr.mxu0 0.0
    %634 = vmatpush2.xpose.msra.mxu0 0.0
    %635 = vmatprep.subr.mxu0 0.0
    %636 = vmatpush2.xpose.msra.mxu0 0.0
    %637 = vmatprep.subr.mxu0 0.0
    %638 = vmatpush2.xpose.msra.mxu0 0.0
    %639 = vmatprep.subr.mxu0 0.0
    %640 = vmatpush2.xpose.msra.mxu0 0.0
    %641 = vmatprep.subr.mxu0 0.0
    %642 = vmatpush2.xpose.msra.mxu0 0.0
    %643 = vmatprep.subr.mxu0 0.0
    %644 = vmatpush2.xpose.msra.mxu0 0.0
    %645 = vmatprep.subr.mxu0 0.0
    %646 = vmatpush2.xpose.msra.mxu0 0.0
    %647 = vmatprep.subr.mxu0 0.0
    %648 = vmatpush2.xpose.msra.mxu0 0.0
    %649 = vmatprep.subr.mxu0 0.0
    %650 = vmatpush2.xpose.msra.mxu0 0.0
    %651 = vmatprep.subr.mxu0 0.0
    %652 = vmatpush2.xpose.msra.mxu0 0.0
    %653 = vmatprep.subr.mxu0 0.0
    %654 = vmatpush2.xpose.msra.mxu0 0.0
    %655 = vmatprep.subr.mxu0 0.0
    %656 = vmatpush2.xpose.msra.mxu0 0.0
    %657 = vmatprep.subr.mxu0 0.0
    %658 = vmatpush2.xpose.msra.mxu0 0.0
    %659 = vmatprep.subr.mxu0 0.0
    %660 = vmatpush2.xpose.msra.mxu0 0.0
    %661 = vmatprep.mubr.f32.mxu0 0.0
    %662 = vmatmul.mubr.f32.gmra.mxu0 %v593
    %v663 = vpop.f32.mrf.mxu0
    %v664 = vadd.f32 %v176, %v663
    %v665 = vpop.f32.mrf.mxu0
    %666 = vdwg.mxu0
    %v667 = vsel %vm336, %v586, -inf
    %668 = vmax.xlane.f32.xlu0 %v667
    %v669 = vpop.xlane.xlu0 %668
    %v670 = vsel %vm336, %v664, -inf
    %671 = vmax.xlane.f32.xlu0 %v670
    %v672 = vpop.xlane.xlu0 %671
    %v673 = vsub.f32 %v586, %v669
    %v674 = vsub.f32 %v664, %v672
    %v675 = vmul.f32 %v673, 1.442695
    %v676 = vpow.pop %v675
    %v677 = vmul.f32 %v674, 1.442695
    %v678 = vpow.pop %v677
    %v679 = vsel %vm336, %v676, 0.0
    %680 = vadd.xlane.f32.xlu0 %v679
    %v681 = vpop.xlane.xlu0 %680
    %v682 = vsel %vm336, %v678, 0.0
    %683 = vadd.xlane.f32.xlu0 %v682
    %v684 = vpop.xlane.xlu0 %683
    %v685 = vrcp.pop %v681
    %v686 = vmul.f32 %v676, %v685
    %v687 = vrcp.pop %v684
    %v688 = vmul.f32 %v678, %v687
    %689 = vrot.lane.b32.xlu0 %v135, 60
    %v690 = vpop.permute.xlu0 %689
    %v693 = vsel %vm336, %v686, 0
    %695 = vmatprep.subr.mxu0 0.0
    %696 = vmatpush1.msra.mxu0 0.0
    %697 = vmatprep.subr.mxu0 0.0
    %698 = vmatpush1.msra.mxu0 0.0
    %699 = vmatprep.subr.mxu0 0.0
    %700 = vmatpush1.msra.mxu0 0.0
    %701 = vmatprep.subr.mxu0 0.0
    %702 = vmatpush1.msra.mxu0 0.0
    %703 = vmatprep.subr.mxu0 0.0
    %704 = vmatpush1.msra.mxu0 0.0
    %705 = vmatprep.subr.mxu0 0.0
    %706 = vmatpush1.msra.mxu0 0.0
    %707 = vmatprep.subr.mxu0 0.0
    %708 = vmatpush1.msra.mxu0 0.0
    %709 = vmatprep.subr.mxu0 0.0
    %710 = vmatpush1.msra.mxu0 0.0
    %711 = vmatprep.subr.mxu0 0.0
    %712 = vmatpush1.msra.mxu0 0.0
    %713 = vmatprep.subr.mxu0 0.0
    %714 = vmatpush1.msra.mxu0 0.0
    %715 = vmatprep.subr.mxu0 0.0
    %716 = vmatpush1.msra.mxu0 0.0
    %717 = vmatprep.subr.mxu0 0.0
    %718 = vmatpush1.msra.mxu0 0.0
    %719 = vmatprep.subr.mxu0 0.0
    %720 = vmatpush1.msra.mxu0 0.0
    %721 = vmatprep.subr.mxu0 0.0
    %722 = vmatpush1.msra.mxu0 0.0
    %723 = vmatprep.subr.mxu0 0.0
    %724 = vmatpush1.msra.mxu0 0.0
    %725 = vmatprep.subr.mxu0 0.0
    %726 = vmatpush1.msra.mxu0 %v690
    %727 = vmatprep.subr.mxu0 0.0
    %728 = vmatpush2.msra.mxu0 0.0
    %729 = vmatprep.subr.mxu0 0.0
    %730 = vmatpush2.msra.mxu0 0.0
    %731 = vmatprep.subr.mxu0 0.0
    %732 = vmatpush2.msra.mxu0 0.0
    %733 = vmatprep.subr.mxu0 0.0
    %734 = vmatpush2.msra.mxu0 0.0
    %735 = vmatprep.subr.mxu0 0.0
    %736 = vmatpush2.msra.mxu0 0.0
    %737 = vmatprep.subr.mxu0 0.0
    %738 = vmatpush2.msra.mxu0 0.0
    %739 = vmatprep.subr.mxu0 0.0
    %740 = vmatpush2.msra.mxu0 0.0
    %741 = vmatprep.subr.mxu0 0.0
    %742 = vmatpush2.msra.mxu0 0.0
    %743 = vmatprep.subr.mxu0 0.0
    %744 = vmatpush2.msra.mxu0 0.0
    %745 = vmatprep.subr.mxu0 0.0
    %746 = vmatpush2.msra.mxu0 0.0
    %747 = vmatprep.subr.mxu0 0.0
    %748 = vmatpush2.msra.mxu0 0.0
    %749 = vmatprep.subr.mxu0 0.0
    %750 = vmatpush2.msra.mxu0 0.0
    %751 = vmatprep.subr.mxu0 0.0
    %752 = vmatpush2.msra.mxu0 0.0
    %753 = vmatprep.subr.mxu0 0.0
    %754 = vmatpush2.msra.mxu0 0.0
    %755 = vmatprep.subr.mxu0 0.0
    %756 = vmatpush2.msra.mxu0 0.0
    %757 = vmatprep.subr.mxu0 0.0
    %758 = vmatpush2.msra.mxu0 0.0
    %759 = vmatprep.mubr.f32.mxu0 0.0
    %760 = vmatmul.mubr.f32.gmra.mxu0 %v693
    %v761 = vpop.f32.mrf.mxu0
    %v762 = vadd.f32 0.0, %v761
    %v763 = vpop.f32.mrf.mxu0
    %764 = vdwg.mxu0
    %765 = vrot.lane.b32.xlu0 %v140, 60
    %v766 = vpop.permute.xlu0 %765
    %v769 = vsel %vm336, %v688, 0
    %771 = vmatprep.subr.mxu0 0.0
    %772 = vmatpush1.msra.mxu0 0.0
    %773 = vmatprep.subr.mxu0 0.0
    %774 = vmatpush1.msra.mxu0 0.0
    %775 = vmatprep.subr.mxu0 0.0
    %776 = vmatpush1.msra.mxu0 0.0
    %777 = vmatprep.subr.mxu0 0.0
    %778 = vmatpush1.msra.mxu0 0.0
    %779 = vmatprep.subr.mxu0 0.0
    %780 = vmatpush1.msra.mxu0 0.0
    %781 = vmatprep.subr.mxu0 0.0
    %782 = vmatpush1.msra.mxu0 0.0
    %783 = vmatprep.subr.mxu0 0.0
    %784 = vmatpush1.msra.mxu0 0.0
    %785 = vmatprep.subr.mxu0 0.0
    %786 = vmatpush1.msra.mxu0 0.0
    %787 = vmatprep.subr.mxu0 0.0
    %788 = vmatpush1.msra.mxu0 0.0
    %789 = vmatprep.subr.mxu0 0.0
    %790 = vmatpush1.msra.mxu0 0.0
    %791 = vmatprep.subr.mxu0 0.0
    %792 = vmatpush1.msra.mxu0 0.0
    %793 = vmatprep.subr.mxu0 0.0
    %794 = vmatpush1.msra.mxu0 0.0
    %795 = vmatprep.subr.mxu0 0.0
    %796 = vmatpush1.msra.mxu0 0.0
    %797 = vmatprep.subr.mxu0 0.0
    %798 = vmatpush1.msra.mxu0 0.0
    %799 = vmatprep.subr.mxu0 0.0
    %800 = vmatpush1.msra.mxu0 0.0
    %801 = vmatprep.subr.mxu0 0.0
    %802 = vmatpush1.msra.mxu0 %v766
    %803 = vmatprep.subr.mxu0 0.0
    %804 = vmatpush2.msra.mxu0 0.0
    %805 = vmatprep.subr.mxu0 0.0
    %806 = vmatpush2.msra.mxu0 0.0
    %807 = vmatprep.subr.mxu0 0.0
    %808 = vmatpush2.msra.mxu0 0.0
    %809 = vmatprep.subr.mxu0 0.0
    %810 = vmatpush2.msra.mxu0 0.0
    %811 = vmatprep.subr.mxu0 0.0
    %812 = vmatpush2.msra.mxu0 0.0
    %813 = vmatprep.subr.mxu0 0.0
    %814 = vmatpush2.msra.mxu0 0.0
    %815 = vmatprep.subr.mxu0 0.0
    %816 = vmatpush2.msra.mxu0 0.0
    %817 = vmatprep.subr.mxu0 0.0
    %818 = vmatpush2.msra.mxu0 0.0
    %819 = vmatprep.subr.mxu0 0.0
    %820 = vmatpush2.msra.mxu0 0.0
    %821 = vmatprep.subr.mxu0 0.0
    %822 = vmatpush2.msra.mxu0 0.0
    %823 = vmatprep.subr.mxu0 0.0
    %824 = vmatpush2.msra.mxu0 0.0
    %825 = vmatprep.subr.mxu0 0.0
    %826 = vmatpush2.msra.mxu0 0.0
    %827 = vmatprep.subr.mxu0 0.0
    %828 = vmatpush2.msra.mxu0 0.0
    %829 = vmatprep.subr.mxu0 0.0
    %830 = vmatpush2.msra.mxu0 0.0
    %831 = vmatprep.subr.mxu0 0.0
    %832 = vmatpush2.msra.mxu0 0.0
    %833 = vmatprep.subr.mxu0 0.0
    %834 = vmatpush2.msra.mxu0 0.0
    %835 = vmatprep.mubr.f32.mxu0 0.0
    %836 = vmatmul.mubr.f32.gmra.mxu0 %v769
    %v837 = vpop.f32.mrf.mxu0
    %v838 = vadd.f32 0.0, %v837
    %v839 = vpop.f32.mrf.mxu0
    %840 = vdwg.mxu0
    %841 = vrot.lane.b32.xlu0 %v167, 120
    %v842 = vpop.permute.xlu0 %841
    %843 = vrot.lane.b32.xlu0 %v135, 88
    %v844 = vpop.permute.xlu0 %843
    %v845 = vsel %vm182, %v842, 0
    %v847 = vsel %vm182, %v844, 0
    %849 = vmatprep.subr.mxu0 0.0
    %850 = vmatpush1.xpose.msra.mxu0 0.0
    %851 = vmatprep.subr.mxu0 0.0
    %852 = vmatpush1.xpose.msra.mxu0 0.0
    %853 = vmatprep.subr.mxu0 0.0
    %854 = vmatpush1.xpose.msra.mxu0 0.0
    %855 = vmatprep.subr.mxu0 0.0
    %856 = vmatpush1.xpose.msra.mxu0 0.0
    %857 = vmatprep.subr.mxu0 0.0
    %858 = vmatpush1.xpose.msra.mxu0 0.0
    %859 = vmatprep.subr.mxu0 0.0
    %860 = vmatpush1.xpose.msra.mxu0 0.0
    %861 = vmatprep.subr.mxu0 0.0
    %862 = vmatpush1.xpose.msra.mxu0 0.0
    %863 = vmatprep.subr.mxu0 0.0
    %864 = vmatpush1.xpose.msra.mxu0 0.0
    %865 = vmatprep.subr.mxu0 0.0
    %866 = vmatpush1.xpose.msra.mxu0 0.0
    %867 = vmatprep.subr.mxu0 0.0
    %868 = vmatpush1.xpose.msra.mxu0 0.0
    %869 = vmatprep.subr.mxu0 0.0
    %870 = vmatpush1.xpose.msra.mxu0 0.0
    %871 = vmatprep.subr.mxu0 0.0
    %872 = vmatpush1.xpose.msra.mxu0 0.0
    %873 = vmatprep.subr.mxu0 0.0
    %874 = vmatpush1.xpose.msra.mxu0 0.0
    %875 = vmatprep.subr.mxu0 0.0
    %876 = vmatpush1.xpose.msra.mxu0 0.0
    %877 = vmatprep.subr.mxu0 0.0
    %878 = vmatpush1.xpose.msra.mxu0 0.0
    %879 = vmatprep.subr.mxu0 0.0
    %880 = vmatpush1.xpose.msra.mxu0 %v847
    %881 = vmatprep.subr.mxu0 0.0
    %882 = vmatpush2.xpose.msra.mxu0 0.0
    %883 = vmatprep.subr.mxu0 0.0
    %884 = vmatpush2.xpose.msra.mxu0 0.0
    %885 = vmatprep.subr.mxu0 0.0
    %886 = vmatpush2.xpose.msra.mxu0 0.0
    %887 = vmatprep.subr.mxu0 0.0
    %888 = vmatpush2.xpose.msra.mxu0 0.0
    %889 = vmatprep.subr.mxu0 0.0
    %890 = vmatpush2.xpose.msra.mxu0 0.0
    %891 = vmatprep.subr.mxu0 0.0
    %892 = vmatpush2.xpose.msra.mxu0 0.0
    %893 = vmatprep.subr.mxu0 0.0
    %894 = vmatpush2.xpose.msra.mxu0 0.0
    %895 = vmatprep.subr.mxu0 0.0
    %896 = vmatpush2.xpose.msra.mxu0 0.0
    %897 = vmatprep.subr.mxu0 0.0
    %898 = vmatpush2.xpose.msra.mxu0 0.0
    %899 = vmatprep.subr.mxu0 0.0
    %900 = vmatpush2.xpose.msra.mxu0 0.0
    %901 = vmatprep.subr.mxu0 0.0
    %902 = vmatpush2.xpose.msra.mxu0 0.0
    %903 = vmatprep.subr.mxu0 0.0
    %904 = vmatpush2.xpose.msra.mxu0 0.0
    %905 = vmatprep.subr.mxu0 0.0
    %906 = vmatpush2.xpose.msra.mxu0 0.0
    %907 = vmatprep.subr.mxu0 0.0
    %908 = vmatpush2.xpose.msra.mxu0 0.0
    %909 = vmatprep.subr.mxu0 0.0
    %910 = vmatpush2.xpose.msra.mxu0 0.0
    %911 = vmatprep.subr.mxu0 0.0
    %912 = vmatpush2.xpose.msra.mxu0 0.0
    %913 = vmatprep.mubr.f32.mxu0 0.0
    %914 = vmatmul.mubr.f32.gmra.mxu0 %v845
    %v915 = vpop.f32.mrf.mxu0
    %v916 = vadd.f32 %v172, %v915
    %v917 = vpop.f32.mrf.mxu0
    %918 = vdwg.mxu0
    %919 = vrot.lane.b32.xlu0 %v168, 120
    %v920 = vpop.permute.xlu0 %919
    %921 = vrot.lane.b32.xlu0 %v140, 88
    %v922 = vpop.permute.xlu0 %921
    %v923 = vsel %vm182, %v920, 0
    %v925 = vsel %vm182, %v922, 0
    %927 = vmatprep.subr.mxu0 0.0
    %928 = vmatpush1.xpose.msra.mxu0 0.0
    %929 = vmatprep.subr.mxu0 0.0
    %930 = vmatpush1.xpose.msra.mxu0 0.0
    %931 = vmatprep.subr.mxu0 0.0
    %932 = vmatpush1.xpose.msra.mxu0 0.0
    %933 = vmatprep.subr.mxu0 0.0
    %934 = vmatpush1.xpose.msra.mxu0 0.0
    %935 = vmatprep.subr.mxu0 0.0
    %936 = vmatpush1.xpose.msra.mxu0 0.0
    %937 = vmatprep.subr.mxu0 0.0
    %938 = vmatpush1.xpose.msra.mxu0 0.0
    %939 = vmatprep.subr.mxu0 0.0
    %940 = vmatpush1.xpose.msra.mxu0 0.0
    %941 = vmatprep.subr.mxu0 0.0
    %942 = vmatpush1.xpose.msra.mxu0 0.0
    %943 = vmatprep.subr.mxu0 0.0
    %944 = vmatpush1.xpose.msra.mxu0 0.0
    %945 = vmatprep.subr.mxu0 0.0
    %946 = vmatpush1.xpose.msra.mxu0 0.0
    %947 = vmatprep.subr.mxu0 0.0
    %948 = vmatpush1.xpose.msra.mxu0 0.0
    %949 = vmatprep.subr.mxu0 0.0
    %950 = vmatpush1.xpose.msra.mxu0 0.0
    %951 = vmatprep.subr.mxu0 0.0
    %952 = vmatpush1.xpose.msra.mxu0 0.0
    %953 = vmatprep.subr.mxu0 0.0
    %954 = vmatpush1.xpose.msra.mxu0 0.0
    %955 = vmatprep.subr.mxu0 0.0
    %956 = vmatpush1.xpose.msra.mxu0 0.0
    %957 = vmatprep.subr.mxu0 0.0
    %958 = vmatpush1.xpose.msra.mxu0 %v925
    %959 = vmatprep.subr.mxu0 0.0
    %960 = vmatpush2.xpose.msra.mxu0 0.0
    %961 = vmatprep.subr.mxu0 0.0
    %962 = vmatpush2.xpose.msra.mxu0 0.0
    %963 = vmatprep.subr.mxu0 0.0
    %964 = vmatpush2.xpose.msra.mxu0 0.0
    %965 = vmatprep.subr.mxu0 0.0
    %966 = vmatpush2.xpose.msra.mxu0 0.0
    %967 = vmatprep.subr.mxu0 0.0
    %968 = vmatpush2.xpose.msra.mxu0 0.0
    %969 = vmatprep.subr.mxu0 0.0
    %970 = vmatpush2.xpose.msra.mxu0 0.0
    %971 = vmatprep.subr.mxu0 0.0
    %972 = vmatpush2.xpose.msra.mxu0 0.0
    %973 = vmatprep.subr.mxu0 0.0
    %974 = vmatpush2.xpose.msra.mxu0 0.0
    %975 = vmatprep.subr.mxu0 0.0
    %976 = vmatpush2.xpose.msra.mxu0 0.0
    %977 = vmatprep.subr.mxu0 0.0
    %978 = vmatpush2.xpose.msra.mxu0 0.0
    %979 = vmatprep.subr.mxu0 0.0
    %980 = vmatpush2.xpose.msra.mxu0 0.0
    %981 = vmatprep.subr.mxu0 0.0
    %982 = vmatpush2.xpose.msra.mxu0 0.0
    %983 = vmatprep.subr.mxu0 0.0
    %984 = vmatpush2.xpose.msra.mxu0 0.0
    %985 = vmatprep.subr.mxu0 0.0
    %986 = vmatpush2.xpose.msra.mxu0 0.0
    %987 = vmatprep.subr.mxu0 0.0
    %988 = vmatpush2.xpose.msra.mxu0 0.0
    %989 = vmatprep.subr.mxu0 0.0
    %990 = vmatpush2.xpose.msra.mxu0 0.0
    %991 = vmatprep.mubr.f32.mxu0 0.0
    %992 = vmatmul.mubr.f32.gmra.mxu0 %v923
    %v993 = vpop.f32.mrf.mxu0
    %v994 = vadd.f32 %v176, %v993
    %v995 = vpop.f32.mrf.mxu0
    %996 = vdwg.mxu0
    %v997 = vsel %vm336, %v916, -inf
    %998 = vmax.xlane.f32.xlu0 %v997
    %v999 = vpop.xlane.xlu0 %998
    %v1000 = vsel %vm336, %v994, -inf
    %1001 = vmax.xlane.f32.xlu0 %v1000
    %v1002 = vpop.xlane.xlu0 %1001
    %v1003 = vsub.f32 %v916, %v999
    %v1004 = vsub.f32 %v994, %v1002
    %v1005 = vmul.f32 %v1003, 1.442695
    %v1006 = vpow.pop %v1005
    %v1007 = vmul.f32 %v1004, 1.442695
    %v1008 = vpow.pop %v1007
    %v1009 = vsel %vm336, %v1006, 0.0
    %1010 = vadd.xlane.f32.xlu0 %v1009
    %v1011 = vpop.xlane.xlu0 %1010
    %v1012 = vsel %vm336, %v1008, 0.0
    %1013 = vadd.xlane.f32.xlu0 %v1012
    %v1014 = vpop.xlane.xlu0 %1013
    %v1015 = vrcp.pop %v1011
    %v1016 = vmul.f32 %v1006, %v1015
    %v1017 = vrcp.pop %v1014
    %v1018 = vmul.f32 %v1008, %v1017
    %1019 = vrot.lane.b32.xlu0 %v135, 56
    %v1020 = vpop.permute.xlu0 %1019
    %v1023 = vsel %vm336, %v1016, 0
    %1025 = vmatprep.subr.mxu0 0.0
    %1026 = vmatpush1.msra.mxu0 0.0
    %1027 = vmatprep.subr.mxu0 0.0
    %1028 = vmatpush1.msra.mxu0 0.0
    %1029 = vmatprep.subr.mxu0 0.0
    %1030 = vmatpush1.msra.mxu0 0.0
    %1031 = vmatprep.subr.mxu0 0.0
    %1032 = vmatpush1.msra.mxu0 0.0
    %1033 = vmatprep.subr.mxu0 0.0
    %1034 = vmatpush1.msra.mxu0 0.0
    %1035 = vmatprep.subr.mxu0 0.0
    %1036 = vmatpush1.msra.mxu0 0.0
    %1037 = vmatprep.subr.mxu0 0.0
    %1038 = vmatpush1.msra.mxu0 0.0
    %1039 = vmatprep.subr.mxu0 0.0
    %1040 = vmatpush1.msra.mxu0 0.0
    %1041 = vmatprep.subr.mxu0 0.0
    %1042 = vmatpush1.msra.mxu0 0.0
    %1043 = vmatprep.subr.mxu0 0.0
    %1044 = vmatpush1.msra.mxu0 0.0
    %1045 = vmatprep.subr.mxu0 0.0
    %1046 = vmatpush1.msra.mxu0 0.0
    %1047 = vmatprep.subr.mxu0 0.0
    %1048 = vmatpush1.msra.mxu0 0.0
    %1049 = vmatprep.subr.mxu0 0.0
    %1050 = vmatpush1.msra.mxu0 0.0
    %1051 = vmatprep.subr.mxu0 0.0
    %1052 = vmatpush1.msra.mxu0 0.0
    %1053 = vmatprep.subr.mxu0 0.0
    %1054 = vmatpush1.msra.mxu0 0.0
    %1055 = vmatprep.subr.mxu0 0.0
    %1056 = vmatpush1.msra.mxu0 %v1020
    %1057 = vmatprep.subr.mxu0 0.0
    %1058 = vmatpush2.msra.mxu0 0.0
    %1059 = vmatprep.subr.mxu0 0.0
    %1060 = vmatpush2.msra.mxu0 0.0
    %1061 = vmatprep.subr.mxu0 0.0
    %1062 = vmatpush2.msra.mxu0 0.0
    %1063 = vmatprep.subr.mxu0 0.0
    %1064 = vmatpush2.msra.mxu0 0.0
    %1065 = vmatprep.subr.mxu0 0.0
    %1066 = vmatpush2.msra.mxu0 0.0
    %1067 = vmatprep.subr.mxu0 0.0
    %1068 = vmatpush2.msra.mxu0 0.0
    %1069 = vmatprep.subr.mxu0 0.0
    %1070 = vmatpush2.msra.mxu0 0.0
    %1071 = vmatprep.subr.mxu0 0.0
    %1072 = vmatpush2.msra.mxu0 0.0
    %1073 = vmatprep.subr.mxu0 0.0
    %1074 = vmatpush2.msra.mxu0 0.0
    %1075 = vmatprep.subr.mxu0 0.0
    %1076 = vmatpush2.msra.mxu0 0.0
    %1077 = vmatprep.subr.mxu0 0.0
    %1078 = vmatpush2.msra.mxu0 0.0
    %1079 = vmatprep.subr.mxu0 0.0
    %1080 = vmatpush2.msra.mxu0 0.0
    %1081 = vmatprep.subr.mxu0 0.0
    %1082 = vmatpush2.msra.mxu0 0.0
    %1083 = vmatprep.subr.mxu0 0.0
    %1084 = vmatpush2.msra.mxu0 0.0
    %1085 = vmatprep.subr.mxu0 0.0
    %1086 = vmatpush2.msra.mxu0 0.0
    %1087 = vmatprep.subr.mxu0 0.0
    %1088 = vmatpush2.msra.mxu0 0.0
    %1089 = vmatprep.mubr.f32.mxu0 0.0
    %1090 = vmatmul.mubr.f32.gmra.mxu0 %v1023
    %v1091 = vpop.f32.mrf.mxu0
    %v1092 = vadd.f32 0.0, %v1091
    %v1093 = vpop.f32.mrf.mxu0
    %1094 = vdwg.mxu0
    %1095 = vrot.lane.b32.xlu0 %v140, 56
    %v1096 = vpop.permute.xlu0 %1095
    %v1099 = vsel %vm336, %v1018, 0
    %1101 = vmatprep.subr.mxu0 0.0
    %1102 = vmatpush1.msra.mxu0 0.0
    %1103 = vmatprep.subr.mxu0 0.0
    %1104 = vmatpush1.msra.mxu0 0.0
    %1105 = vmatprep.subr.mxu0 0.0
    %1106 = vmatpush1.msra.mxu0 0.0
    %1107 = vmatprep.subr.mxu0 0.0
    %1108 = vmatpush1.msra.mxu0 0.0
    %1109 = vmatprep.subr.mxu0 0.0
    %1110 = vmatpush1.msra.mxu0 0.0
    %1111 = vmatprep.subr.mxu0 0.0
    %1112 = vmatpush1.msra.mxu0 0.0
    %1113 = vmatprep.subr.mxu0 0.0
    %1114 = vmatpush1.msra.mxu0 0.0
    %1115 = vmatprep.subr.mxu0 0.0
    %1116 = vmatpush1.msra.mxu0 0.0
    %1117 = vmatprep.subr.mxu0 0.0
    %1118 = vmatpush1.msra.mxu0 0.0
    %1119 = vmatprep.subr.mxu0 0.0
    %1120 = vmatpush1.msra.mxu0 0.0
    %1121 = vmatprep.subr.mxu0 0.0
    %1122 = vmatpush1.msra.mxu0 0.0
    %1123 = vmatprep.subr.mxu0 0.0
    %1124 = vmatpush1.msra.mxu0 0.0
    %1125 = vmatprep.subr.mxu0 0.0
    %1126 = vmatpush1.msra.mxu0 0.0
    %1127 = vmatprep.subr.mxu0 0.0
    %1128 = vmatpush1.msra.mxu0 0.0
    %1129 = vmatprep.subr.mxu0 0.0
    %1130 = vmatpush1.msra.mxu0 0.0
    %1131 = vmatprep.subr.mxu0 0.0
    %1132 = vmatpush1.msra.mxu0 %v1096
    %1133 = vmatprep.subr.mxu0 0.0
    %1134 = vmatpush2.msra.mxu0 0.0
    %1135 = vmatprep.subr.mxu0 0.0
    %1136 = vmatpush2.msra.mxu0 0.0
    %1137 = vmatprep.subr.mxu0 0.0
    %1138 = vmatpush2.msra.mxu0 0.0
    %1139 = vmatprep.subr.mxu0 0.0
    %1140 = vmatpush2.msra.mxu0 0.0
    %1141 = vmatprep.subr.mxu0 0.0
    %1142 = vmatpush2.msra.mxu0 0.0
    %1143 = vmatprep.subr.mxu0 0.0
    %1144 = vmatpush2.msra.mxu0 0.0
    %1145 = vmatprep.subr.mxu0 0.0
    %1146 = vmatpush2.msra.mxu0 0.0
    %1147 = vmatprep.subr.mxu0 0.0
    %1148 = vmatpush2.msra.mxu0 0.0
    %1149 = vmatprep.subr.mxu0 0.0
    %1150 = vmatpush2.msra.mxu0 0.0
    %1151 = vmatprep.subr.mxu0 0.0
    %1152 = vmatpush2.msra.mxu0 0.0
    %1153 = vmatprep.subr.mxu0 0.0
    %1154 = vmatpush2.msra.mxu0 0.0
    %1155 = vmatprep.subr.mxu0 0.0
    %1156 = vmatpush2.msra.mxu0 0.0
    %1157 = vmatprep.subr.mxu0 0.0
    %1158 = vmatpush2.msra.mxu0 0.0
    %1159 = vmatprep.subr.mxu0 0.0
    %1160 = vmatpush2.msra.mxu0 0.0
    %1161 = vmatprep.subr.mxu0 0.0
    %1162 = vmatpush2.msra.mxu0 0.0
    %1163 = vmatprep.subr.mxu0 0.0
    %1164 = vmatpush2.msra.mxu0 0.0
    %1165 = vmatprep.mubr.f32.mxu0 0.0
    %1166 = vmatmul.mubr.f32.gmra.mxu0 %v1099
    %v1167 = vpop.f32.mrf.mxu0
    %v1168 = vadd.f32 0.0, %v1167
    %v1169 = vpop.f32.mrf.mxu0
    %1170 = vdwg.mxu0
    %1171 = vrot.lane.b32.xlu0 %v167, 116
    %v1172 = vpop.permute.xlu0 %1171
    %1173 = vrot.lane.b32.xlu0 %v135, 84
    %v1174 = vpop.permute.xlu0 %1173
    %v1175 = vsel %vm182, %v1172, 0
    %v1177 = vsel %vm182, %v1174, 0
    %1179 = vmatprep.subr.mxu0 0.0
    %1180 = vmatpush1.xpose.msra.mxu0 0.0
    %1181 = vmatprep.subr.mxu0 0.0
    %1182 = vmatpush1.xpose.msra.mxu0 0.0
    %1183 = vmatprep.subr.mxu0 0.0
    %1184 = vmatpush1.xpose.msra.mxu0 0.0
    %1185 = vmatprep.subr.mxu0 0.0
    %1186 = vmatpush1.xpose.msra.mxu0 0.0
    %1187 = vmatprep.subr.mxu0 0.0
    %1188 = vmatpush1.xpose.msra.mxu0 0.0
    %1189 = vmatprep.subr.mxu0 0.0
    %1190 = vmatpush1.xpose.msra.mxu0 0.0
    %1191 = vmatprep.subr.mxu0 0.0
    %1192 = vmatpush1.xpose.msra.mxu0 0.0
    %1193 = vmatprep.subr.mxu0 0.0
    %1194 = vmatpush1.xpose.msra.mxu0 0.0
    %1195 = vmatprep.subr.mxu0 0.0
    %1196 = vmatpush1.xpose.msra.mxu0 0.0
    %1197 = vmatprep.subr.mxu0 0.0
    %1198 = vmatpush1.xpose.msra.mxu0 0.0
    %1199 = vmatprep.subr.mxu0 0.0
    %1200 = vmatpush1.xpose.msra.mxu0 0.0
    %1201 = vmatprep.subr.mxu0 0.0
    %1202 = vmatpush1.xpose.msra.mxu0 0.0
    %1203 = vmatprep.subr.mxu0 0.0
    %1204 = vmatpush1.xpose.msra.mxu0 0.0
    %1205 = vmatprep.subr.mxu0 0.0
    %1206 = vmatpush1.xpose.msra.mxu0 0.0
    %1207 = vmatprep.subr.mxu0 0.0
    %1208 = vmatpush1.xpose.msra.mxu0 0.0
    %1209 = vmatprep.subr.mxu0 0.0
    %1210 = vmatpush1.xpose.msra.mxu0 %v1177
    %1211 = vmatprep.subr.mxu0 0.0
    %1212 = vmatpush2.xpose.msra.mxu0 0.0
    %1213 = vmatprep.subr.mxu0 0.0
    %1214 = vmatpush2.xpose.msra.mxu0 0.0
    %1215 = vmatprep.subr.mxu0 0.0
    %1216 = vmatpush2.xpose.msra.mxu0 0.0
    %1217 = vmatprep.subr.mxu0 0.0
    %1218 = vmatpush2.xpose.msra.mxu0 0.0
    %1219 = vmatprep.subr.mxu0 0.0
    %1220 = vmatpush2.xpose.msra.mxu0 0.0
    %1221 = vmatprep.subr.mxu0 0.0
    %1222 = vmatpush2.xpose.msra.mxu0 0.0
    %1223 = vmatprep.subr.mxu0 0.0
    %1224 = vmatpush2.xpose.msra.mxu0 0.0
    %1225 = vmatprep.subr.mxu0 0.0
    %1226 = vmatpush2.xpose.msra.mxu0 0.0
    %1227 = vmatprep.subr.mxu0 0.0
    %1228 = vmatpush2.xpose.msra.mxu0 0.0
    %1229 = vmatprep.subr.mxu0 0.0
    %1230 = vmatpush2.xpose.msra.mxu0 0.0
    %1231 = vmatprep.subr.mxu0 0.0
    %1232 = vmatpush2.xpose.msra.mxu0 0.0
    %1233 = vmatprep.subr.mxu0 0.0
    %1234 = vmatpush2.xpose.msra.mxu0 0.0
    %1235 = vmatprep.subr.mxu0 0.0
    %1236 = vmatpush2.xpose.msra.mxu0 0.0
    %1237 = vmatprep.subr.mxu0 0.0
    %1238 = vmatpush2.xpose.msra.mxu0 0.0
    %1239 = vmatprep.subr.mxu0 0.0
    %1240 = vmatpush2.xpose.msra.mxu0 0.0
    %1241 = vmatprep.subr.mxu0 0.0
    %1242 = vmatpush2.xpose.msra.mxu0 0.0
    %1243 = vmatprep.mubr.f32.mxu0 0.0
    %1244 = vmatmul.mubr.f32.gmra.mxu0 %v1175
    %v1245 = vpop.f32.mrf.mxu0
    %v1246 = vadd.f32 %v172, %v1245
    %v1247 = vpop.f32.mrf.mxu0
    %1248 = vdwg.mxu0
    %1249 = vrot.lane.b32.xlu0 %v168, 116
    %v1250 = vpop.permute.xlu0 %1249
    %1251 = vrot.lane.b32.xlu0 %v140, 84
    %v1252 = vpop.permute.xlu0 %1251
    %v1253 = vsel %vm182, %v1250, 0
    %v1255 = vsel %vm182, %v1252, 0
    %1257 = vmatprep.subr.mxu0 0.0
    %1258 = vmatpush1.xpose.msra.mxu0 0.0
    %1259 = vmatprep.subr.mxu0 0.0
    %1260 = vmatpush1.xpose.msra.mxu0 0.0
    %1261 = vmatprep.subr.mxu0 0.0
    %1262 = vmatpush1.xpose.msra.mxu0 0.0
    %1263 = vmatprep.subr.mxu0 0.0
    %1264 = vmatpush1.xpose.msra.mxu0 0.0
    %1265 = vmatprep.subr.mxu0 0.0
    %1266 = vmatpush1.xpose.msra.mxu0 0.0
    %1267 = vmatprep.subr.mxu0 0.0
    %1268 = vmatpush1.xpose.msra.mxu0 0.0
    %1269 = vmatprep.subr.mxu0 0.0
    %1270 = vmatpush1.xpose.msra.mxu0 0.0
    %1271 = vmatprep.subr.mxu0 0.0
    %1272 = vmatpush1.xpose.msra.mxu0 0.0
    %1273 = vmatprep.subr.mxu0 0.0
    %1274 = vmatpush1.xpose.msra.mxu0 0.0
    %1275 = vmatprep.subr.mxu0 0.0
    %1276 = vmatpush1.xpose.msra.mxu0 0.0
    %1277 = vmatprep.subr.mxu0 0.0
    %1278 = vmatpush1.xpose.msra.mxu0 0.0
    %1279 = vmatprep.subr.mxu0 0.0
    %1280 = vmatpush1.xpose.msra.mxu0 0.0
    %1281 = vmatprep.subr.mxu0 0.0
    %1282 = vmatpush1.xpose.msra.mxu0 0.0
    %1283 = vmatprep.subr.mxu0 0.0
    %1284 = vmatpush1.xpose.msra.mxu0 0.0
    %1285 = vmatprep.subr.mxu0 0.0
    %1286 = vmatpush1.xpose.msra.mxu0 0.0
    %1287 = vmatprep.subr.mxu0 0.0
    %1288 = vmatpush1.xpose.msra.mxu0 %v1255
    %1289 = vmatprep.subr.mxu0 0.0
    %1290 = vmatpush2.xpose.msra.mxu0 0.0
    %1291 = vmatprep.subr.mxu0 0.0
    %1292 = vmatpush2.xpose.msra.mxu0 0.0
    %1293 = vmatprep.subr.mxu0 0.0
    %1294 = vmatpush2.xpose.msra.mxu0 0.0
    %1295 = vmatprep.subr.mxu0 0.0
    %1296 = vmatpush2.xpose.msra.mxu0 0.0
    %1297 = vmatprep.subr.mxu0 0.0
    %1298 = vmatpush2.xpose.msra.mxu0 0.0
    %1299 = vmatprep.subr.mxu0 0.0
    %1300 = vmatpush2.xpose.msra.mxu0 0.0
    %1301 = vmatprep.subr.mxu0 0.0
    %1302 = vmatpush2.xpose.msra.mxu0 0.0
    %1303 = vmatprep.subr.mxu0 0.0
    %1304 = vmatpush2.xpose.msra.mxu0 0.0
    %1305 = vmatprep.subr.mxu0 0.0
    %1306 = vmatpush2.xpose.msra.mxu0 0.0
    %1307 = vmatprep.subr.mxu0 0.0
    %1308 = vmatpush2.xpose.msra.mxu0 0.0
    %1309 = vmatprep.subr.mxu0 0.0
    %1310 = vmatpush2.xpose.msra.mxu0 0.0
    %1311 = vmatprep.subr.mxu0 0.0
    %1312 = vmatpush2.xpose.msra.mxu0 0.0
    %1313 = vmatprep.subr.mxu0 0.0
    %1314 = vmatpush2.xpose.msra.mxu0 0.0
    %1315 = vmatprep.subr.mxu0 0.0
    %1316 = vmatpush2.xpose.msra.mxu0 0.0
    %1317 = vmatprep.subr.mxu0 0.0
    %1318 = vmatpush2.xpose.msra.mxu0 0.0
    %1319 = vmatprep.subr.mxu0 0.0
    %1320 = vmatpush2.xpose.msra.mxu0 0.0
    %1321 = vmatprep.mubr.f32.mxu0 0.0
    %1322 = vmatmul.mubr.f32.gmra.mxu0 %v1253
    %v1323 = vpop.f32.mrf.mxu0
    %v1324 = vadd.f32 %v176, %v1323
    %v1325 = vpop.f32.mrf.mxu0
    %1326 = vdwg.mxu0
    %v1327 = vsel %vm336, %v1246, -inf
    %1328 = vmax.xlane.f32.xlu0 %v1327
    %v1329 = vpop.xlane.xlu0 %1328
    %v1330 = vsel %vm336, %v1324, -inf
    %1331 = vmax.xlane.f32.xlu0 %v1330
    %v1332 = vpop.xlane.xlu0 %1331
    %v1333 = vsub.f32 %v1246, %v1329
    %v1334 = vsub.f32 %v1324, %v1332
    %v1335 = vmul.f32 %v1333, 1.442695
    %v1336 = vpow.pop %v1335
    %v1337 = vmul.f32 %v1334, 1.442695
    %v1338 = vpow.pop %v1337
    %v1339 = vsel %vm336, %v1336, 0.0
    %1340 = vadd.xlane.f32.xlu0 %v1339
    %v1341 = vpop.xlane.xlu0 %1340
    %v1342 = vsel %vm336, %v1338, 0.0
    %1343 = vadd.xlane.f32.xlu0 %v1342
    %v1344 = vpop.xlane.xlu0 %1343
    %v1345 = vrcp.pop %v1341
    %v1346 = vmul.f32 %v1336, %v1345
    %v1347 = vrcp.pop %v1344
    %v1348 = vmul.f32 %v1338, %v1347
    %1349 = vrot.lane.b32.xlu0 %v135, 52
    %v1350 = vpop.permute.xlu0 %1349
    %v1353 = vsel %vm336, %v1346, 0
    %1355 = vmatprep.subr.mxu0 0.0
    %1356 = vmatpush1.msra.mxu0 0.0
    %1357 = vmatprep.subr.mxu0 0.0
    %1358 = vmatpush1.msra.mxu0 0.0
    %1359 = vmatprep.subr.mxu0 0.0
    %1360 = vmatpush1.msra.mxu0 0.0
    %1361 = vmatprep.subr.mxu0 0.0
    %1362 = vmatpush1.msra.mxu0 0.0
    %1363 = vmatprep.subr.mxu0 0.0
    %1364 = vmatpush1.msra.mxu0 0.0
    %1365 = vmatprep.subr.mxu0 0.0
    %1366 = vmatpush1.msra.mxu0 0.0
    %1367 = vmatprep.subr.mxu0 0.0
    %1368 = vmatpush1.msra.mxu0 0.0
    %1369 = vmatprep.subr.mxu0 0.0
    %1370 = vmatpush1.msra.mxu0 0.0
    %1371 = vmatprep.subr.mxu0 0.0
    %1372 = vmatpush1.msra.mxu0 0.0
    %1373 = vmatprep.subr.mxu0 0.0
    %1374 = vmatpush1.msra.mxu0 0.0
    %1375 = vmatprep.subr.mxu0 0.0
    %1376 = vmatpush1.msra.mxu0 0.0
    %1377 = vmatprep.subr.mxu0 0.0
    %1378 = vmatpush1.msra.mxu0 0.0
    %1379 = vmatprep.subr.mxu0 0.0
    %1380 = vmatpush1.msra.mxu0 0.0
    %1381 = vmatprep.subr.mxu0 0.0
    %1382 = vmatpush1.msra.mxu0 0.0
    %1383 = vmatprep.subr.mxu0 0.0
    %1384 = vmatpush1.msra.mxu0 0.0
    %1385 = vmatprep.subr.mxu0 0.0
    %1386 = vmatpush1.msra.mxu0 %v1350
    %1387 = vmatprep.subr.mxu0 0.0
    %1388 = vmatpush2.msra.mxu0 0.0
    %1389 = vmatprep.subr.mxu0 0.0
    %1390 = vmatpush2.msra.mxu0 0.0
    %1391 = vmatprep.subr.mxu0 0.0
    %1392 = vmatpush2.msra.mxu0 0.0
    %1393 = vmatprep.subr.mxu0 0.0
    %1394 = vmatpush2.msra.mxu0 0.0
    %1395 = vmatprep.subr.mxu0 0.0
    %1396 = vmatpush2.msra.mxu0 0.0
    %1397 = vmatprep.subr.mxu0 0.0
    %1398 = vmatpush2.msra.mxu0 0.0
    %1399 = vmatprep.subr.mxu0 0.0
    %1400 = vmatpush2.msra.mxu0 0.0
    %1401 = vmatprep.subr.mxu0 0.0
    %1402 = vmatpush2.msra.mxu0 0.0
    %1403 = vmatprep.subr.mxu0 0.0
    %1404 = vmatpush2.msra.mxu0 0.0
    %1405 = vmatprep.subr.mxu0 0.0
    %1406 = vmatpush2.msra.mxu0 0.0
    %1407 = vmatprep.subr.mxu0 0.0
    %1408 = vmatpush2.msra.mxu0 0.0
    %1409 = vmatprep.subr.mxu0 0.0
    %1410 = vmatpush2.msra.mxu0 0.0
    %1411 = vmatprep.subr.mxu0 0.0
    %1412 = vmatpush2.msra.mxu0 0.0
    %1413 = vmatprep.subr.mxu0 0.0
    %1414 = vmatpush2.msra.mxu0 0.0
    %1415 = vmatprep.subr.mxu0 0.0
    %1416 = vmatpush2.msra.mxu0 0.0
    %1417 = vmatprep.subr.mxu0 0.0
    %1418 = vmatpush2.msra.mxu0 0.0
    %1419 = vmatprep.mubr.f32.mxu0 0.0
    %1420 = vmatmul.mubr.f32.gmra.mxu0 %v1353
    %v1421 = vpop.f32.mrf.mxu0
    %v1422 = vadd.f32 0.0, %v1421
    %v1423 = vpop.f32.mrf.mxu0
    %1424 = vdwg.mxu0
    %1425 = vrot.lane.b32.xlu0 %v140, 52
    %v1426 = vpop.permute.xlu0 %1425
    %v1429 = vsel %vm336, %v1348, 0
    %1431 = vmatprep.subr.mxu0 0.0
    %1432 = vmatpush1.msra.mxu0 0.0
    %1433 = vmatprep.subr.mxu0 0.0
    %1434 = vmatpush1.msra.mxu0 0.0
    %1435 = vmatprep.subr.mxu0 0.0
    %1436 = vmatpush1.msra.mxu0 0.0
    %1437 = vmatprep.subr.mxu0 0.0
    %1438 = vmatpush1.msra.mxu0 0.0
    %1439 = vmatprep.subr.mxu0 0.0
    %1440 = vmatpush1.msra.mxu0 0.0
    %1441 = vmatprep.subr.mxu0 0.0
    %1442 = vmatpush1.msra.mxu0 0.0
    %1443 = vmatprep.subr.mxu0 0.0
    %1444 = vmatpush1.msra.mxu0 0.0
    %1445 = vmatprep.subr.mxu0 0.0
    %1446 = vmatpush1.msra.mxu0 0.0
    %1447 = vmatprep.subr.mxu0 0.0
    %1448 = vmatpush1.msra.mxu0 0.0
    %1449 = vmatprep.subr.mxu0 0.0
    %1450 = vmatpush1.msra.mxu0 0.0
    %1451 = vmatprep.subr.mxu0 0.0
    %1452 = vmatpush1.msra.mxu0 0.0
    %1453 = vmatprep.subr.mxu0 0.0
    %1454 = vmatpush1.msra.mxu0 0.0
    %1455 = vmatprep.subr.mxu0 0.0
    %1456 = vmatpush1.msra.mxu0 0.0
    %1457 = vmatprep.subr.mxu0 0.0
    %1458 = vmatpush1.msra.mxu0 0.0
    %1459 = vmatprep.subr.mxu0 0.0
    %1460 = vmatpush1.msra.mxu0 0.0
    %1461 = vmatprep.subr.mxu0 0.0
    %1462 = vmatpush1.msra.mxu0 %v1426
    %1463 = vmatprep.subr.mxu0 0.0
    %1464 = vmatpush2.msra.mxu0 0.0
    %1465 = vmatprep.subr.mxu0 0.0
    %1466 = vmatpush2.msra.mxu0 0.0
    %1467 = vmatprep.subr.mxu0 0.0
    %1468 = vmatpush2.msra.mxu0 0.0
    %1469 = vmatprep.subr.mxu0 0.0
    %1470 = vmatpush2.msra.mxu0 0.0
    %1471 = vmatprep.subr.mxu0 0.0
    %1472 = vmatpush2.msra.mxu0 0.0
    %1473 = vmatprep.subr.mxu0 0.0
    %1474 = vmatpush2.msra.mxu0 0.0
    %1475 = vmatprep.subr.mxu0 0.0
    %1476 = vmatpush2.msra.mxu0 0.0
    %1477 = vmatprep.subr.mxu0 0.0
    %1478 = vmatpush2.msra.mxu0 0.0
    %1479 = vmatprep.subr.mxu0 0.0
    %1480 = vmatpush2.msra.mxu0 0.0
    %1481 = vmatprep.subr.mxu0 0.0
    %1482 = vmatpush2.msra.mxu0 0.0
    %1483 = vmatprep.subr.mxu0 0.0
    %1484 = vmatpush2.msra.mxu0 0.0
    %1485 = vmatprep.subr.mxu0 0.0
    %1486 = vmatpush2.msra.mxu0 0.0
    %1487 = vmatprep.subr.mxu0 0.0
    %1488 = vmatpush2.msra.mxu0 0.0
    %1489 = vmatprep.subr.mxu0 0.0
    %1490 = vmatpush2.msra.mxu0 0.0
    %1491 = vmatprep.subr.mxu0 0.0
    %1492 = vmatpush2.msra.mxu0 0.0
    %1493 = vmatprep.subr.mxu0 0.0
    %1494 = vmatpush2.msra.mxu0 0.0
    %1495 = vmatprep.mubr.f32.mxu0 0.0
    %1496 = vmatmul.mubr.f32.gmra.mxu0 %v1429
    %v1497 = vpop.f32.mrf.mxu0
    %v1498 = vadd.f32 0.0, %v1497
    %v1499 = vpop.f32.mrf.mxu0
    %1500 = vdwg.mxu0
    %1501 = vrot.lane.b32.xlu0 %v167, 112
    %v1502 = vpop.permute.xlu0 %1501
    %1503 = vrot.lane.b32.xlu0 %v135, 80
    %v1504 = vpop.permute.xlu0 %1503
    %v1505 = vsel %vm182, %v1502, 0
    %v1507 = vsel %vm182, %v1504, 0
    %1509 = vmatprep.subr.mxu0 0.0
    %1510 = vmatpush1.xpose.msra.mxu0 0.0
    %1511 = vmatprep.subr.mxu0 0.0
    %1512 = vmatpush1.xpose.msra.mxu0 0.0
    %1513 = vmatprep.subr.mxu0 0.0
    %1514 = vmatpush1.xpose.msra.mxu0 0.0
    %1515 = vmatprep.subr.mxu0 0.0
    %1516 = vmatpush1.xpose.msra.mxu0 0.0
    %1517 = vmatprep.subr.mxu0 0.0
    %1518 = vmatpush1.xpose.msra.mxu0 0.0
    %1519 = vmatprep.subr.mxu0 0.0
    %1520 = vmatpush1.xpose.msra.mxu0 0.0
    %1521 = vmatprep.subr.mxu0 0.0
    %1522 = vmatpush1.xpose.msra.mxu0 0.0
    %1523 = vmatprep.subr.mxu0 0.0
    %1524 = vmatpush1.xpose.msra.mxu0 0.0
    %1525 = vmatprep.subr.mxu0 0.0
    %1526 = vmatpush1.xpose.msra.mxu0 0.0
    %1527 = vmatprep.subr.mxu0 0.0
    %1528 = vmatpush1.xpose.msra.mxu0 0.0
    %1529 = vmatprep.subr.mxu0 0.0
    %1530 = vmatpush1.xpose.msra.mxu0 0.0
    %1531 = vmatprep.subr.mxu0 0.0
    %1532 = vmatpush1.xpose.msra.mxu0 0.0
    %1533 = vmatprep.subr.mxu0 0.0
    %1534 = vmatpush1.xpose.msra.mxu0 0.0
    %1535 = vmatprep.subr.mxu0 0.0
    %1536 = vmatpush1.xpose.msra.mxu0 0.0
    %1537 = vmatprep.subr.mxu0 0.0
    %1538 = vmatpush1.xpose.msra.mxu0 0.0
    %1539 = vmatprep.subr.mxu0 0.0
    %1540 = vmatpush1.xpose.msra.mxu0 %v1507
    %1541 = vmatprep.subr.mxu0 0.0
    %1542 = vmatpush2.xpose.msra.mxu0 0.0
    %1543 = vmatprep.subr.mxu0 0.0
    %1544 = vmatpush2.xpose.msra.mxu0 0.0
    %1545 = vmatprep.subr.mxu0 0.0
    %1546 = vmatpush2.xpose.msra.mxu0 0.0
    %1547 = vmatprep.subr.mxu0 0.0
    %1548 = vmatpush2.xpose.msra.mxu0 0.0
    %1549 = vmatprep.subr.mxu0 0.0
    %1550 = vmatpush2.xpose.msra.mxu0 0.0
    %1551 = vmatprep.subr.mxu0 0.0
    %1552 = vmatpush2.xpose.msra.mxu0 0.0
    %1553 = vmatprep.subr.mxu0 0.0
    %1554 = vmatpush2.xpose.msra.mxu0 0.0
    %1555 = vmatprep.subr.mxu0 0.0
    %1556 = vmatpush2.xpose.msra.mxu0 0.0
    %1557 = vmatprep.subr.mxu0 0.0
    %1558 = vmatpush2.xpose.msra.mxu0 0.0
    %1559 = vmatprep.subr.mxu0 0.0
    %1560 = vmatpush2.xpose.msra.mxu0 0.0
    %1561 = vmatprep.subr.mxu0 0.0
    %1562 = vmatpush2.xpose.msra.mxu0 0.0
    %1563 = vmatprep.subr.mxu0 0.0
    %1564 = vmatpush2.xpose.msra.mxu0 0.0
    %1565 = vmatprep.subr.mxu0 0.0
    %1566 = vmatpush2.xpose.msra.mxu0 0.0
    %1567 = vmatprep.subr.mxu0 0.0
    %1568 = vmatpush2.xpose.msra.mxu0 0.0
    %1569 = vmatprep.subr.mxu0 0.0
    %1570 = vmatpush2.xpose.msra.mxu0 0.0
    %1571 = vmatprep.subr.mxu0 0.0
    %1572 = vmatpush2.xpose.msra.mxu0 0.0
    %1573 = vmatprep.mubr.f32.mxu0 0.0
    %1574 = vmatmul.mubr.f32.gmra.mxu0 %v1505
    %v1575 = vpop.f32.mrf.mxu0
    %v1576 = vadd.f32 %v172, %v1575
    %v1577 = vpop.f32.mrf.mxu0
    %1578 = vdwg.mxu0
    %1579 = vrot.lane.b32.xlu0 %v168, 112
    %v1580 = vpop.permute.xlu0 %1579
    %1581 = vrot.lane.b32.xlu0 %v140, 80
    %v1582 = vpop.permute.xlu0 %1581
    %v1583 = vsel %vm182, %v1580, 0
    %v1585 = vsel %vm182, %v1582, 0
    %1587 = vmatprep.subr.mxu0 0.0
    %1588 = vmatpush1.xpose.msra.mxu0 0.0
    %1589 = vmatprep.subr.mxu0 0.0
    %1590 = vmatpush1.xpose.msra.mxu0 0.0
    %1591 = vmatprep.subr.mxu0 0.0
    %1592 = vmatpush1.xpose.msra.mxu0 0.0
    %1593 = vmatprep.subr.mxu0 0.0
    %1594 = vmatpush1.xpose.msra.mxu0 0.0
    %1595 = vmatprep.subr.mxu0 0.0
    %1596 = vmatpush1.xpose.msra.mxu0 0.0
    %1597 = vmatprep.subr.mxu0 0.0
    %1598 = vmatpush1.xpose.msra.mxu0 0.0
    %1599 = vmatprep.subr.mxu0 0.0
    %1600 = vmatpush1.xpose.msra.mxu0 0.0
    %1601 = vmatprep.subr.mxu0 0.0
    %1602 = vmatpush1.xpose.msra.mxu0 0.0
    %1603 = vmatprep.subr.mxu0 0.0
    %1604 = vmatpush1.xpose.msra.mxu0 0.0
    %1605 = vmatprep.subr.mxu0 0.0
    %1606 = vmatpush1.xpose.msra.mxu0 0.0
    %1607 = vmatprep.subr.mxu0 0.0
    %1608 = vmatpush1.xpose.msra.mxu0 0.0
    %1609 = vmatprep.subr.mxu0 0.0
    %1610 = vmatpush1.xpose.msra.mxu0 0.0
    %1611 = vmatprep.subr.mxu0 0.0
    %1612 = vmatpush1.xpose.msra.mxu0 0.0
    %1613 = vmatprep.subr.mxu0 0.0
    %1614 = vmatpush1.xpose.msra.mxu0 0.0
    %1615 = vmatprep.subr.mxu0 0.0
    %1616 = vmatpush1.xpose.msra.mxu0 0.0
    %1617 = vmatprep.subr.mxu0 0.0
    %1618 = vmatpush1.xpose.msra.mxu0 %v1585
    %1619 = vmatprep.subr.mxu0 0.0
    %1620 = vmatpush2.xpose.msra.mxu0 0.0
    %1621 = vmatprep.subr.mxu0 0.0
    %1622 = vmatpush2.xpose.msra.mxu0 0.0
    %1623 = vmatprep.subr.mxu0 0.0
    %1624 = vmatpush2.xpose.msra.mxu0 0.0
    %1625 = vmatprep.subr.mxu0 0.0
    %1626 = vmatpush2.xpose.msra.mxu0 0.0
    %1627 = vmatprep.subr.mxu0 0.0
    %1628 = vmatpush2.xpose.msra.mxu0 0.0
    %1629 = vmatprep.subr.mxu0 0.0
    %1630 = vmatpush2.xpose.msra.mxu0 0.0
    %1631 = vmatprep.subr.mxu0 0.0
    %1632 = vmatpush2.xpose.msra.mxu0 0.0
    %1633 = vmatprep.subr.mxu0 0.0
    %1634 = vmatpush2.xpose.msra.mxu0 0.0
    %1635 = vmatprep.subr.mxu0 0.0
    %1636 = vmatpush2.xpose.msra.mxu0 0.0
    %1637 = vmatprep.subr.mxu0 0.0
    %1638 = vmatpush2.xpose.msra.mxu0 0.0
    %1639 = vmatprep.subr.mxu0 0.0
    %1640 = vmatpush2.xpose.msra.mxu0 0.0
    %1641 = vmatprep.subr.mxu0 0.0
    %1642 = vmatpush2.xpose.msra.mxu0 0.0
    %1643 = vmatprep.subr.mxu0 0.0
    %1644 = vmatpush2.xpose.msra.mxu0 0.0
    %1645 = vmatprep.subr.mxu0 0.0
    %1646 = vmatpush2.xpose.msra.mxu0 0.0
    %1647 = vmatprep.subr.mxu0 0.0
    %1648 = vmatpush2.xpose.msra.mxu0 0.0
    %1649 = vmatprep.subr.mxu0 0.0
    %1650 = vmatpush2.xpose.msra.mxu0 0.0
    %1651 = vmatprep.mubr.f32.mxu0 0.0
    %1652 = vmatmul.mubr.f32.gmra.mxu0 %v1583
    %v1653 = vpop.f32.mrf.mxu0
    %v1654 = vadd.f32 %v176, %v1653
    %v1655 = vpop.f32.mrf.mxu0
    %1656 = vdwg.mxu0
    %v1657 = vsel %vm336, %v1576, -inf
    %1658 = vmax.xlane.f32.xlu0 %v1657
    %v1659 = vpop.xlane.xlu0 %1658
    %v1660 = vsel %vm336, %v1654, -inf
    %1661 = vmax.xlane.f32.xlu0 %v1660
    %v1662 = vpop.xlane.xlu0 %1661
    %v1663 = vsub.f32 %v1576, %v1659
    %v1664 = vsub.f32 %v1654, %v1662
    %v1665 = vmul.f32 %v1663, 1.442695
    %v1666 = vpow.pop %v1665
    %v1667 = vmul.f32 %v1664, 1.442695
    %v1668 = vpow.pop %v1667
    %v1669 = vsel %vm336, %v1666, 0.0
    %1670 = vadd.xlane.f32.xlu0 %v1669
    %v1671 = vpop.xlane.xlu0 %1670
    %v1672 = vsel %vm336, %v1668, 0.0
    %1673 = vadd.xlane.f32.xlu0 %v1672
    %v1674 = vpop.xlane.xlu0 %1673
    %v1675 = vrcp.pop %v1671
    %v1676 = vmul.f32 %v1666, %v1675
    %v1677 = vrcp.pop %v1674
    %v1678 = vmul.f32 %v1668, %v1677
    %1679 = vrot.lane.b32.xlu0 %v135, 48
    %v1680 = vpop.permute.xlu0 %1679
    %v1683 = vsel %vm336, %v1676, 0
    %1685 = vmatprep.subr.mxu0 0.0
    %1686 = vmatpush1.msra.mxu0 0.0
    %1687 = vmatprep.subr.mxu0 0.0
    %1688 = vmatpush1.msra.mxu0 0.0
    %1689 = vmatprep.subr.mxu0 0.0
    %1690 = vmatpush1.msra.mxu0 0.0
    %1691 = vmatprep.subr.mxu0 0.0
    %1692 = vmatpush1.msra.mxu0 0.0
    %1693 = vmatprep.subr.mxu0 0.0
    %1694 = vmatpush1.msra.mxu0 0.0
    %1695 = vmatprep.subr.mxu0 0.0
    %1696 = vmatpush1.msra.mxu0 0.0
    %1697 = vmatprep.subr.mxu0 0.0
    %1698 = vmatpush1.msra.mxu0 0.0
    %1699 = vmatprep.subr.mxu0 0.0
    %1700 = vmatpush1.msra.mxu0 0.0
    %1701 = vmatprep.subr.mxu0 0.0
    %1702 = vmatpush1.msra.mxu0 0.0
    %1703 = vmatprep.subr.mxu0 0.0
    %1704 = vmatpush1.msra.mxu0 0.0
    %1705 = vmatprep.subr.mxu0 0.0
    %1706 = vmatpush1.msra.mxu0 0.0
    %1707 = vmatprep.subr.mxu0 0.0
    %1708 = vmatpush1.msra.mxu0 0.0
    %1709 = vmatprep.subr.mxu0 0.0
    %1710 = vmatpush1.msra.mxu0 0.0
    %1711 = vmatprep.subr.mxu0 0.0
    %1712 = vmatpush1.msra.mxu0 0.0
    %1713 = vmatprep.subr.mxu0 0.0
    %1714 = vmatpush1.msra.mxu0 0.0
    %1715 = vmatprep.subr.mxu0 0.0
    %1716 = vmatpush1.msra.mxu0 %v1680
    %1717 = vmatprep.subr.mxu0 0.0
    %1718 = vmatpush2.msra.mxu0 0.0
    %1719 = vmatprep.subr.mxu0 0.0
    %1720 = vmatpush2.msra.mxu0 0.0
    %1721 = vmatprep.subr.mxu0 0.0
    %1722 = vmatpush2.msra.mxu0 0.0
    %1723 = vmatprep.subr.mxu0 0.0
    %1724 = vmatpush2.msra.mxu0 0.0
    %1725 = vmatprep.subr.mxu0 0.0
    %1726 = vmatpush2.msra.mxu0 0.0
    %1727 = vmatprep.subr.mxu0 0.0
    %1728 = vmatpush2.msra.mxu0 0.0
    %1729 = vmatprep.subr.mxu0 0.0
    %1730 = vmatpush2.msra.mxu0 0.0
    %1731 = vmatprep.subr.mxu0 0.0
    %1732 = vmatpush2.msra.mxu0 0.0
    %1733 = vmatprep.subr.mxu0 0.0
    %1734 = vmatpush2.msra.mxu0 0.0
    %1735 = vmatprep.subr.mxu0 0.0
    %1736 = vmatpush2.msra.mxu0 0.0
    %1737 = vmatprep.subr.mxu0 0.0
    %1738 = vmatpush2.msra.mxu0 0.0
    %1739 = vmatprep.subr.mxu0 0.0
    %1740 = vmatpush2.msra.mxu0 0.0
    %1741 = vmatprep.subr.mxu0 0.0
    %1742 = vmatpush2.msra.mxu0 0.0
    %1743 = vmatprep.subr.mxu0 0.0
    %1744 = vmatpush2.msra.mxu0 0.0
    %1745 = vmatprep.subr.mxu0 0.0
    %1746 = vmatpush2.msra.mxu0 0.0
    %1747 = vmatprep.subr.mxu0 0.0
    %1748 = vmatpush2.msra.mxu0 0.0
    %1749 = vmatprep.mubr.f32.mxu0 0.0
    %1750 = vmatmul.mubr.f32.gmra.mxu0 %v1683
    %v1751 = vpop.f32.mrf.mxu0
    %v1752 = vadd.f32 0.0, %v1751
    %v1753 = vpop.f32.mrf.mxu0
    %1754 = vdwg.mxu0
    %1755 = vrot.lane.b32.xlu0 %v140, 48
    %v1756 = vpop.permute.xlu0 %1755
    %v1759 = vsel %vm336, %v1678, 0
    %1761 = vmatprep.subr.mxu0 0.0
    %1762 = vmatpush1.msra.mxu0 0.0
    %1763 = vmatprep.subr.mxu0 0.0
    %1764 = vmatpush1.msra.mxu0 0.0
    %1765 = vmatprep.subr.mxu0 0.0
    %1766 = vmatpush1.msra.mxu0 0.0
    %1767 = vmatprep.subr.mxu0 0.0
    %1768 = vmatpush1.msra.mxu0 0.0
    %1769 = vmatprep.subr.mxu0 0.0
    %1770 = vmatpush1.msra.mxu0 0.0
    %1771 = vmatprep.subr.mxu0 0.0
    %1772 = vmatpush1.msra.mxu0 0.0
    %1773 = vmatprep.subr.mxu0 0.0
    %1774 = vmatpush1.msra.mxu0 0.0
    %1775 = vmatprep.subr.mxu0 0.0
    %1776 = vmatpush1.msra.mxu0 0.0
    %1777 = vmatprep.subr.mxu0 0.0
    %1778 = vmatpush1.msra.mxu0 0.0
    %1779 = vmatprep.subr.mxu0 0.0
    %1780 = vmatpush1.msra.mxu0 0.0
    %1781 = vmatprep.subr.mxu0 0.0
    %1782 = vmatpush1.msra.mxu0 0.0
    %1783 = vmatprep.subr.mxu0 0.0
    %1784 = vmatpush1.msra.mxu0 0.0
    %1785 = vmatprep.subr.mxu0 0.0
    %1786 = vmatpush1.msra.mxu0 0.0
    %1787 = vmatprep.subr.mxu0 0.0
    %1788 = vmatpush1.msra.mxu0 0.0
    %1789 = vmatprep.subr.mxu0 0.0
    %1790 = vmatpush1.msra.mxu0 0.0
    %1791 = vmatprep.subr.mxu0 0.0
    %1792 = vmatpush1.msra.mxu0 %v1756
    %1793 = vmatprep.subr.mxu0 0.0
    %1794 = vmatpush2.msra.mxu0 0.0
    %1795 = vmatprep.subr.mxu0 0.0
    %1796 = vmatpush2.msra.mxu0 0.0
    %1797 = vmatprep.subr.mxu0 0.0
    %1798 = vmatpush2.msra.mxu0 0.0
    %1799 = vmatprep.subr.mxu0 0.0
    %1800 = vmatpush2.msra.mxu0 0.0
    %1801 = vmatprep.subr.mxu0 0.0
    %1802 = vmatpush2.msra.mxu0 0.0
    %1803 = vmatprep.subr.mxu0 0.0
    %1804 = vmatpush2.msra.mxu0 0.0
    %1805 = vmatprep.subr.mxu0 0.0
    %1806 = vmatpush2.msra.mxu0 0.0
    %1807 = vmatprep.subr.mxu0 0.0
    %1808 = vmatpush2.msra.mxu0 0.0
    %1809 = vmatprep.subr.mxu0 0.0
    %1810 = vmatpush2.msra.mxu0 0.0
    %1811 = vmatprep.subr.mxu0 0.0
    %1812 = vmatpush2.msra.mxu0 0.0
    %1813 = vmatprep.subr.mxu0 0.0
    %1814 = vmatpush2.msra.mxu0 0.0
    %1815 = vmatprep.subr.mxu0 0.0
    %1816 = vmatpush2.msra.mxu0 0.0
    %1817 = vmatprep.subr.mxu0 0.0
    %1818 = vmatpush2.msra.mxu0 0.0
    %1819 = vmatprep.subr.mxu0 0.0
    %1820 = vmatpush2.msra.mxu0 0.0
    %1821 = vmatprep.subr.mxu0 0.0
    %1822 = vmatpush2.msra.mxu0 0.0
    %1823 = vmatprep.subr.mxu0 0.0
    %1824 = vmatpush2.msra.mxu0 0.0
    %1825 = vmatprep.mubr.f32.mxu0 0.0
    %1826 = vmatmul.mubr.f32.gmra.mxu0 %v1759
    %v1827 = vpop.f32.mrf.mxu0
    %v1828 = vadd.f32 0.0, %v1827
    %v1829 = vpop.f32.mrf.mxu0
    %1830 = vdwg.mxu0
    %1831 = vrot.lane.b32.xlu0 %v167, 108
    %v1832 = vpop.permute.xlu0 %1831
    %1833 = vrot.lane.b32.xlu0 %v135, 76
    %v1834 = vpop.permute.xlu0 %1833
    %v1835 = vsel %vm182, %v1832, 0
    %v1837 = vsel %vm182, %v1834, 0
    %1839 = vmatprep.subr.mxu0 0.0
    %1840 = vmatpush1.xpose.msra.mxu0 0.0
    %1841 = vmatprep.subr.mxu0 0.0
    %1842 = vmatpush1.xpose.msra.mxu0 0.0
    %1843 = vmatprep.subr.mxu0 0.0
    %1844 = vmatpush1.xpose.msra.mxu0 0.0
    %1845 = vmatprep.subr.mxu0 0.0
    %1846 = vmatpush1.xpose.msra.mxu0 0.0
    %1847 = vmatprep.subr.mxu0 0.0
    %1848 = vmatpush1.xpose.msra.mxu0 0.0
    %1849 = vmatprep.subr.mxu0 0.0
    %1850 = vmatpush1.xpose.msra.mxu0 0.0
    %1851 = vmatprep.subr.mxu0 0.0
    %1852 = vmatpush1.xpose.msra.mxu0 0.0
    %1853 = vmatprep.subr.mxu0 0.0
    %1854 = vmatpush1.xpose.msra.mxu0 0.0
    %1855 = vmatprep.subr.mxu0 0.0
    %1856 = vmatpush1.xpose.msra.mxu0 0.0
    %1857 = vmatprep.subr.mxu0 0.0
    %1858 = vmatpush1.xpose.msra.mxu0 0.0
    %1859 = vmatprep.subr.mxu0 0.0
    %1860 = vmatpush1.xpose.msra.mxu0 0.0
    %1861 = vmatprep.subr.mxu0 0.0
    %1862 = vmatpush1.xpose.msra.mxu0 0.0
    %1863 = vmatprep.subr.mxu0 0.0
    %1864 = vmatpush1.xpose.msra.mxu0 0.0
    %1865 = vmatprep.subr.mxu0 0.0
    %1866 = vmatpush1.xpose.msra.mxu0 0.0
    %1867 = vmatprep.subr.mxu0 0.0
    %1868 = vmatpush1.xpose.msra.mxu0 0.0
    %1869 = vmatprep.subr.mxu0 0.0
    %1870 = vmatpush1.xpose.msra.mxu0 %v1837
    %1871 = vmatprep.subr.mxu0 0.0
    %1872 = vmatpush2.xpose.msra.mxu0 0.0
    %1873 = vmatprep.subr.mxu0 0.0
    %1874 = vmatpush2.xpose.msra.mxu0 0.0
    %1875 = vmatprep.subr.mxu0 0.0
    %1876 = vmatpush2.xpose.msra.mxu0 0.0
    %1877 = vmatprep.subr.mxu0 0.0
    %1878 = vmatpush2.xpose.msra.mxu0 0.0
    %1879 = vmatprep.subr.mxu0 0.0
    %1880 = vmatpush2.xpose.msra.mxu0 0.0
    %1881 = vmatprep.subr.mxu0 0.0
    %1882 = vmatpush2.xpose.msra.mxu0 0.0
    %1883 = vmatprep.subr.mxu0 0.0
    %1884 = vmatpush2.xpose.msra.mxu0 0.0
    %1885 = vmatprep.subr.mxu0 0.0
    %1886 = vmatpush2.xpose.msra.mxu0 0.0
    %1887 = vmatprep.subr.mxu0 0.0
    %1888 = vmatpush2.xpose.msra.mxu0 0.0
    %1889 = vmatprep.subr.mxu0 0.0
    %1890 = vmatpush2.xpose.msra.mxu0 0.0
    %1891 = vmatprep.subr.mxu0 0.0
    %1892 = vmatpush2.xpose.msra.mxu0 0.0
    %1893 = vmatprep.subr.mxu0 0.0
    %1894 = vmatpush2.xpose.msra.mxu0 0.0
    %1895 = vmatprep.subr.mxu0 0.0
    %1896 = vmatpush2.xpose.msra.mxu0 0.0
    %1897 = vmatprep.subr.mxu0 0.0
    %1898 = vmatpush2.xpose.msra.mxu0 0.0
    %1899 = vmatprep.subr.mxu0 0.0
    %1900 = vmatpush2.xpose.msra.mxu0 0.0
    %1901 = vmatprep.subr.mxu0 0.0
    %1902 = vmatpush2.xpose.msra.mxu0 0.0
    %1903 = vmatprep.mubr.f32.mxu0 0.0
    %1904 = vmatmul.mubr.f32.gmra.mxu0 %v1835
    %v1905 = vpop.f32.mrf.mxu0
    %v1906 = vadd.f32 %v172, %v1905
    %v1907 = vpop.f32.mrf.mxu0
    %1908 = vdwg.mxu0
    %1909 = vrot.lane.b32.xlu0 %v168, 108
    %v1910 = vpop.permute.xlu0 %1909
    %1911 = vrot.lane.b32.xlu0 %v140, 76
    %v1912 = vpop.permute.xlu0 %1911
    %v1913 = vsel %vm182, %v1910, 0
    %v1915 = vsel %vm182, %v1912, 0
    %1917 = vmatprep.subr.mxu0 0.0
    %1918 = vmatpush1.xpose.msra.mxu0 0.0
    %1919 = vmatprep.subr.mxu0 0.0
    %1920 = vmatpush1.xpose.msra.mxu0 0.0
    %1921 = vmatprep.subr.mxu0 0.0
    %1922 = vmatpush1.xpose.msra.mxu0 0.0
    %1923 = vmatprep.subr.mxu0 0.0
    %1924 = vmatpush1.xpose.msra.mxu0 0.0
    %1925 = vmatprep.subr.mxu0 0.0
    %1926 = vmatpush1.xpose.msra.mxu0 0.0
    %1927 = vmatprep.subr.mxu0 0.0
    %1928 = vmatpush1.xpose.msra.mxu0 0.0
    %1929 = vmatprep.subr.mxu0 0.0
    %1930 = vmatpush1.xpose.msra.mxu0 0.0
    %1931 = vmatprep.subr.mxu0 0.0
    %1932 = vmatpush1.xpose.msra.mxu0 0.0
    %1933 = vmatprep.subr.mxu0 0.0
    %1934 = vmatpush1.xpose.msra.mxu0 0.0
    %1935 = vmatprep.subr.mxu0 0.0
    %1936 = vmatpush1.xpose.msra.mxu0 0.0
    %1937 = vmatprep.subr.mxu0 0.0
    %1938 = vmatpush1.xpose.msra.mxu0 0.0
    %1939 = vmatprep.subr.mxu0 0.0
    %1940 = vmatpush1.xpose.msra.mxu0 0.0
    %1941 = vmatprep.subr.mxu0 0.0
    %1942 = vmatpush1.xpose.msra.mxu0 0.0
    %1943 = vmatprep.subr.mxu0 0.0
    %1944 = vmatpush1.xpose.msra.mxu0 0.0
    %1945 = vmatprep.subr.mxu0 0.0
    %1946 = vmatpush1.xpose.msra.mxu0 0.0
    %1947 = vmatprep.subr.mxu0 0.0
    %1948 = vmatpush1.xpose.msra.mxu0 %v1915
    %1949 = vmatprep.subr.mxu0 0.0
    %1950 = vmatpush2.xpose.msra.mxu0 0.0
    %1951 = vmatprep.subr.mxu0 0.0
    %1952 = vmatpush2.xpose.msra.mxu0 0.0
    %1953 = vmatprep.subr.mxu0 0.0
    %1954 = vmatpush2.xpose.msra.mxu0 0.0
    %1955 = vmatprep.subr.mxu0 0.0
    %1956 = vmatpush2.xpose.msra.mxu0 0.0
    %1957 = vmatprep.subr.mxu0 0.0
    %1958 = vmatpush2.xpose.msra.mxu0 0.0
    %1959 = vmatprep.subr.mxu0 0.0
    %1960 = vmatpush2.xpose.msra.mxu0 0.0
    %1961 = vmatprep.subr.mxu0 0.0
    %1962 = vmatpush2.xpose.msra.mxu0 0.0
    %1963 = vmatprep.subr.mxu0 0.0
    %1964 = vmatpush2.xpose.msra.mxu0 0.0
    %1965 = vmatprep.subr.mxu0 0.0
    %1966 = vmatpush2.xpose.msra.mxu0 0.0
    %1967 = vmatprep.subr.mxu0 0.0
    %1968 = vmatpush2.xpose.msra.mxu0 0.0
    %1969 = vmatprep.subr.mxu0 0.0
    %1970 = vmatpush2.xpose.msra.mxu0 0.0
    %1971 = vmatprep.subr.mxu0 0.0
    %1972 = vmatpush2.xpose.msra.mxu0 0.0
    %1973 = vmatprep.subr.mxu0 0.0
    %1974 = vmatpush2.xpose.msra.mxu0 0.0
    %1975 = vmatprep.subr.mxu0 0.0
    %1976 = vmatpush2.xpose.msra.mxu0 0.0
    %1977 = vmatprep.subr.mxu0 0.0
    %1978 = vmatpush2.xpose.msra.mxu0 0.0
    %1979 = vmatprep.subr.mxu0 0.0
    %1980 = vmatpush2.xpose.msra.mxu0 0.0
    %1981 = vmatprep.mubr.f32.mxu0 0.0
    %1982 = vmatmul.mubr.f32.gmra.mxu0 %v1913
    %v1983 = vpop.f32.mrf.mxu0
    %v1984 = vadd.f32 %v176, %v1983
    %v1985 = vpop.f32.mrf.mxu0
    %1986 = vdwg.mxu0
    %v1987 = vsel %vm336, %v1906, -inf
    %1988 = vmax.xlane.f32.xlu0 %v1987
    %v1989 = vpop.xlane.xlu0 %1988
    %v1990 = vsel %vm336, %v1984, -inf
    %1991 = vmax.xlane.f32.xlu0 %v1990
    %v1992 = vpop.xlane.xlu0 %1991
    %v1993 = vsub.f32 %v1906, %v1989
    %v1994 = vsub.f32 %v1984, %v1992
    %v1995 = vmul.f32 %v1993, 1.442695
    %v1996 = vpow.pop %v1995
    %v1997 = vmul.f32 %v1994, 1.442695
    %v1998 = vpow.pop %v1997
    %v1999 = vsel %vm336, %v1996, 0.0
    %2000 = vadd.xlane.f32.xlu0 %v1999
    %v2001 = vpop.xlane.xlu0 %2000
    %v2002 = vsel %vm336, %v1998, 0.0
    %2003 = vadd.xlane.f32.xlu0 %v2002
    %v2004 = vpop.xlane.xlu0 %2003
    %v2005 = vrcp.pop %v2001
    %v2006 = vmul.f32 %v1996, %v2005
    %v2007 = vrcp.pop %v2004
    %v2008 = vmul.f32 %v1998, %v2007
    %2009 = vrot.lane.b32.xlu0 %v135, 44
    %v2010 = vpop.permute.xlu0 %2009
    %v2013 = vsel %vm336, %v2006, 0
    %2015 = vmatprep.subr.mxu0 0.0
    %2016 = vmatpush1.msra.mxu0 0.0
    %2017 = vmatprep.subr.mxu0 0.0
    %2018 = vmatpush1.msra.mxu0 0.0
    %2019 = vmatprep.subr.mxu0 0.0
    %2020 = vmatpush1.msra.mxu0 0.0
    %2021 = vmatprep.subr.mxu0 0.0
    %2022 = vmatpush1.msra.mxu0 0.0
    %2023 = vmatprep.subr.mxu0 0.0
    %2024 = vmatpush1.msra.mxu0 0.0
    %2025 = vmatprep.subr.mxu0 0.0
    %2026 = vmatpush1.msra.mxu0 0.0
    %2027 = vmatprep.subr.mxu0 0.0
    %2028 = vmatpush1.msra.mxu0 0.0
    %2029 = vmatprep.subr.mxu0 0.0
    %2030 = vmatpush1.msra.mxu0 0.0
    %2031 = vmatprep.subr.mxu0 0.0
    %2032 = vmatpush1.msra.mxu0 0.0
    %2033 = vmatprep.subr.mxu0 0.0
    %2034 = vmatpush1.msra.mxu0 0.0
    %2035 = vmatprep.subr.mxu0 0.0
    %2036 = vmatpush1.msra.mxu0 0.0
    %2037 = vmatprep.subr.mxu0 0.0
    %2038 = vmatpush1.msra.mxu0 0.0
    %2039 = vmatprep.subr.mxu0 0.0
    %2040 = vmatpush1.msra.mxu0 0.0
    %2041 = vmatprep.subr.mxu0 0.0
    %2042 = vmatpush1.msra.mxu0 0.0
    %2043 = vmatprep.subr.mxu0 0.0
    %2044 = vmatpush1.msra.mxu0 0.0
    %2045 = vmatprep.subr.mxu0 0.0
    %2046 = vmatpush1.msra.mxu0 %v2010
    %2047 = vmatprep.subr.mxu0 0.0
    %2048 = vmatpush2.msra.mxu0 0.0
    %2049 = vmatprep.subr.mxu0 0.0
    %2050 = vmatpush2.msra.mxu0 0.0
    %2051 = vmatprep.subr.mxu0 0.0
    %2052 = vmatpush2.msra.mxu0 0.0
    %2053 = vmatprep.subr.mxu0 0.0
    %2054 = vmatpush2.msra.mxu0 0.0
    %2055 = vmatprep.subr.mxu0 0.0
    %2056 = vmatpush2.msra.mxu0 0.0
    %2057 = vmatprep.subr.mxu0 0.0
    %2058 = vmatpush2.msra.mxu0 0.0
    %2059 = vmatprep.subr.mxu0 0.0
    %2060 = vmatpush2.msra.mxu0 0.0
    %2061 = vmatprep.subr.mxu0 0.0
    %2062 = vmatpush2.msra.mxu0 0.0
    %2063 = vmatprep.subr.mxu0 0.0
    %2064 = vmatpush2.msra.mxu0 0.0
    %2065 = vmatprep.subr.mxu0 0.0
    %2066 = vmatpush2.msra.mxu0 0.0
    %2067 = vmatprep.subr.mxu0 0.0
    %2068 = vmatpush2.msra.mxu0 0.0
    %2069 = vmatprep.subr.mxu0 0.0
    %2070 = vmatpush2.msra.mxu0 0.0
    %2071 = vmatprep.subr.mxu0 0.0
    %2072 = vmatpush2.msra.mxu0 0.0
    %2073 = vmatprep.subr.mxu0 0.0
    %2074 = vmatpush2.msra.mxu0 0.0
    %2075 = vmatprep.subr.mxu0 0.0
    %2076 = vmatpush2.msra.mxu0 0.0
    %2077 = vmatprep.subr.mxu0 0.0
    %2078 = vmatpush2.msra.mxu0 0.0
    %2079 = vmatprep.mubr.f32.mxu0 0.0
    %2080 = vmatmul.mubr.f32.gmra.mxu0 %v2013
    %v2081 = vpop.f32.mrf.mxu0
    %v2082 = vadd.f32 0.0, %v2081
    %v2083 = vpop.f32.mrf.mxu0
    %2084 = vdwg.mxu0
    %2085 = vrot.lane.b32.xlu0 %v140, 44
    %v2086 = vpop.permute.xlu0 %2085
    %v2089 = vsel %vm336, %v2008, 0
    %2091 = vmatprep.subr.mxu0 0.0
    %2092 = vmatpush1.msra.mxu0 0.0
    %2093 = vmatprep.subr.mxu0 0.0
    %2094 = vmatpush1.msra.mxu0 0.0
    %2095 = vmatprep.subr.mxu0 0.0
    %2096 = vmatpush1.msra.mxu0 0.0
    %2097 = vmatprep.subr.mxu0 0.0
    %2098 = vmatpush1.msra.mxu0 0.0
    %2099 = vmatprep.subr.mxu0 0.0
    %2100 = vmatpush1.msra.mxu0 0.0
    %2101 = vmatprep.subr.mxu0 0.0
    %2102 = vmatpush1.msra.mxu0 0.0
    %2103 = vmatprep.subr.mxu0 0.0
    %2104 = vmatpush1.msra.mxu0 0.0
    %2105 = vmatprep.subr.mxu0 0.0
    %2106 = vmatpush1.msra.mxu0 0.0
    %2107 = vmatprep.subr.mxu0 0.0
    %2108 = vmatpush1.msra.mxu0 0.0
    %2109 = vmatprep.subr.mxu0 0.0
    %2110 = vmatpush1.msra.mxu0 0.0
    %2111 = vmatprep.subr.mxu0 0.0
    %2112 = vmatpush1.msra.mxu0 0.0
    %2113 = vmatprep.subr.mxu0 0.0
    %2114 = vmatpush1.msra.mxu0 0.0
    %2115 = vmatprep.subr.mxu0 0.0
    %2116 = vmatpush1.msra.mxu0 0.0
    %2117 = vmatprep.subr.mxu0 0.0
    %2118 = vmatpush1.msra.mxu0 0.0
    %2119 = vmatprep.subr.mxu0 0.0
    %2120 = vmatpush1.msra.mxu0 0.0
    %2121 = vmatprep.subr.mxu0 0.0
    %2122 = vmatpush1.msra.mxu0 %v2086
    %2123 = vmatprep.subr.mxu0 0.0
    %2124 = vmatpush2.msra.mxu0 0.0
    %2125 = vmatprep.subr.mxu0 0.0
    %2126 = vmatpush2.msra.mxu0 0.0
    %2127 = vmatprep.subr.mxu0 0.0
    %2128 = vmatpush2.msra.mxu0 0.0
    %2129 = vmatprep.subr.mxu0 0.0
    %2130 = vmatpush2.msra.mxu0 0.0
    %2131 = vmatprep.subr.mxu0 0.0
    %2132 = vmatpush2.msra.mxu0 0.0
    %2133 = vmatprep.subr.mxu0 0.0
    %2134 = vmatpush2.msra.mxu0 0.0
    %2135 = vmatprep.subr.mxu0 0.0
    %2136 = vmatpush2.msra.mxu0 0.0
    %2137 = vmatprep.subr.mxu0 0.0
    %2138 = vmatpush2.msra.mxu0 0.0
    %2139 = vmatprep.subr.mxu0 0.0
    %2140 = vmatpush2.msra.mxu0 0.0
    %2141 = vmatprep.subr.mxu0 0.0
    %2142 = vmatpush2.msra.mxu0 0.0
    %2143 = vmatprep.subr.mxu0 0.0
    %2144 = vmatpush2.msra.mxu0 0.0
    %2145 = vmatprep.subr.mxu0 0.0
    %2146 = vmatpush2.msra.mxu0 0.0
    %2147 = vmatprep.subr.mxu0 0.0
    %2148 = vmatpush2.msra.mxu0 0.0
    %2149 = vmatprep.subr.mxu0 0.0
    %2150 = vmatpush2.msra.mxu0 0.0
    %2151 = vmatprep.subr.mxu0 0.0
    %2152 = vmatpush2.msra.mxu0 0.0
    %2153 = vmatprep.subr.mxu0 0.0
    %2154 = vmatpush2.msra.mxu0 0.0
    %2155 = vmatprep.mubr.f32.mxu0 0.0
    %2156 = vmatmul.mubr.f32.gmra.mxu0 %v2089
    %v2157 = vpop.f32.mrf.mxu0
    %v2158 = vadd.f32 0.0, %v2157
    %v2159 = vpop.f32.mrf.mxu0
    %2160 = vdwg.mxu0
    %2161 = vrot.lane.b32.xlu0 %v167, 104
    %v2162 = vpop.permute.xlu0 %2161
    %2163 = vrot.lane.b32.xlu0 %v135, 72
    %v2164 = vpop.permute.xlu0 %2163
    %v2165 = vsel %vm182, %v2162, 0
    %v2167 = vsel %vm182, %v2164, 0
    %2169 = vmatprep.subr.mxu0 0.0
    %2170 = vmatpush1.xpose.msra.mxu0 0.0
    %2171 = vmatprep.subr.mxu0 0.0
    %2172 = vmatpush1.xpose.msra.mxu0 0.0
    %2173 = vmatprep.subr.mxu0 0.0
    %2174 = vmatpush1.xpose.msra.mxu0 0.0
    %2175 = vmatprep.subr.mxu0 0.0
    %2176 = vmatpush1.xpose.msra.mxu0 0.0
    %2177 = vmatprep.subr.mxu0 0.0
    %2178 = vmatpush1.xpose.msra.mxu0 0.0
    %2179 = vmatprep.subr.mxu0 0.0
    %2180 = vmatpush1.xpose.msra.mxu0 0.0
    %2181 = vmatprep.subr.mxu0 0.0
    %2182 = vmatpush1.xpose.msra.mxu0 0.0
    %2183 = vmatprep.subr.mxu0 0.0
    %2184 = vmatpush1.xpose.msra.mxu0 0.0
    %2185 = vmatprep.subr.mxu0 0.0
    %2186 = vmatpush1.xpose.msra.mxu0 0.0
    %2187 = vmatprep.subr.mxu0 0.0
    %2188 = vmatpush1.xpose.msra.mxu0 0.0
    %2189 = vmatprep.subr.mxu0 0.0
    %2190 = vmatpush1.xpose.msra.mxu0 0.0
    %2191 = vmatprep.subr.mxu0 0.0
    %2192 = vmatpush1.xpose.msra.mxu0 0.0
    %2193 = vmatprep.subr.mxu0 0.0
    %2194 = vmatpush1.xpose.msra.mxu0 0.0
    %2195 = vmatprep.subr.mxu0 0.0
    %2196 = vmatpush1.xpose.msra.mxu0 0.0
    %2197 = vmatprep.subr.mxu0 0.0
    %2198 = vmatpush1.xpose.msra.mxu0 0.0
    %2199 = vmatprep.subr.mxu0 0.0
    %2200 = vmatpush1.xpose.msra.mxu0 %v2167
    %2201 = vmatprep.subr.mxu0 0.0
    %2202 = vmatpush2.xpose.msra.mxu0 0.0
    %2203 = vmatprep.subr.mxu0 0.0
    %2204 = vmatpush2.xpose.msra.mxu0 0.0
    %2205 = vmatprep.subr.mxu0 0.0
    %2206 = vmatpush2.xpose.msra.mxu0 0.0
    %2207 = vmatprep.subr.mxu0 0.0
    %2208 = vmatpush2.xpose.msra.mxu0 0.0
    %2209 = vmatprep.subr.mxu0 0.0
    %2210 = vmatpush2.xpose.msra.mxu0 0.0
    %2211 = vmatprep.subr.mxu0 0.0
    %2212 = vmatpush2.xpose.msra.mxu0 0.0
    %2213 = vmatprep.subr.mxu0 0.0
    %2214 = vmatpush2.xpose.msra.mxu0 0.0
    %2215 = vmatprep.subr.mxu0 0.0
    %2216 = vmatpush2.xpose.msra.mxu0 0.0
    %2217 = vmatprep.subr.mxu0 0.0
    %2218 = vmatpush2.xpose.msra.mxu0 0.0
    %2219 = vmatprep.subr.mxu0 0.0
    %2220 = vmatpush2.xpose.msra.mxu0 0.0
    %2221 = vmatprep.subr.mxu0 0.0
    %2222 = vmatpush2.xpose.msra.mxu0 0.0
    %2223 = vmatprep.subr.mxu0 0.0
    %2224 = vmatpush2.xpose.msra.mxu0 0.0
    %2225 = vmatprep.subr.mxu0 0.0
    %2226 = vmatpush2.xpose.msra.mxu0 0.0
    %2227 = vmatprep.subr.mxu0 0.0
    %2228 = vmatpush2.xpose.msra.mxu0 0.0
    %2229 = vmatprep.subr.mxu0 0.0
    %2230 = vmatpush2.xpose.msra.mxu0 0.0
    %2231 = vmatprep.subr.mxu0 0.0
    %2232 = vmatpush2.xpose.msra.mxu0 0.0
    %2233 = vmatprep.mubr.f32.mxu0 0.0
    %2234 = vmatmul.mubr.f32.gmra.mxu0 %v2165
    %v2235 = vpop.f32.mrf.mxu0
    %v2236 = vadd.f32 %v172, %v2235
    %v2237 = vpop.f32.mrf.mxu0
    %2238 = vdwg.mxu0
    %2239 = vrot.lane.b32.xlu0 %v168, 104
    %v2240 = vpop.permute.xlu0 %2239
    %2241 = vrot.lane.b32.xlu0 %v140, 72
    %v2242 = vpop.permute.xlu0 %2241
    %v2243 = vsel %vm182, %v2240, 0
    %v2245 = vsel %vm182, %v2242, 0
    %2247 = vmatprep.subr.mxu0 0.0
    %2248 = vmatpush1.xpose.msra.mxu0 0.0
    %2249 = vmatprep.subr.mxu0 0.0
    %2250 = vmatpush1.xpose.msra.mxu0 0.0
    %2251 = vmatprep.subr.mxu0 0.0
    %2252 = vmatpush1.xpose.msra.mxu0 0.0
    %2253 = vmatprep.subr.mxu0 0.0
    %2254 = vmatpush1.xpose.msra.mxu0 0.0
    %2255 = vmatprep.subr.mxu0 0.0
    %2256 = vmatpush1.xpose.msra.mxu0 0.0
    %2257 = vmatprep.subr.mxu0 0.0
    %2258 = vmatpush1.xpose.msra.mxu0 0.0
    %2259 = vmatprep.subr.mxu0 0.0
    %2260 = vmatpush1.xpose.msra.mxu0 0.0
    %2261 = vmatprep.subr.mxu0 0.0
    %2262 = vmatpush1.xpose.msra.mxu0 0.0
    %2263 = vmatprep.subr.mxu0 0.0
    %2264 = vmatpush1.xpose.msra.mxu0 0.0
    %2265 = vmatprep.subr.mxu0 0.0
    %2266 = vmatpush1.xpose.msra.mxu0 0.0
    %2267 = vmatprep.subr.mxu0 0.0
    %2268 = vmatpush1.xpose.msra.mxu0 0.0
    %2269 = vmatprep.subr.mxu0 0.0
    %2270 = vmatpush1.xpose.msra.mxu0 0.0
    %2271 = vmatprep.subr.mxu0 0.0
    %2272 = vmatpush1.xpose.msra.mxu0 0.0
    %2273 = vmatprep.subr.mxu0 0.0
    %2274 = vmatpush1.xpose.msra.mxu0 0.0
    %2275 = vmatprep.subr.mxu0 0.0
    %2276 = vmatpush1.xpose.msra.mxu0 0.0
    %2277 = vmatprep.subr.mxu0 0.0
    %2278 = vmatpush1.xpose.msra.mxu0 %v2245
    %2279 = vmatprep.subr.mxu0 0.0
    %2280 = vmatpush2.xpose.msra.mxu0 0.0
    %2281 = vmatprep.subr.mxu0 0.0
    %2282 = vmatpush2.xpose.msra.mxu0 0.0
    %2283 = vmatprep.subr.mxu0 0.0
    %2284 = vmatpush2.xpose.msra.mxu0 0.0
    %2285 = vmatprep.subr.mxu0 0.0
    %2286 = vmatpush2.xpose.msra.mxu0 0.0
    %2287 = vmatprep.subr.mxu0 0.0
    %2288 = vmatpush2.xpose.msra.mxu0 0.0
    %2289 = vmatprep.subr.mxu0 0.0
    %2290 = vmatpush2.xpose.msra.mxu0 0.0
    %2291 = vmatprep.subr.mxu0 0.0
    %2292 = vmatpush2.xpose.msra.mxu0 0.0
    %2293 = vmatprep.subr.mxu0 0.0
    %2294 = vmatpush2.xpose.msra.mxu0 0.0
    %2295 = vmatprep.subr.mxu0 0.0
    %2296 = vmatpush2.xpose.msra.mxu0 0.0
    %2297 = vmatprep.subr.mxu0 0.0
    %2298 = vmatpush2.xpose.msra.mxu0 0.0
    %2299 = vmatprep.subr.mxu0 0.0
    %2300 = vmatpush2.xpose.msra.mxu0 0.0
    %2301 = vmatprep.subr.mxu0 0.0
    %2302 = vmatpush2.xpose.msra.mxu0 0.0
    %2303 = vmatprep.subr.mxu0 0.0
    %2304 = vmatpush2.xpose.msra.mxu0 0.0
    %2305 = vmatprep.subr.mxu0 0.0
    %2306 = vmatpush2.xpose.msra.mxu0 0.0
    %2307 = vmatprep.subr.mxu0 0.0
    %2308 = vmatpush2.xpose.msra.mxu0 0.0
    %2309 = vmatprep.subr.mxu0 0.0
    %2310 = vmatpush2.xpose.msra.mxu0 0.0
    %2311 = vmatprep.mubr.f32.mxu0 0.0
    %2312 = vmatmul.mubr.f32.gmra.mxu0 %v2243
    %v2313 = vpop.f32.mrf.mxu0
    %v2314 = vadd.f32 %v176, %v2313
    %v2315 = vpop.f32.mrf.mxu0
    %2316 = vdwg.mxu0
    %v2317 = vsel %vm336, %v2236, -inf
    %2318 = vmax.xlane.f32.xlu0 %v2317
    %v2319 = vpop.xlane.xlu0 %2318
    %v2320 = vsel %vm336, %v2314, -inf
    %2321 = vmax.xlane.f32.xlu0 %v2320
    %v2322 = vpop.xlane.xlu0 %2321
    %v2323 = vsub.f32 %v2236, %v2319
    %v2324 = vsub.f32 %v2314, %v2322
    %v2325 = vmul.f32 %v2323, 1.442695
    %v2326 = vpow.pop %v2325
    %v2327 = vmul.f32 %v2324, 1.442695
    %v2328 = vpow.pop %v2327
    %v2329 = vsel %vm336, %v2326, 0.0
    %2330 = vadd.xlane.f32.xlu0 %v2329
    %v2331 = vpop.xlane.xlu0 %2330
    %v2332 = vsel %vm336, %v2328, 0.0
    %2333 = vadd.xlane.f32.xlu0 %v2332
    %v2334 = vpop.xlane.xlu0 %2333
    %v2335 = vrcp.pop %v2331
    %v2336 = vmul.f32 %v2326, %v2335
    %v2337 = vrcp.pop %v2334
    %v2338 = vmul.f32 %v2328, %v2337
    %2339 = vrot.lane.b32.xlu0 %v135, 40
    %v2340 = vpop.permute.xlu0 %2339
    %v2343 = vsel %vm336, %v2336, 0
    %2345 = vmatprep.subr.mxu0 0.0
    %2346 = vmatpush1.msra.mxu0 0.0
    %2347 = vmatprep.subr.mxu0 0.0
    %2348 = vmatpush1.msra.mxu0 0.0
    %2349 = vmatprep.subr.mxu0 0.0
    %2350 = vmatpush1.msra.mxu0 0.0
    %2351 = vmatprep.subr.mxu0 0.0
    %2352 = vmatpush1.msra.mxu0 0.0
    %2353 = vmatprep.subr.mxu0 0.0
    %2354 = vmatpush1.msra.mxu0 0.0
    %2355 = vmatprep.subr.mxu0 0.0
    %2356 = vmatpush1.msra.mxu0 0.0
    %2357 = vmatprep.subr.mxu0 0.0
    %2358 = vmatpush1.msra.mxu0 0.0
    %2359 = vmatprep.subr.mxu0 0.0
    %2360 = vmatpush1.msra.mxu0 0.0
    %2361 = vmatprep.subr.mxu0 0.0
    %2362 = vmatpush1.msra.mxu0 0.0
    %2363 = vmatprep.subr.mxu0 0.0
    %2364 = vmatpush1.msra.mxu0 0.0
    %2365 = vmatprep.subr.mxu0 0.0
    %2366 = vmatpush1.msra.mxu0 0.0
    %2367 = vmatprep.subr.mxu0 0.0
    %2368 = vmatpush1.msra.mxu0 0.0
    %2369 = vmatprep.subr.mxu0 0.0
    %2370 = vmatpush1.msra.mxu0 0.0
    %2371 = vmatprep.subr.mxu0 0.0
    %2372 = vmatpush1.msra.mxu0 0.0
    %2373 = vmatprep.subr.mxu0 0.0
    %2374 = vmatpush1.msra.mxu0 0.0
    %2375 = vmatprep.subr.mxu0 0.0
    %2376 = vmatpush1.msra.mxu0 %v2340
    %2377 = vmatprep.subr.mxu0 0.0
    %2378 = vmatpush2.msra.mxu0 0.0
    %2379 = vmatprep.subr.mxu0 0.0
    %2380 = vmatpush2.msra.mxu0 0.0
    %2381 = vmatprep.subr.mxu0 0.0
    %2382 = vmatpush2.msra.mxu0 0.0
    %2383 = vmatprep.subr.mxu0 0.0
    %2384 = vmatpush2.msra.mxu0 0.0
    %2385 = vmatprep.subr.mxu0 0.0
    %2386 = vmatpush2.msra.mxu0 0.0
    %2387 = vmatprep.subr.mxu0 0.0
    %2388 = vmatpush2.msra.mxu0 0.0
    %2389 = vmatprep.subr.mxu0 0.0
    %2390 = vmatpush2.msra.mxu0 0.0
    %2391 = vmatprep.subr.mxu0 0.0
    %2392 = vmatpush2.msra.mxu0 0.0
    %2393 = vmatprep.subr.mxu0 0.0
    %2394 = vmatpush2.msra.mxu0 0.0
    %2395 = vmatprep.subr.mxu0 0.0
    %2396 = vmatpush2.msra.mxu0 0.0
    %2397 = vmatprep.subr.mxu0 0.0
    %2398 = vmatpush2.msra.mxu0 0.0
    %2399 = vmatprep.subr.mxu0 0.0
    %2400 = vmatpush2.msra.mxu0 0.0
    %2401 = vmatprep.subr.mxu0 0.0
    %2402 = vmatpush2.msra.mxu0 0.0
    %2403 = vmatprep.subr.mxu0 0.0
    %2404 = vmatpush2.msra.mxu0 0.0
    %2405 = vmatprep.subr.mxu0 0.0
    %2406 = vmatpush2.msra.mxu0 0.0
    %2407 = vmatprep.subr.mxu0 0.0
    %2408 = vmatpush2.msra.mxu0 0.0
    %2409 = vmatprep.mubr.f32.mxu0 0.0
    %2410 = vmatmul.mubr.f32.gmra.mxu0 %v2343
    %v2411 = vpop.f32.mrf.mxu0
    %v2412 = vadd.f32 0.0, %v2411
    %v2413 = vpop.f32.mrf.mxu0
    %2414 = vdwg.mxu0
    %2415 = vrot.lane.b32.xlu0 %v140, 40
    %v2416 = vpop.permute.xlu0 %2415
    %v2419 = vsel %vm336, %v2338, 0
    %2421 = vmatprep.subr.mxu0 0.0
    %2422 = vmatpush1.msra.mxu0 0.0
    %2423 = vmatprep.subr.mxu0 0.0
    %2424 = vmatpush1.msra.mxu0 0.0
    %2425 = vmatprep.subr.mxu0 0.0
    %2426 = vmatpush1.msra.mxu0 0.0
    %2427 = vmatprep.subr.mxu0 0.0
    %2428 = vmatpush1.msra.mxu0 0.0
    %2429 = vmatprep.subr.mxu0 0.0
    %2430 = vmatpush1.msra.mxu0 0.0
    %2431 = vmatprep.subr.mxu0 0.0
    %2432 = vmatpush1.msra.mxu0 0.0
    %2433 = vmatprep.subr.mxu0 0.0
    %2434 = vmatpush1.msra.mxu0 0.0
    %2435 = vmatprep.subr.mxu0 0.0
    %2436 = vmatpush1.msra.mxu0 0.0
    %2437 = vmatprep.subr.mxu0 0.0
    %2438 = vmatpush1.msra.mxu0 0.0
    %2439 = vmatprep.subr.mxu0 0.0
    %2440 = vmatpush1.msra.mxu0 0.0
    %2441 = vmatprep.subr.mxu0 0.0
    %2442 = vmatpush1.msra.mxu0 0.0
    %2443 = vmatprep.subr.mxu0 0.0
    %2444 = vmatpush1.msra.mxu0 0.0
    %2445 = vmatprep.subr.mxu0 0.0
    %2446 = vmatpush1.msra.mxu0 0.0
    %2447 = vmatprep.subr.mxu0 0.0
    %2448 = vmatpush1.msra.mxu0 0.0
    %2449 = vmatprep.subr.mxu0 0.0
    %2450 = vmatpush1.msra.mxu0 0.0
    %2451 = vmatprep.subr.mxu0 0.0
    %2452 = vmatpush1.msra.mxu0 %v2416
    %2453 = vmatprep.subr.mxu0 0.0
    %2454 = vmatpush2.msra.mxu0 0.0
    %2455 = vmatprep.subr.mxu0 0.0
    %2456 = vmatpush2.msra.mxu0 0.0
    %2457 = vmatprep.subr.mxu0 0.0
    %2458 = vmatpush2.msra.mxu0 0.0
    %2459 = vmatprep.subr.mxu0 0.0
    %2460 = vmatpush2.msra.mxu0 0.0
    %2461 = vmatprep.subr.mxu0 0.0
    %2462 = vmatpush2.msra.mxu0 0.0
    %2463 = vmatprep.subr.mxu0 0.0
    %2464 = vmatpush2.msra.mxu0 0.0
    %2465 = vmatprep.subr.mxu0 0.0
    %2466 = vmatpush2.msra.mxu0 0.0
    %2467 = vmatprep.subr.mxu0 0.0
    %2468 = vmatpush2.msra.mxu0 0.0
    %2469 = vmatprep.subr.mxu0 0.0
    %2470 = vmatpush2.msra.mxu0 0.0
    %2471 = vmatprep.subr.mxu0 0.0
    %2472 = vmatpush2.msra.mxu0 0.0
    %2473 = vmatprep.subr.mxu0 0.0
    %2474 = vmatpush2.msra.mxu0 0.0
    %2475 = vmatprep.subr.mxu0 0.0
    %2476 = vmatpush2.msra.mxu0 0.0
    %2477 = vmatprep.subr.mxu0 0.0
    %2478 = vmatpush2.msra.mxu0 0.0
    %2479 = vmatprep.subr.mxu0 0.0
    %2480 = vmatpush2.msra.mxu0 0.0
    %2481 = vmatprep.subr.mxu0 0.0
    %2482 = vmatpush2.msra.mxu0 0.0
    %2483 = vmatprep.subr.mxu0 0.0
    %2484 = vmatpush2.msra.mxu0 0.0
    %2485 = vmatprep.mubr.f32.mxu0 0.0
    %2486 = vmatmul.mubr.f32.gmra.mxu0 %v2419
    %v2487 = vpop.f32.mrf.mxu0
    %v2488 = vadd.f32 0.0, %v2487
    %v2489 = vpop.f32.mrf.mxu0
    %2490 = vdwg.mxu0
    %2491 = vrot.lane.b32.xlu0 %v167, 100
    %v2492 = vpop.permute.xlu0 %2491
    %2493 = vrot.lane.b32.xlu0 %v135, 68
    %v2494 = vpop.permute.xlu0 %2493
    %v2495 = vsel %vm182, %v2492, 0
    %v2497 = vsel %vm182, %v2494, 0
    %2499 = vmatprep.subr.mxu0 0.0
    %2500 = vmatpush1.xpose.msra.mxu0 0.0
    %2501 = vmatprep.subr.mxu0 0.0
    %2502 = vmatpush1.xpose.msra.mxu0 0.0
    %2503 = vmatprep.subr.mxu0 0.0
    %2504 = vmatpush1.xpose.msra.mxu0 0.0
    %2505 = vmatprep.subr.mxu0 0.0
    %2506 = vmatpush1.xpose.msra.mxu0 0.0
    %2507 = vmatprep.subr.mxu0 0.0
    %2508 = vmatpush1.xpose.msra.mxu0 0.0
    %2509 = vmatprep.subr.mxu0 0.0
    %2510 = vmatpush1.xpose.msra.mxu0 0.0
    %2511 = vmatprep.subr.mxu0 0.0
    %2512 = vmatpush1.xpose.msra.mxu0 0.0
    %2513 = vmatprep.subr.mxu0 0.0
    %2514 = vmatpush1.xpose.msra.mxu0 0.0
    %2515 = vmatprep.subr.mxu0 0.0
    %2516 = vmatpush1.xpose.msra.mxu0 0.0
    %2517 = vmatprep.subr.mxu0 0.0
    %2518 = vmatpush1.xpose.msra.mxu0 0.0
    %2519 = vmatprep.subr.mxu0 0.0
    %2520 = vmatpush1.xpose.msra.mxu0 0.0
    %2521 = vmatprep.subr.mxu0 0.0
    %2522 = vmatpush1.xpose.msra.mxu0 0.0
    %2523 = vmatprep.subr.mxu0 0.0
    %2524 = vmatpush1.xpose.msra.mxu0 0.0
    %2525 = vmatprep.subr.mxu0 0.0
    %2526 = vmatpush1.xpose.msra.mxu0 0.0
    %2527 = vmatprep.subr.mxu0 0.0
    %2528 = vmatpush1.xpose.msra.mxu0 0.0
    %2529 = vmatprep.subr.mxu0 0.0
    %2530 = vmatpush1.xpose.msra.mxu0 %v2497
    %2531 = vmatprep.subr.mxu0 0.0
    %2532 = vmatpush2.xpose.msra.mxu0 0.0
    %2533 = vmatprep.subr.mxu0 0.0
    %2534 = vmatpush2.xpose.msra.mxu0 0.0
    %2535 = vmatprep.subr.mxu0 0.0
    %2536 = vmatpush2.xpose.msra.mxu0 0.0
    %2537 = vmatprep.subr.mxu0 0.0
    %2538 = vmatpush2.xpose.msra.mxu0 0.0
    %2539 = vmatprep.subr.mxu0 0.0
    %2540 = vmatpush2.xpose.msra.mxu0 0.0
    %2541 = vmatprep.subr.mxu0 0.0
    %2542 = vmatpush2.xpose.msra.mxu0 0.0
    %2543 = vmatprep.subr.mxu0 0.0
    %2544 = vmatpush2.xpose.msra.mxu0 0.0
    %2545 = vmatprep.subr.mxu0 0.0
    %2546 = vmatpush2.xpose.msra.mxu0 0.0
    %2547 = vmatprep.subr.mxu0 0.0
    %2548 = vmatpush2.xpose.msra.mxu0 0.0
    %2549 = vmatprep.subr.mxu0 0.0
    %2550 = vmatpush2.xpose.msra.mxu0 0.0
    %2551 = vmatprep.subr.mxu0 0.0
    %2552 = vmatpush2.xpose.msra.mxu0 0.0
    %2553 = vmatprep.subr.mxu0 0.0
    %2554 = vmatpush2.xpose.msra.mxu0 0.0
    %2555 = vmatprep.subr.mxu0 0.0
    %2556 = vmatpush2.xpose.msra.mxu0 0.0
    %2557 = vmatprep.subr.mxu0 0.0
    %2558 = vmatpush2.xpose.msra.mxu0 0.0
    %2559 = vmatprep.subr.mxu0 0.0
    %2560 = vmatpush2.xpose.msra.mxu0 0.0
    %2561 = vmatprep.subr.mxu0 0.0
    %2562 = vmatpush2.xpose.msra.mxu0 0.0
    %2563 = vmatprep.mubr.f32.mxu0 0.0
    %2564 = vmatmul.mubr.f32.gmra.mxu0 %v2495
    %v2565 = vpop.f32.mrf.mxu0
    %v2566 = vadd.f32 %v172, %v2565
    %v2567 = vpop.f32.mrf.mxu0
    %2568 = vdwg.mxu0
    %2569 = vrot.lane.b32.xlu0 %v168, 100
    %v2570 = vpop.permute.xlu0 %2569
    %2571 = vrot.lane.b32.xlu0 %v140, 68
    %v2572 = vpop.permute.xlu0 %2571
    %v2573 = vsel %vm182, %v2570, 0
    %v2575 = vsel %vm182, %v2572, 0
    %2577 = vmatprep.subr.mxu0 0.0
    %2578 = vmatpush1.xpose.msra.mxu0 0.0
    %2579 = vmatprep.subr.mxu0 0.0
    %2580 = vmatpush1.xpose.msra.mxu0 0.0
    %2581 = vmatprep.subr.mxu0 0.0
    %2582 = vmatpush1.xpose.msra.mxu0 0.0
    %2583 = vmatprep.subr.mxu0 0.0
    %2584 = vmatpush1.xpose.msra.mxu0 0.0
    %2585 = vmatprep.subr.mxu0 0.0
    %2586 = vmatpush1.xpose.msra.mxu0 0.0
    %2587 = vmatprep.subr.mxu0 0.0
    %2588 = vmatpush1.xpose.msra.mxu0 0.0
    %2589 = vmatprep.subr.mxu0 0.0
    %2590 = vmatpush1.xpose.msra.mxu0 0.0
    %2591 = vmatprep.subr.mxu0 0.0
    %2592 = vmatpush1.xpose.msra.mxu0 0.0
    %2593 = vmatprep.subr.mxu0 0.0
    %2594 = vmatpush1.xpose.msra.mxu0 0.0
    %2595 = vmatprep.subr.mxu0 0.0
    %2596 = vmatpush1.xpose.msra.mxu0 0.0
    %2597 = vmatprep.subr.mxu0 0.0
    %2598 = vmatpush1.xpose.msra.mxu0 0.0
    %2599 = vmatprep.subr.mxu0 0.0
    %2600 = vmatpush1.xpose.msra.mxu0 0.0
    %2601 = vmatprep.subr.mxu0 0.0
    %2602 = vmatpush1.xpose.msra.mxu0 0.0
    %2603 = vmatprep.subr.mxu0 0.0
    %2604 = vmatpush1.xpose.msra.mxu0 0.0
    %2605 = vmatprep.subr.mxu0 0.0
    %2606 = vmatpush1.xpose.msra.mxu0 0.0
    %2607 = vmatprep.subr.mxu0 0.0
    %2608 = vmatpush1.xpose.msra.mxu0 %v2575
    %2609 = vmatprep.subr.mxu0 0.0
    %2610 = vmatpush2.xpose.msra.mxu0 0.0
    %2611 = vmatprep.subr.mxu0 0.0
    %2612 = vmatpush2.xpose.msra.mxu0 0.0
    %2613 = vmatprep.subr.mxu0 0.0
    %2614 = vmatpush2.xpose.msra.mxu0 0.0
    %2615 = vmatprep.subr.mxu0 0.0
    %2616 = vmatpush2.xpose.msra.mxu0 0.0
    %2617 = vmatprep.subr.mxu0 0.0
    %2618 = vmatpush2.xpose.msra.mxu0 0.0
    %2619 = vmatprep.subr.mxu0 0.0
    %2620 = vmatpush2.xpose.msra.mxu0 0.0
    %2621 = vmatprep.subr.mxu0 0.0
    %2622 = vmatpush2.xpose.msra.mxu0 0.0
    %2623 = vmatprep.subr.mxu0 0.0
    %2624 = vmatpush2.xpose.msra.mxu0 0.0
    %2625 = vmatprep.subr.mxu0 0.0
    %2626 = vmatpush2.xpose.msra.mxu0 0.0
    %2627 = vmatprep.subr.mxu0 0.0
    %2628 = vmatpush2.xpose.msra.mxu0 0.0
    %2629 = vmatprep.subr.mxu0 0.0
    %2630 = vmatpush2.xpose.msra.mxu0 0.0
    %2631 = vmatprep.subr.mxu0 0.0
    %2632 = vmatpush2.xpose.msra.mxu0 0.0
    %2633 = vmatprep.subr.mxu0 0.0
    %2634 = vmatpush2.xpose.msra.mxu0 0.0
    %2635 = vmatprep.subr.mxu0 0.0
    %2636 = vmatpush2.xpose.msra.mxu0 0.0
    %2637 = vmatprep.subr.mxu0 0.0
    %2638 = vmatpush2.xpose.msra.mxu0 0.0
    %2639 = vmatprep.subr.mxu0 0.0
    %2640 = vmatpush2.xpose.msra.mxu0 0.0
    %2641 = vmatprep.mubr.f32.mxu0 0.0
    %2642 = vmatmul.mubr.f32.gmra.mxu0 %v2573
    %v2643 = vpop.f32.mrf.mxu0
    %v2644 = vadd.f32 %v176, %v2643
    %v2645 = vpop.f32.mrf.mxu0
    %2646 = vdwg.mxu0
    %v2647 = vsel %vm336, %v2566, -inf
    %2648 = vmax.xlane.f32.xlu0 %v2647
    %v2649 = vpop.xlane.xlu0 %2648
    %v2650 = vsel %vm336, %v2644, -inf
    %2651 = vmax.xlane.f32.xlu0 %v2650
    %v2652 = vpop.xlane.xlu0 %2651
    %v2653 = vsub.f32 %v2566, %v2649
    %v2654 = vsub.f32 %v2644, %v2652
    %v2655 = vmul.f32 %v2653, 1.442695
    %v2656 = vpow.pop %v2655
    %v2657 = vmul.f32 %v2654, 1.442695
    %v2658 = vpow.pop %v2657
    %v2659 = vsel %vm336, %v2656, 0.0
    %2660 = vadd.xlane.f32.xlu0 %v2659
    %v2661 = vpop.xlane.xlu0 %2660
    %v2662 = vsel %vm336, %v2658, 0.0
    %2663 = vadd.xlane.f32.xlu0 %v2662
    %v2664 = vpop.xlane.xlu0 %2663
    %v2665 = vrcp.pop %v2661
    %v2666 = vmul.f32 %v2656, %v2665
    %v2667 = vrcp.pop %v2664
    %v2668 = vmul.f32 %v2658, %v2667
    %2669 = vrot.lane.b32.xlu0 %v135, 36
    %v2670 = vpop.permute.xlu0 %2669
    %v2673 = vsel %vm336, %v2666, 0
    %2675 = vmatprep.subr.mxu0 0.0
    %2676 = vmatpush1.msra.mxu0 0.0
    %2677 = vmatprep.subr.mxu0 0.0
    %2678 = vmatpush1.msra.mxu0 0.0
    %2679 = vmatprep.subr.mxu0 0.0
    %2680 = vmatpush1.msra.mxu0 0.0
    %2681 = vmatprep.subr.mxu0 0.0
    %2682 = vmatpush1.msra.mxu0 0.0
    %2683 = vmatprep.subr.mxu0 0.0
    %2684 = vmatpush1.msra.mxu0 0.0
    %2685 = vmatprep.subr.mxu0 0.0
    %2686 = vmatpush1.msra.mxu0 0.0
    %2687 = vmatprep.subr.mxu0 0.0
    %2688 = vmatpush1.msra.mxu0 0.0
    %2689 = vmatprep.subr.mxu0 0.0
    %2690 = vmatpush1.msra.mxu0 0.0
    %2691 = vmatprep.subr.mxu0 0.0
    %2692 = vmatpush1.msra.mxu0 0.0
    %2693 = vmatprep.subr.mxu0 0.0
    %2694 = vmatpush1.msra.mxu0 0.0
    %2695 = vmatprep.subr.mxu0 0.0
    %2696 = vmatpush1.msra.mxu0 0.0
    %2697 = vmatprep.subr.mxu0 0.0
    %2698 = vmatpush1.msra.mxu0 0.0
    %2699 = vmatprep.subr.mxu0 0.0
    %2700 = vmatpush1.msra.mxu0 0.0
    %2701 = vmatprep.subr.mxu0 0.0
    %2702 = vmatpush1.msra.mxu0 0.0
    %2703 = vmatprep.subr.mxu0 0.0
    %2704 = vmatpush1.msra.mxu0 0.0
    %2705 = vmatprep.subr.mxu0 0.0
    %2706 = vmatpush1.msra.mxu0 %v2670
    %2707 = vmatprep.subr.mxu0 0.0
    %2708 = vmatpush2.msra.mxu0 0.0
    %2709 = vmatprep.subr.mxu0 0.0
    %2710 = vmatpush2.msra.mxu0 0.0
    %2711 = vmatprep.subr.mxu0 0.0
    %2712 = vmatpush2.msra.mxu0 0.0
    %2713 = vmatprep.subr.mxu0 0.0
    %2714 = vmatpush2.msra.mxu0 0.0
    %2715 = vmatprep.subr.mxu0 0.0
    %2716 = vmatpush2.msra.mxu0 0.0
    %2717 = vmatprep.subr.mxu0 0.0
    %2718 = vmatpush2.msra.mxu0 0.0
    %2719 = vmatprep.subr.mxu0 0.0
    %2720 = vmatpush2.msra.mxu0 0.0
    %2721 = vmatprep.subr.mxu0 0.0
    %2722 = vmatpush2.msra.mxu0 0.0
    %2723 = vmatprep.subr.mxu0 0.0
    %2724 = vmatpush2.msra.mxu0 0.0
    %2725 = vmatprep.subr.mxu0 0.0
    %2726 = vmatpush2.msra.mxu0 0.0
    %2727 = vmatprep.subr.mxu0 0.0
    %2728 = vmatpush2.msra.mxu0 0.0
    %2729 = vmatprep.subr.mxu0 0.0
    %2730 = vmatpush2.msra.mxu0 0.0
    %2731 = vmatprep.subr.mxu0 0.0
    %2732 = vmatpush2.msra.mxu0 0.0
    %2733 = vmatprep.subr.mxu0 0.0
    %2734 = vmatpush2.msra.mxu0 0.0
    %2735 = vmatprep.subr.mxu0 0.0
    %2736 = vmatpush2.msra.mxu0 0.0
    %2737 = vmatprep.subr.mxu0 0.0
    %2738 = vmatpush2.msra.mxu0 0.0
    %2739 = vmatprep.mubr.f32.mxu0 0.0
    %2740 = vmatmul.mubr.f32.gmra.mxu0 %v2673
    %v2741 = vpop.f32.mrf.mxu0
    %v2742 = vadd.f32 0.0, %v2741
    %v2743 = vpop.f32.mrf.mxu0
    %2744 = vdwg.mxu0
    %2745 = vrot.lane.b32.xlu0 %v140, 36
    %v2746 = vpop.permute.xlu0 %2745
    %v2749 = vsel %vm336, %v2668, 0
    %2751 = vmatprep.subr.mxu0 0.0
    %2752 = vmatpush1.msra.mxu0 0.0
    %2753 = vmatprep.subr.mxu0 0.0
    %2754 = vmatpush1.msra.mxu0 0.0
    %2755 = vmatprep.subr.mxu0 0.0
    %2756 = vmatpush1.msra.mxu0 0.0
    %2757 = vmatprep.subr.mxu0 0.0
    %2758 = vmatpush1.msra.mxu0 0.0
    %2759 = vmatprep.subr.mxu0 0.0
    %2760 = vmatpush1.msra.mxu0 0.0
    %2761 = vmatprep.subr.mxu0 0.0
    %2762 = vmatpush1.msra.mxu0 0.0
    %2763 = vmatprep.subr.mxu0 0.0
    %2764 = vmatpush1.msra.mxu0 0.0
    %2765 = vmatprep.subr.mxu0 0.0
    %2766 = vmatpush1.msra.mxu0 0.0
    %2767 = vmatprep.subr.mxu0 0.0
    %2768 = vmatpush1.msra.mxu0 0.0
    %2769 = vmatprep.subr.mxu0 0.0
    %2770 = vmatpush1.msra.mxu0 0.0
    %2771 = vmatprep.subr.mxu0 0.0
    %2772 = vmatpush1.msra.mxu0 0.0
    %2773 = vmatprep.subr.mxu0 0.0
    %2774 = vmatpush1.msra.mxu0 0.0
    %2775 = vmatprep.subr.mxu0 0.0
    %2776 = vmatpush1.msra.mxu0 0.0
    %2777 = vmatprep.subr.mxu0 0.0
    %2778 = vmatpush1.msra.mxu0 0.0
    %2779 = vmatprep.subr.mxu0 0.0
    %2780 = vmatpush1.msra.mxu0 0.0
    %2781 = vmatprep.subr.mxu0 0.0
    %2782 = vmatpush1.msra.mxu0 %v2746
    %2783 = vmatprep.subr.mxu0 0.0
    %2784 = vmatpush2.msra.mxu0 0.0
    %2785 = vmatprep.subr.mxu0 0.0
    %2786 = vmatpush2.msra.mxu0 0.0
    %2787 = vmatprep.subr.mxu0 0.0
    %2788 = vmatpush2.msra.mxu0 0.0
    %2789 = vmatprep.subr.mxu0 0.0
    %2790 = vmatpush2.msra.mxu0 0.0
    %2791 = vmatprep.subr.mxu0 0.0
    %2792 = vmatpush2.msra.mxu0 0.0
    %2793 = vmatprep.subr.mxu0 0.0
    %2794 = vmatpush2.msra.mxu0 0.0
    %2795 = vmatprep.subr.mxu0 0.0
    %2796 = vmatpush2.msra.mxu0 0.0
    %2797 = vmatprep.subr.mxu0 0.0
    %2798 = vmatpush2.msra.mxu0 0.0
    %2799 = vmatprep.subr.mxu0 0.0
    %2800 = vmatpush2.msra.mxu0 0.0
    %2801 = vmatprep.subr.mxu0 0.0
    %2802 = vmatpush2.msra.mxu0 0.0
    %2803 = vmatprep.subr.mxu0 0.0
    %2804 = vmatpush2.msra.mxu0 0.0
    %2805 = vmatprep.subr.mxu0 0.0
    %2806 = vmatpush2.msra.mxu0 0.0
    %2807 = vmatprep.subr.mxu0 0.0
    %2808 = vmatpush2.msra.mxu0 0.0
    %2809 = vmatprep.subr.mxu0 0.0
    %2810 = vmatpush2.msra.mxu0 0.0
    %2811 = vmatprep.subr.mxu0 0.0
    %2812 = vmatpush2.msra.mxu0 0.0
    %2813 = vmatprep.subr.mxu0 0.0
    %2814 = vmatpush2.msra.mxu0 0.0
    %2815 = vmatprep.mubr.f32.mxu0 0.0
    %2816 = vmatmul.mubr.f32.gmra.mxu0 %v2749
    %v2817 = vpop.f32.mrf.mxu0
    %v2818 = vadd.f32 0.0, %v2817
    %v2819 = vpop.f32.mrf.mxu0
    %2820 = vdwg.mxu0
    %2823 = vrot.lane.b32.xlu0 %v762, 4
    %v2824 = vpop.permute.xlu0 %2823
    %2825 = vrot.lane.b32.xlu0 %v838, 4
    %v2826 = vpop.permute.xlu0 %2825
    %2831 = vrot.lane.b32.xlu0 %v1092, 8
    %v2832 = vpop.permute.xlu0 %2831
    %2833 = vrot.lane.b32.xlu0 %v1168, 8
    %v2834 = vpop.permute.xlu0 %2833
    %2839 = vrot.lane.b32.xlu0 %v1422, 12
    %v2840 = vpop.permute.xlu0 %2839
    %2841 = vrot.lane.b32.xlu0 %v1498, 12
    %v2842 = vpop.permute.xlu0 %2841
    %2847 = vrot.lane.b32.xlu0 %v1752, 16
    %v2848 = vpop.permute.xlu0 %2847
    %2849 = vrot.lane.b32.xlu0 %v1828, 16
    %v2850 = vpop.permute.xlu0 %2849
    %2855 = vrot.lane.b32.xlu0 %v2082, 20
    %v2856 = vpop.permute.xlu0 %2855
    %2857 = vrot.lane.b32.xlu0 %v2158, 20
    %v2858 = vpop.permute.xlu0 %2857
    %2863 = vrot.lane.b32.xlu0 %v2412, 24
    %v2864 = vpop.permute.xlu0 %2863
    %2865 = vrot.lane.b32.xlu0 %v2488, 24
    %v2866 = vpop.permute.xlu0 %2865
    %2871 = vrot.lane.b32.xlu0 %v2742, 28
    %v2872 = vpop.permute.xlu0 %2871
    %2873 = vrot.lane.b32.xlu0 %v2818, 28
    %v2874 = vpop.permute.xlu0 %2873
    %v2877 = vsel %vm182, %v432, %v2824
    %v2878 = vsel %vm182, %v508, %v2826
    %v2879 = vsel %vm336, %v2877, %v2832
    %v2880 = vsel %vm336, %v2878, %v2834
    %vm2881 = vcmask 97280
    %v2882 = vsel %vm2881, %v2879, %v2840
    %v2883 = vsel %vm2881, %v2880, %v2842
    %vm2884 = vcmask 130048
    %v2885 = vsel %vm2884, %v2882, %v2848
    %v2886 = vsel %vm2884, %v2883, %v2850
    %vm2887 = vcmask 162816
    %v2888 = vsel %vm2887, %v2885, %v2856
    %v2889 = vsel %vm2887, %v2886, %v2858
    %vm2890 = vcmask 195584
    %v2891 = vsel %vm2890, %v2888, %v2864
    %v2892 = vsel %vm2890, %v2889, %v2866
    %vm2893 = vcmask 228352
    %v2894 = vsel %vm2893, %v2891, %v2872
    %v2895 = vsel %vm2893, %v2892, %v2874
    %v2896 = vld [vmem:[%s4] sm:$0xff]
    %v2897 = vld [vmem:[%s4 + $0x8] sm:$0xff]
    %v2898 = vld [vmem:[%s4 + $0x10] sm:$0xff]
    %v2899 = vld [vmem:[%s4 + $0x18] sm:$0xff]
    %v2900 = vld [vmem:[%s5] sm:$0x1]
    %v2902 = vlaneseq
    %v2903 = vshrl.u32 %v2902, 7
    %v2904 = vsub.s32 0, %v2903
    %v2905 = vrot.slane %v2900, %v2904
    %v2908 = vsel %vm61, %v2894, 0
    %v2911 = vsel %vm61, %v2895, 0
    %2913 = vmatprep.subr.mxu0 0.0
    %2914 = vmatpush1.msra.mxu0 0.0
    %2915 = vmatprep.subr.mxu0 0.0
    %2916 = vmatpush1.msra.mxu0 0.0
    %2917 = vmatprep.subr.mxu0 0.0
    %2918 = vmatpush1.msra.mxu0 0.0
    %2919 = vmatprep.subr.mxu0 0.0
    %2920 = vmatpush1.msra.mxu0 0.0
    %2921 = vmatprep.subr.mxu0 0.0
    %2922 = vmatpush1.msra.mxu0 0.0
    %2923 = vmatprep.subr.mxu0 0.0
    %2924 = vmatpush1.msra.mxu0 0.0
    %2925 = vmatprep.subr.mxu0 0.0
    %2926 = vmatpush1.msra.mxu0 0.0
    %2927 = vmatprep.subr.mxu0 0.0
    %2928 = vmatpush1.msra.mxu0 0.0
    %2929 = vmatprep.subr.mxu0 0.0
    %2930 = vmatpush1.msra.mxu0 0.0
    %2931 = vmatprep.subr.mxu0 0.0
    %2932 = vmatpush1.msra.mxu0 0.0
    %2933 = vmatprep.subr.mxu0 0.0
    %2934 = vmatpush1.msra.mxu0 0.0
    %2935 = vmatprep.subr.mxu0 0.0
    %2936 = vmatpush1.msra.mxu0 0.0
    %2937 = vmatprep.subr.mxu0 0.0
    %2938 = vmatpush1.msra.mxu0 %v2899
    %2939 = vmatprep.subr.mxu0 0.0
    %2940 = vmatpush1.msra.mxu0 %v2898
    %2941 = vmatprep.subr.mxu0 0.0
    %2942 = vmatpush1.msra.mxu0 %v2897
    %2943 = vmatprep.subr.mxu0 0.0
    %2944 = vmatpush1.msra.mxu0 %v2896
    %2945 = vmatprep.subr.mxu0 0.0
    %2946 = vmatpush2.msra.mxu0 0.0
    %2947 = vmatprep.subr.mxu0 0.0
    %2948 = vmatpush2.msra.mxu0 0.0
    %2949 = vmatprep.subr.mxu0 0.0
    %2950 = vmatpush2.msra.mxu0 0.0
    %2951 = vmatprep.subr.mxu0 0.0
    %2952 = vmatpush2.msra.mxu0 0.0
    %2953 = vmatprep.subr.mxu0 0.0
    %2954 = vmatpush2.msra.mxu0 0.0
    %2955 = vmatprep.subr.mxu0 0.0
    %2956 = vmatpush2.msra.mxu0 0.0
    %2957 = vmatprep.subr.mxu0 0.0
    %2958 = vmatpush2.msra.mxu0 0.0
    %2959 = vmatprep.subr.mxu0 0.0
    %2960 = vmatpush2.msra.mxu0 0.0
    %2961 = vmatprep.subr.mxu0 0.0
    %2962 = vmatpush2.msra.mxu0 0.0
    %2963 = vmatprep.subr.mxu0 0.0
    %2964 = vmatpush2.msra.mxu0 0.0
    %2965 = vmatprep.subr.mxu0 0.0
    %2966 = vmatpush2.msra.mxu0 0.0
    %2967 = vmatprep.subr.mxu0 0.0
    %2968 = vmatpush2.msra.mxu0 0.0
    %2969 = vmatprep.subr.mxu0 0.0
    %2970 = vmatpush2.msra.mxu0 0.0
    %2971 = vmatprep.subr.mxu0 0.0
    %2972 = vmatpush2.msra.mxu0 0.0
    %2973 = vmatprep.subr.mxu0 0.0
    %2974 = vmatpush2.msra.mxu0 0.0
    %2975 = vmatprep.subr.mxu0 0.0
    %2976 = vmatpush2.msra.mxu0 0.0
    %2977 = vmatprep.mubr.f32.mxu0 0.0
    %2978 = vmatmul.mubr.f32.gmra.mxu0 %v2908
    %v2979 = vpop.f32.mrf.mxu0
    %v2980 = vadd.f32 %v2905, %v2979
    %v2981 = vpop.f32.mrf.mxu0
    %2982 = vmatprep.mubr.f32.mxu0 0.0
    %2983 = vmatmul.mubr.f32.gmra.mxu0 %v2911
    %v2984 = vpop.f32.mrf.mxu0
    %v2985 = vadd.f32 %v2905, %v2984
    %v2986 = vpop.f32.mrf.mxu0
    %2987 = vdwg.mxu0
    %v2988 = vadd.f32 %v48, %v2980
    %v2989 = vadd.f32 %v49, %v2985
    %v2990 = vsel %vm61, %v2988, 0.0
    %2991 = vadd.xlane.f32.xlu0 %v2990
    %v2992 = vpop.xlane.xlu0 %2991
    %v2993 = vsel %vm61, %v2989, 0.0
    %2994 = vadd.xlane.f32.xlu0 %v2993
    %v2995 = vpop.xlane.xlu0 %2994
    %v2996 = vrcp.pop 32.0
    %v2997 = vmul.f32 %v2992, %v2996
    %v2998 = vmul.f32 %v2995, %v2996
    %v2999 = vsub.f32 %v2988, %v2997
    %v3000 = vsub.f32 %v2989, %v2998
    %v3001 = vmul.f32 %v2999, %v2999
    %v3002 = vmul.f32 %v3000, %v3000
    %v3003 = vsel %vm61, %v3001, 0.0
    %3004 = vadd.xlane.f32.xlu0 %v3003
    %v3005 = vpop.xlane.xlu0 %3004
    %v3006 = vsel %vm61, %v3002, 0.0
    %3007 = vadd.xlane.f32.xlu0 %v3006
    %v3008 = vpop.xlane.xlu0 %3007
    %v3009 = vmul.f32 %v3005, %v2996
    %v3010 = vmul.f32 %v3008, %v2996
    %v3011 = vadd.f32 %v3009, 1e-05
    %v3012 = vadd.f32 %v3010, 1e-05
    %v3013 = vrsqrt.pop %v3011
    %v3014 = vrsqrt.pop %v3012
    %v3015 = vmul.f32 %v2999, %v3013
    %v3016 = vmul.f32 %v3000, %v3014
    %v3017 = vld [vmem:[%s6] sm:$0x1]
    %v3019 = vlaneseq
    %v3020 = vshrl.u32 %v3019, 7
    %v3021 = vsub.s32 0, %v3020
    %v3022 = vrot.slane %v3017, %v3021
    %v3024 = vmul.f32 %v3015, %v3022
    %v3025 = vmul.f32 %v3016, %v3022
    %v3026 = vld [vmem:[%s7] sm:$0x1]
    %v3028 = vlaneseq
    %v3029 = vshrl.u32 %v3028, 7
    %v3030 = vsub.s32 0, %v3029
    %v3031 = vrot.slane %v3026, %v3030
    %v3033 = vadd.f32 %v3024, %v3031
    %v3034 = vadd.f32 %v3025, %v3031
    %v3035 = vld [vmem:[%s8] sm:$0xff]
    %v3036 = vld [vmem:[%s8 + $0x8] sm:$0xff]
    %v3037 = vld [vmem:[%s8 + $0x10] sm:$0xff]
    %v3038 = vld [vmem:[%s8 + $0x18] sm:$0xff]
    %v3039 = vld [vmem:[%s8 + $0x20] sm:$0xff]
    %v3040 = vld [vmem:[%s8 + $0x28] sm:$0xff]
    %v3041 = vld [vmem:[%s8 + $0x30] sm:$0xff]
    %v3042 = vld [vmem:[%s8 + $0x38] sm:$0xff]
    %v3043 = vld [vmem:[%s8 + $0x40] sm:$0xff]
    %v3044 = vld [vmem:[%s8 + $0x48] sm:$0xff]
    %v3045 = vld [vmem:[%s8 + $0x50] sm:$0xff]
    %v3046 = vld [vmem:[%s8 + $0x58] sm:$0xff]
    %v3047 = vld [vmem:[%s8 + $0x60] sm:$0xff]
    %v3048 = vld [vmem:[%s8 + $0x68] sm:$0xff]
    %v3049 = vld [vmem:[%s8 + $0x70] sm:$0xff]
    %v3050 = vld [vmem:[%s8 + $0x78] sm:$0xff]
    %v3051 = vld [vmem:[%s8 + $0x80] sm:$0xff]
    %v3052 = vld [vmem:[%s8 + $0x88] sm:$0xff]
    %v3053 = vld [vmem:[%s8 + $0x90] sm:$0xff]
    %v3054 = vld [vmem:[%s8 + $0x98] sm:$0xff]
    %v3055 = vld [vmem:[%s8 + $0xa0] sm:$0xff]
    %v3056 = vld [vmem:[%s8 + $0xa8] sm:$0xff]
    %v3057 = vld [vmem:[%s8 + $0xb0] sm:$0xff]
    %v3058 = vld [vmem:[%s8 + $0xb8] sm:$0xff]
    %v3059 = vld [vmem:[%s8 + $0xc0] sm:$0xff]
    %v3060 = vld [vmem:[%s8 + $0xc8] sm:$0xff]
    %v3061 = vld [vmem:[%s8 + $0xd0] sm:$0xff]
    %v3062 = vld [vmem:[%s8 + $0xd8] sm:$0xff]
    %v3063 = vld [vmem:[%s8 + $0xe0] sm:$0xff]
    %v3064 = vld [vmem:[%s8 + $0xe8] sm:$0xff]
    %v3065 = vld [vmem:[%s8 + $0xf0] sm:$0xff]
    %v3066 = vld [vmem:[%s8 + $0xf8] sm:$0xff]
    %v3067 = vld [vmem:[%s8 + $0x100] sm:$0xff]
    %v3068 = vld [vmem:[%s8 + $0x108] sm:$0xff]
    %v3069 = vld [vmem:[%s8 + $0x110] sm:$0xff]
    %v3070 = vld [vmem:[%s8 + $0x118] sm:$0xff]
    %v3071 = vld [vmem:[%s8 + $0x120] sm:$0xff]
    %v3072 = vld [vmem:[%s8 + $0x128] sm:$0xff]
    %v3073 = vld [vmem:[%s8 + $0x130] sm:$0xff]
    %v3074 = vld [vmem:[%s8 + $0x138] sm:$0xff]
    %v3075 = vld [vmem:[%s8 + $0x140] sm:$0xff]
    %v3076 = vld [vmem:[%s8 + $0x148] sm:$0xff]
    %v3077 = vld [vmem:[%s8 + $0x150] sm:$0xff]
    %v3078 = vld [vmem:[%s8 + $0x158] sm:$0xff]
    %v3079 = vld [vmem:[%s8 + $0x160] sm:$0xff]
    %v3080 = vld [vmem:[%s8 + $0x168] sm:$0xff]
    %v3081 = vld [vmem:[%s8 + $0x170] sm:$0xff]
    %v3082 = vld [vmem:[%s8 + $0x178] sm:$0xff]
    %v3083 = vld [vmem:[%s8 + $0x180] sm:$0xff]
    %v3084 = vld [vmem:[%s8 + $0x188] sm:$0xff]
    %v3085 = vld [vmem:[%s8 + $0x190] sm:$0xff]
    %v3086 = vld [vmem:[%s8 + $0x198] sm:$0xff]
    %v3087 = vld [vmem:[%s8 + $0x1a0] sm:$0xff]
    %v3088 = vld [vmem:[%s8 + $0x1a8] sm:$0xff]
    %v3089 = vld [vmem:[%s8 + $0x1b0] sm:$0xff]
    %v3090 = vld [vmem:[%s8 + $0x1b8] sm:$0xff]
    %v3091 = vld [vmem:[%s8 + $0x1c0] sm:$0xff]
    %v3092 = vld [vmem:[%s8 + $0x1c8] sm:$0xff]
    %v3093 = vld [vmem:[%s8 + $0x1d0] sm:$0xff]
    %v3094 = vld [vmem:[%s8 + $0x1d8] sm:$0xff]
    %v3095 = vld [vmem:[%s8 + $0x1e0] sm:$0xff]
    %v3096 = vld [vmem:[%s8 + $0x1e8] sm:$0xff]
    %v3097 = vld [vmem:[%s8 + $0x1f0] sm:$0xff]
    %v3098 = vld [vmem:[%s8 + $0x1f8] sm:$0xff]
    %v3099 = vld [vmem:[%s9] sm:$0xff]
    %v3100 = vld [vmem:[%s9 + $0x8] sm:$0xff]
    %v3103 = vlaneseq
    %v3104 = vshrl.u32 %v3103, 7
    %v3105 = vsub.s32 0, %v3104
    %v3106 = vrot.slane %v3099, %v3105
    %v3107 = vlaneseq
    %v3108 = vshrl.u32 %v3107, 7
    %v3109 = vsub.s32 1, %v3108
    %v3110 = vrot.slane %v3099, %v3109
    %v3111 = vlaneseq
    %v3112 = vshrl.u32 %v3111, 7
    %v3113 = vsub.s32 2, %v3112
    %v3114 = vrot.slane %v3099, %v3113
    %v3115 = vlaneseq
    %v3116 = vshrl.u32 %v3115, 7
    %v3117 = vsub.s32 3, %v3116
    %v3118 = vrot.slane %v3099, %v3117
    %v3119 = vlaneseq
    %v3120 = vshrl.u32 %v3119, 7
    %v3121 = vsub.s32 4, %v3120
    %v3122 = vrot.slane %v3099, %v3121
    %v3123 = vlaneseq
    %v3124 = vshrl.u32 %v3123, 7
    %v3125 = vsub.s32 5, %v3124
    %v3126 = vrot.slane %v3099, %v3125
    %v3127 = vlaneseq
    %v3128 = vshrl.u32 %v3127, 7
    %v3129 = vsub.s32 6, %v3128
    %v3130 = vrot.slane %v3099, %v3129
    %v3131 = vlaneseq
    %v3132 = vshrl.u32 %v3131, 7
    %v3133 = vsub.s32 7, %v3132
    %v3134 = vrot.slane %v3099, %v3133
    %v3135 = vlaneseq
    %v3136 = vshrl.u32 %v3135, 7
    %v3137 = vsub.s32 0, %v3136
    %v3138 = vrot.slane %v3100, %v3137
    %v3139 = vlaneseq
    %v3140 = vshrl.u32 %v3139, 7
    %v3141 = vsub.s32 1, %v3140
    %v3142 = vrot.slane %v3100, %v3141
    %v3143 = vlaneseq
    %v3144 = vshrl.u32 %v3143, 7
    %v3145 = vsub.s32 2, %v3144
    %v3146 = vrot.slane %v3100, %v3145
    %v3147 = vlaneseq
    %v3148 = vshrl.u32 %v3147, 7
    %v3149 = vsub.s32 3, %v3148
    %v3150 = vrot.slane %v3100, %v3149
    %v3151 = vlaneseq
    %v3152 = vshrl.u32 %v3151, 7
    %v3153 = vsub.s32 4, %v3152
    %v3154 = vrot.slane %v3100, %v3153
    %v3155 = vlaneseq
    %v3156 = vshrl.u32 %v3155, 7
    %v3157 = vsub.s32 5, %v3156
    %v3158 = vrot.slane %v3100, %v3157
    %v3159 = vlaneseq
    %v3160 = vshrl.u32 %v3159, 7
    %v3161 = vsub.s32 6, %v3160
    %v3162 = vrot.slane %v3100, %v3161
    %v3163 = vlaneseq
    %v3164 = vshrl.u32 %v3163, 7
    %v3165 = vsub.s32 7, %v3164
    %v3166 = vrot.slane %v3100, %v3165
    %v3184 = vsel %vm61, %v3033, 0
    %v3187 = vsel %vm61, %v3034, 0
    %3189 = vmatprep.subr.mxu0 0.0
    %3190 = vmatpush1.msra.mxu0 0.0
    %3191 = vmatprep.subr.mxu0 0.0
    %3192 = vmatpush1.msra.mxu0 0.0
    %3193 = vmatprep.subr.mxu0 0.0
    %3194 = vmatpush1.msra.mxu0 0.0
    %3195 = vmatprep.subr.mxu0 0.0
    %3196 = vmatpush1.msra.mxu0 0.0
    %3197 = vmatprep.subr.mxu0 0.0
    %3198 = vmatpush1.msra.mxu0 0.0
    %3199 = vmatprep.subr.mxu0 0.0
    %3200 = vmatpush1.msra.mxu0 0.0
    %3201 = vmatprep.subr.mxu0 0.0
    %3202 = vmatpush1.msra.mxu0 0.0
    %3203 = vmatprep.subr.mxu0 0.0
    %3204 = vmatpush1.msra.mxu0 0.0
    %3205 = vmatprep.subr.mxu0 0.0
    %3206 = vmatpush1.msra.mxu0 0.0
    %3207 = vmatprep.subr.mxu0 0.0
    %3208 = vmatpush1.msra.mxu0 0.0
    %3209 = vmatprep.subr.mxu0 0.0
    %3210 = vmatpush1.msra.mxu0 0.0
    %3211 = vmatprep.subr.mxu0 0.0
    %3212 = vmatpush1.msra.mxu0 0.0
    %3213 = vmatprep.subr.mxu0 %v3084
    %3214 = vmatpush1.msra.mxu0 %v3083
    %3215 = vmatprep.subr.mxu0 %v3068
    %3216 = vmatpush1.msra.mxu0 %v3067
    %3217 = vmatprep.subr.mxu0 %v3052
    %3218 = vmatpush1.msra.mxu0 %v3051
    %3219 = vmatprep.subr.mxu0 %v3036
    %3220 = vmatpush1.msra.mxu0 %v3035
    %3221 = vmatprep.subr.mxu0 0.0
    %3222 = vmatpush2.msra.mxu0 0.0
    %3223 = vmatprep.subr.mxu0 0.0
    %3224 = vmatpush2.msra.mxu0 0.0
    %3225 = vmatprep.subr.mxu0 0.0
    %3226 = vmatpush2.msra.mxu0 0.0
    %3227 = vmatprep.subr.mxu0 0.0
    %3228 = vmatpush2.msra.mxu0 0.0
    %3229 = vmatprep.subr.mxu0 0.0
    %3230 = vmatpush2.msra.mxu0 0.0
    %3231 = vmatprep.subr.mxu0 0.0
    %3232 = vmatpush2.msra.mxu0 0.0
    %3233 = vmatprep.subr.mxu0 0.0
    %3234 = vmatpush2.msra.mxu0 0.0
    %3235 = vmatprep.subr.mxu0 0.0
    %3236 = vmatpush2.msra.mxu0 0.0
    %3237 = vmatprep.subr.mxu0 0.0
    %3238 = vmatpush2.msra.mxu0 0.0
    %3239 = vmatprep.subr.mxu0 0.0
    %3240 = vmatpush2.msra.mxu0 0.0
    %3241 = vmatprep.subr.mxu0 0.0
    %3242 = vmatpush2.msra.mxu0 0.0
    %3243 = vmatprep.subr.mxu0 0.0
    %3244 = vmatpush2.msra.mxu0 0.0
    %3245 = vmatprep.subr.mxu0 0.0
    %3246 = vmatpush2.msra.mxu0 0.0
    %3247 = vmatprep.subr.mxu0 0.0
    %3248 = vmatpush2.msra.mxu0 0.0
    %3249 = vmatprep.subr.mxu0 0.0
    %3250 = vmatpush2.msra.mxu0 0.0
    %3251 = vmatprep.subr.mxu0 0.0
    %3252 = vmatpush2.msra.mxu0 0.0
    %3253 = vmatprep.mubr.f32.mxu0 0.0
    %3254 = vmatmul.mubr.f32.gmra.mxu0 %v3184
    %v3255 = vpop.f32.mrf.mxu0
    %v3256 = vadd.f32 %v3106, %v3255
    %v3257 = vpop.f32.mrf.mxu0
    %v3258 = vadd.f32 %v3110, %v3257
    %3259 = vmatprep.mubr.f32.mxu0 0.0
    %3260 = vmatmul.mubr.f32.gmra.mxu0 %v3187
    %v3261 = vpop.f32.mrf.mxu0
    %v3262 = vadd.f32 %v3106, %v3261
    %v3263 = vpop.f32.mrf.mxu0
    %v3264 = vadd.f32 %v3110, %v3263
    %3265 = vdwg.mxu0
    %3266 = vmatprep.subr.mxu0 0.0
    %3267 = vmatpush1.msra.mxu0 0.0
    %3268 = vmatprep.subr.mxu0 0.0
    %3269 = vmatpush1.msra.mxu0 0.0
    %3270 = vmatprep.subr.mxu0 0.0
    %3271 = vmatpush1.msra.mxu0 0.0
    %3272 = vmatprep.subr.mxu0 0.0
    %3273 = vmatpush1.msra.mxu0 0.0
    %3274 = vmatprep.subr.mxu0 0.0
    %3275 = vmatpush1.msra.mxu0 0.0
    %3276 = vmatprep.subr.mxu0 0.0
    %3277 = vmatpush1.msra.mxu0 0.0
    %3278 = vmatprep.subr.mxu0 0.0
    %3279 = vmatpush1.msra.mxu0 0.0
    %3280 = vmatprep.subr.mxu0 0.0
    %3281 = vmatpush1.msra.mxu0 0.0
    %3282 = vmatprep.subr.mxu0 0.0
    %3283 = vmatpush1.msra.mxu0 0.0
    %3284 = vmatprep.subr.mxu0 0.0
    %3285 = vmatpush1.msra.mxu0 0.0
    %3286 = vmatprep.subr.mxu0 0.0
    %3287 = vmatpush1.msra.mxu0 0.0
    %3288 = vmatprep.subr.mxu0 0.0
    %3289 = vmatpush1.msra.mxu0 0.0
    %3290 = vmatprep.subr.mxu0 %v3086
    %3291 = vmatpush1.msra.mxu0 %v3085
    %3292 = vmatprep.subr.mxu0 %v3070
    %3293 = vmatpush1.msra.mxu0 %v3069
    %3294 = vmatprep.subr.mxu0 %v3054
    %3295 = vmatpush1.msra.mxu0 %v3053
    %3296 = vmatprep.subr.mxu0 %v3038
    %3297 = vmatpush1.msra.mxu0 %v3037
    %3298 = vmatprep.subr.mxu0 0.0
    %3299 = vmatpush2.msra.mxu0 0.0
    %3300 = vmatprep.subr.mxu0 0.0
    %3301 = vmatpush2.msra.mxu0 0.0
    %3302 = vmatprep.subr.mxu0 0.0
    %3303 = vmatpush2.msra.mxu0 0.0
    %3304 = vmatprep.subr.mxu0 0.0
    %3305 = vmatpush2.msra.mxu0 0.0
    %3306 = vmatprep.subr.mxu0 0.0
    %3307 = vmatpush2.msra.mxu0 0.0
    %3308 = vmatprep.subr.mxu0 0.0
    %3309 = vmatpush2.msra.mxu0 0.0
    %3310 = vmatprep.subr.mxu0 0.0
    %3311 = vmatpush2.msra.mxu0 0.0
    %3312 = vmatprep.subr.mxu0 0.0
    %3313 = vmatpush2.msra.mxu0 0.0
    %3314 = vmatprep.subr.mxu0 0.0
    %3315 = vmatpush2.msra.mxu0 0.0
    %3316 = vmatprep.subr.mxu0 0.0
    %3317 = vmatpush2.msra.mxu0 0.0
    %3318 = vmatprep.subr.mxu0 0.0
    %3319 = vmatpush2.msra.mxu0 0.0
    %3320 = vmatprep.subr.mxu0 0.0
    %3321 = vmatpush2.msra.mxu0 0.0
    %3322 = vmatprep.subr.mxu0 0.0
    %3323 = vmatpush2.msra.mxu0 0.0
    %3324 = vmatprep.subr.mxu0 0.0
    %3325 = vmatpush2.msra.mxu0 0.0
    %3326 = vmatprep.subr.mxu0 0.0
    %3327 = vmatpush2.msra.mxu0 0.0
    %3328 = vmatprep.subr.mxu0 0.0
    %3329 = vmatpush2.msra.mxu0 0.0
    %3330 = vmatprep.mubr.f32.mxu0 0.0
    %3331 = vmatmul.mubr.f32.gmra.mxu0 %v3184
    %v3332 = vpop.f32.mrf.mxu0
    %v3333 = vadd.f32 %v3114, %v3332
    %v3334 = vpop.f32.mrf.mxu0
    %v3335 = vadd.f32 %v3118, %v3334
    %3336 = vmatprep.mubr.f32.mxu0 0.0
    %3337 = vmatmul.mubr.f32.gmra.mxu0 %v3187
    %v3338 = vpop.f32.mrf.mxu0
    %v3339 = vadd.f32 %v3114, %v3338
    %v3340 = vpop.f32.mrf.mxu0
    %v3341 = vadd.f32 %v3118, %v3340
    %3342 = vdwg.mxu0
    %3343 = vmatprep.subr.mxu0 0.0
    %3344 = vmatpush1.msra.mxu0 0.0
    %3345 = vmatprep.subr.mxu0 0.0
    %3346 = vmatpush1.msra.mxu0 0.0
    %3347 = vmatprep.subr.mxu0 0.0
    %3348 = vmatpush1.msra.mxu0 0.0
    %3349 = vmatprep.subr.mxu0 0.0
    %3350 = vmatpush1.msra.mxu0 0.0
    %3351 = vmatprep.subr.mxu0 0.0
    %3352 = vmatpush1.msra.mxu0 0.0
    %3353 = vmatprep.subr.mxu0 0.0
    %3354 = vmatpush1.msra.mxu0 0.0
    %3355 = vmatprep.subr.mxu0 0.0
    %3356 = vmatpush1.msra.mxu0 0.0
    %3357 = vmatprep.subr.mxu0 0.0
    %3358 = vmatpush1.msra.mxu0 0.0
    %3359 = vmatprep.subr.mxu0 0.0
    %3360 = vmatpush1.msra.mxu0 0.0
    %3361 = vmatprep.subr.mxu0 0.0
    %3362 = vmatpush1.msra.mxu0 0.0
    %3363 = vmatprep.subr.mxu0 0.0
    %3364 = vmatpush1.msra.mxu0 0.0
    %3365 = vmatprep.subr.mxu0 0.0
    %3366 = vmatpush1.msra.mxu0 0.0
    %3367 = vmatprep.subr.mxu0 %v3088
    %3368 = vmatpush1.msra.mxu0 %v3087
    %3369 = vmatprep.subr.mxu0 %v3072
    %3370 = vmatpush1.msra.mxu0 %v3071
    %3371 = vmatprep.subr.mxu0 %v3056
    %3372 = vmatpush1.msra.mxu0 %v3055
    %3373 = vmatprep.subr.mxu0 %v3040
    %3374 = vmatpush1.msra.mxu0 %v3039
    %3375 = vmatprep.subr.mxu0 0.0
    %3376 = vmatpush2.msra.mxu0 0.0
    %3377 = vmatprep.subr.mxu0 0.0
    %3378 = vmatpush2.msra.mxu0 0.0
    %3379 = vmatprep.subr.mxu0 0.0
    %3380 = vmatpush2.msra.mxu0 0.0
    %3381 = vmatprep.subr.mxu0 0.0
    %3382 = vmatpush2.msra.mxu0 0.0
    %3383 = vmatprep.subr.mxu0 0.0
    %3384 = vmatpush2.msra.mxu0 0.0
    %3385 = vmatprep.subr.mxu0 0.0
    %3386 = vmatpush2.msra.mxu0 0.0
    %3387 = vmatprep.subr.mxu0 0.0
    %3388 = vmatpush2.msra.mxu0 0.0
    %3389 = vmatprep.subr.mxu0 0.0
    %3390 = vmatpush2.msra.mxu0 0.0
    %3391 = vmatprep.subr.mxu0 0.0
    %3392 = vmatpush2.msra.mxu0 0.0
    %3393 = vmatprep.subr.mxu0 0.0
    %3394 = vmatpush2.msra.mxu0 0.0
    %3395 = vmatprep.subr.mxu0 0.0
    %3396 = vmatpush2.msra.mxu0 0.0
    %3397 = vmatprep.subr.mxu0 0.0
    %3398 = vmatpush2.msra.mxu0 0.0
    %3399 = vmatprep.subr.mxu0 0.0
    %3400 = vmatpush2.msra.mxu0 0.0
    %3401 = vmatprep.subr.mxu0 0.0
    %3402 = vmatpush2.msra.mxu0 0.0
    %3403 = vmatprep.subr.mxu0 0.0
    %3404 = vmatpush2.msra.mxu0 0.0
    %3405 = vmatprep.subr.mxu0 0.0
    %3406 = vmatpush2.msra.mxu0 0.0
    %3407 = vmatprep.mubr.f32.mxu0 0.0
    %3408 = vmatmul.mubr.f32.gmra.mxu0 %v3184
    %v3409 = vpop.f32.mrf.mxu0
    %v3410 = vadd.f32 %v3122, %v3409
    %v3411 = vpop.f32.mrf.mxu0
    %v3412 = vadd.f32 %v3126, %v3411
    %3413 = vmatprep.mubr.f32.mxu0 0.0
    %3414 = vmatmul.mubr.f32.gmra.mxu0 %v3187
    %v3415 = vpop.f32.mrf.mxu0
    %v3416 = vadd.f32 %v3122, %v3415
    %v3417 = vpop.f32.mrf.mxu0
    %v3418 = vadd.f32 %v3126, %v3417
    %3419 = vdwg.mxu0
    %3420 = vmatprep.subr.mxu0 0.0
    %3421 = vmatpush1.msra.mxu0 0.0
    %3422 = vmatprep.subr.mxu0 0.0
    %3423 = vmatpush1.msra.mxu0 0.0
    %3424 = vmatprep.subr.mxu0 0.0
    %3425 = vmatpush1.msra.mxu0 0.0
    %3426 = vmatprep.subr.mxu0 0.0
    %3427 = vmatpush1.msra.mxu0 0.0
    %3428 = vmatprep.subr.mxu0 0.0
    %3429 = vmatpush1.msra.mxu0 0.0
    %3430 = vmatprep.subr.mxu0 0.0
    %3431 = vmatpush1.msra.mxu0 0.0
    %3432 = vmatprep.subr.mxu0 0.0
    %3433 = vmatpush1.msra.mxu0 0.0
    %3434 = vmatprep.subr.mxu0 0.0
    %3435 = vmatpush1.msra.mxu0 0.0
    %3436 = vmatprep.subr.mxu0 0.0
    %3437 = vmatpush1.msra.mxu0 0.0
    %3438 = vmatprep.subr.mxu0 0.0
    %3439 = vmatpush1.msra.mxu0 0.0
    %3440 = vmatprep.subr.mxu0 0.0
    %3441 = vmatpush1.msra.mxu0 0.0
    %3442 = vmatprep.subr.mxu0 0.0
    %3443 = vmatpush1.msra.mxu0 0.0
    %3444 = vmatprep.subr.mxu0 %v3090
    %3445 = vmatpush1.msra.mxu0 %v3089
    %3446 = vmatprep.subr.mxu0 %v3074
    %3447 = vmatpush1.msra.mxu0 %v3073
    %3448 = vmatprep.subr.mxu0 %v3058
    %3449 = vmatpush1.msra.mxu0 %v3057
    %3450 = vmatprep.subr.mxu0 %v3042
    %3451 = vmatpush1.msra.mxu0 %v3041
    %3452 = vmatprep.subr.mxu0 0.0
    %3453 = vmatpush2.msra.mxu0 0.0
    %3454 = vmatprep.subr.mxu0 0.0
    %3455 = vmatpush2.msra.mxu0 0.0
    %3456 = vmatprep.subr.mxu0 0.0
    %3457 = vmatpush2.msra.mxu0 0.0
    %3458 = vmatprep.subr.mxu0 0.0
    %3459 = vmatpush2.msra.mxu0 0.0
    %3460 = vmatprep.subr.mxu0 0.0
    %3461 = vmatpush2.msra.mxu0 0.0
    %3462 = vmatprep.subr.mxu0 0.0
    %3463 = vmatpush2.msra.mxu0 0.0
    %3464 = vmatprep.subr.mxu0 0.0
    %3465 = vmatpush2.msra.mxu0 0.0
    %3466 = vmatprep.subr.mxu0 0.0
    %3467 = vmatpush2.msra.mxu0 0.0
    %3468 = vmatprep.subr.mxu0 0.0
    %3469 = vmatpush2.msra.mxu0 0.0
    %3470 = vmatprep.subr.mxu0 0.0
    %3471 = vmatpush2.msra.mxu0 0.0
    %3472 = vmatprep.subr.mxu0 0.0
    %3473 = vmatpush2.msra.mxu0 0.0
    %3474 = vmatprep.subr.mxu0 0.0
    %3475 = vmatpush2.msra.mxu0 0.0
    %3476 = vmatprep.subr.mxu0 0.0
    %3477 = vmatpush2.msra.mxu0 0.0
    %3478 = vmatprep.subr.mxu0 0.0
    %3479 = vmatpush2.msra.mxu0 0.0
    %3480 = vmatprep.subr.mxu0 0.0
    %3481 = vmatpush2.msra.mxu0 0.0
    %3482 = vmatprep.subr.mxu0 0.0
    %3483 = vmatpush2.msra.mxu0 0.0
    %3484 = vmatprep.mubr.f32.mxu0 0.0
    %3485 = vmatmul.mubr.f32.gmra.mxu0 %v3184
    %v3486 = vpop.f32.mrf.mxu0
    %v3487 = vadd.f32 %v3130, %v3486
    %v3488 = vpop.f32.mrf.mxu0
    %v3489 = vadd.f32 %v3134, %v3488
    %3490 = vmatprep.mubr.f32.mxu0 0.0
    %3491 = vmatmul.mubr.f32.gmra.mxu0 %v3187
    %v3492 = vpop.f32.mrf.mxu0
    %v3493 = vadd.f32 %v3130, %v3492
    %v3494 = vpop.f32.mrf.mxu0
    %v3495 = vadd.f32 %v3134, %v3494
    %3496 = vdwg.mxu0
    %3497 = vmatprep.subr.mxu0 0.0
    %3498 = vmatpush1.msra.mxu0 0.0
    %3499 = vmatprep.subr.mxu0 0.0
    %3500 = vmatpush1.msra.mxu0 0.0
    %3501 = vmatprep.subr.mxu0 0.0
    %3502 = vmatpush1.msra.mxu0 0.0
    %3503 = vmatprep.subr.mxu0 0.0
    %3504 = vmatpush1.msra.mxu0 0.0
    %3505 = vmatprep.subr.mxu0 0.0
    %3506 = vmatpush1.msra.mxu0 0.0
    %3507 = vmatprep.subr.mxu0 0.0
    %3508 = vmatpush1.msra.mxu0 0.0
    %3509 = vmatprep.subr.mxu0 0.0
    %3510 = vmatpush1.msra.mxu0 0.0
    %3511 = vmatprep.subr.mxu0 0.0
    %3512 = vmatpush1.msra.mxu0 0.0
    %3513 = vmatprep.subr.mxu0 0.0
    %3514 = vmatpush1.msra.mxu0 0.0
    %3515 = vmatprep.subr.mxu0 0.0
    %3516 = vmatpush1.msra.mxu0 0.0
    %3517 = vmatprep.subr.mxu0 0.0
    %3518 = vmatpush1.msra.mxu0 0.0
    %3519 = vmatprep.subr.mxu0 0.0
    %3520 = vmatpush1.msra.mxu0 0.0
    %3521 = vmatprep.subr.mxu0 %v3092
    %3522 = vmatpush1.msra.mxu0 %v3091
    %3523 = vmatprep.subr.mxu0 %v3076
    %3524 = vmatpush1.msra.mxu0 %v3075
    %3525 = vmatprep.subr.mxu0 %v3060
    %3526 = vmatpush1.msra.mxu0 %v3059
    %3527 = vmatprep.subr.mxu0 %v3044
    %3528 = vmatpush1.msra.mxu0 %v3043
    %3529 = vmatprep.subr.mxu0 0.0
    %3530 = vmatpush2.msra.mxu0 0.0
    %3531 = vmatprep.subr.mxu0 0.0
    %3532 = vmatpush2.msra.mxu0 0.0
    %3533 = vmatprep.subr.mxu0 0.0
    %3534 = vmatpush2.msra.mxu0 0.0
    %3535 = vmatprep.subr.mxu0 0.0
    %3536 = vmatpush2.msra.mxu0 0.0
    %3537 = vmatprep.subr.mxu0 0.0
    %3538 = vmatpush2.msra.mxu0 0.0
    %3539 = vmatprep.subr.mxu0 0.0
    %3540 = vmatpush2.msra.mxu0 0.0
    %3541 = vmatprep.subr.mxu0 0.0
    %3542 = vmatpush2.msra.mxu0 0.0
    %3543 = vmatprep.subr.mxu0 0.0
    %3544 = vmatpush2.msra.mxu0 0.0
    %3545 = vmatprep.subr.mxu0 0.0
    %3546 = vmatpush2.msra.mxu0 0.0
    %3547 = vmatprep.subr.mxu0 0.0
    %3548 = vmatpush2.msra.mxu0 0.0
    %3549 = vmatprep.subr.mxu0 0.0
    %3550 = vmatpush2.msra.mxu0 0.0
    %3551 = vmatprep.subr.mxu0 0.0
    %3552 = vmatpush2.msra.mxu0 0.0
    %3553 = vmatprep.subr.mxu0 0.0
    %3554 = vmatpush2.msra.mxu0 0.0
    %3555 = vmatprep.subr.mxu0 0.0
    %3556 = vmatpush2.msra.mxu0 0.0
    %3557 = vmatprep.subr.mxu0 0.0
    %3558 = vmatpush2.msra.mxu0 0.0
    %3559 = vmatprep.subr.mxu0 0.0
    %3560 = vmatpush2.msra.mxu0 0.0
    %3561 = vmatprep.mubr.f32.mxu0 0.0
    %3562 = vmatmul.mubr.f32.gmra.mxu0 %v3184
    %v3563 = vpop.f32.mrf.mxu0
    %v3564 = vadd.f32 %v3138, %v3563
    %v3565 = vpop.f32.mrf.mxu0
    %v3566 = vadd.f32 %v3142, %v3565
    %3567 = vmatprep.mubr.f32.mxu0 0.0
    %3568 = vmatmul.mubr.f32.gmra.mxu0 %v3187
    %v3569 = vpop.f32.mrf.mxu0
    %v3570 = vadd.f32 %v3138, %v3569
    %v3571 = vpop.f32.mrf.mxu0
    %v3572 = vadd.f32 %v3142, %v3571
    %3573 = vdwg.mxu0
    %3574 = vmatprep.subr.mxu0 0.0
    %3575 = vmatpush1.msra.mxu0 0.0
    %3576 = vmatprep.subr.mxu0 0.0
    %3577 = vmatpush1.msra.mxu0 0.0
    %3578 = vmatprep.subr.mxu0 0.0
    %3579 = vmatpush1.msra.mxu0 0.0
    %3580 = vmatprep.subr.mxu0 0.0
    %3581 = vmatpush1.msra.mxu0 0.0
    %3582 = vmatprep.subr.mxu0 0.0
    %3583 = vmatpush1.msra.mxu0 0.0
    %3584 = vmatprep.subr.mxu0 0.0
    %3585 = vmatpush1.msra.mxu0 0.0
    %3586 = vmatprep.subr.mxu0 0.0
    %3587 = vmatpush1.msra.mxu0 0.0
    %3588 = vmatprep.subr.mxu0 0.0
    %3589 = vmatpush1.msra.mxu0 0.0
    %3590 = vmatprep.subr.mxu0 0.0
    %3591 = vmatpush1.msra.mxu0 0.0
    %3592 = vmatprep.subr.mxu0 0.0
    %3593 = vmatpush1.msra.mxu0 0.0
    %3594 = vmatprep.subr.mxu0 0.0
    %3595 = vmatpush1.msra.mxu0 0.0
    %3596 = vmatprep.subr.mxu0 0.0
    %3597 = vmatpush1.msra.mxu0 0.0
    %3598 = vmatprep.subr.mxu0 %v3094
    %3599 = vmatpush1.msra.mxu0 %v3093
    %3600 = vmatprep.subr.mxu0 %v3078
    %3601 = vmatpush1.msra.mxu0 %v3077
    %3602 = vmatprep.subr.mxu0 %v3062
    %3603 = vmatpush1.msra.mxu0 %v3061
    %3604 = vmatprep.subr.mxu0 %v3046
    %3605 = vmatpush1.msra.mxu0 %v3045
    %3606 = vmatprep.subr.mxu0 0.0
    %3607 = vmatpush2.msra.mxu0 0.0
    %3608 = vmatprep.subr.mxu0 0.0
    %3609 = vmatpush2.msra.mxu0 0.0
    %3610 = vmatprep.subr.mxu0 0.0
    %3611 = vmatpush2.msra.mxu0 0.0
    %3612 = vmatprep.subr.mxu0 0.0
    %3613 = vmatpush2.msra.mxu0 0.0
    %3614 = vmatprep.subr.mxu0 0.0
    %3615 = vmatpush2.msra.mxu0 0.0
    %3616 = vmatprep.subr.mxu0 0.0
    %3617 = vmatpush2.msra.mxu0 0.0
    %3618 = vmatprep.subr.mxu0 0.0
    %3619 = vmatpush2.msra.mxu0 0.0
    %3620 = vmatprep.subr.mxu0 0.0
    %3621 = vmatpush2.msra.mxu0 0.0
    %3622 = vmatprep.subr.mxu0 0.0
    %3623 = vmatpush2.msra.mxu0 0.0
    %3624 = vmatprep.subr.mxu0 0.0
    %3625 = vmatpush2.msra.mxu0 0.0
    %3626 = vmatprep.subr.mxu0 0.0
    %3627 = vmatpush2.msra.mxu0 0.0
    %3628 = vmatprep.subr.mxu0 0.0
    %3629 = vmatpush2.msra.mxu0 0.0
    %3630 = vmatprep.subr.mxu0 0.0
    %3631 = vmatpush2.msra.mxu0 0.0
    %3632 = vmatprep.subr.mxu0 0.0
    %3633 = vmatpush2.msra.mxu0 0.0
    %3634 = vmatprep.subr.mxu0 0.0
    %3635 = vmatpush2.msra.mxu0 0.0
    %3636 = vmatprep.subr.mxu0 0.0
    %3637 = vmatpush2.msra.mxu0 0.0
    %3638 = vmatprep.mubr.f32.mxu0 0.0
    %3639 = vmatmul.mubr.f32.gmra.mxu0 %v3184
    %v3640 = vpop.f32.mrf.mxu0
    %v3641 = vadd.f32 %v3146, %v3640
    %v3642 = vpop.f32.mrf.mxu0
    %v3643 = vadd.f32 %v3150, %v3642
    %3644 = vmatprep.mubr.f32.mxu0 0.0
    %3645 = vmatmul.mubr.f32.gmra.mxu0 %v3187
    %v3646 = vpop.f32.mrf.mxu0
    %v3647 = vadd.f32 %v3146, %v3646
    %v3648 = vpop.f32.mrf.mxu0
    %v3649 = vadd.f32 %v3150, %v3648
    %3650 = vdwg.mxu0
    %3651 = vmatprep.subr.mxu0 0.0
    %3652 = vmatpush1.msra.mxu0 0.0
    %3653 = vmatprep.subr.mxu0 0.0
    %3654 = vmatpush1.msra.mxu0 0.0
    %3655 = vmatprep.subr.mxu0 0.0
    %3656 = vmatpush1.msra.mxu0 0.0
    %3657 = vmatprep.subr.mxu0 0.0
    %3658 = vmatpush1.msra.mxu0 0.0
    %3659 = vmatprep.subr.mxu0 0.0
    %3660 = vmatpush1.msra.mxu0 0.0
    %3661 = vmatprep.subr.mxu0 0.0
    %3662 = vmatpush1.msra.mxu0 0.0
    %3663 = vmatprep.subr.mxu0 0.0
    %3664 = vmatpush1.msra.mxu0 0.0
    %3665 = vmatprep.subr.mxu0 0.0
    %3666 = vmatpush1.msra.mxu0 0.0
    %3667 = vmatprep.subr.mxu0 0.0
    %3668 = vmatpush1.msra.mxu0 0.0
    %3669 = vmatprep.subr.mxu0 0.0
    %3670 = vmatpush1.msra.mxu0 0.0
    %3671 = vmatprep.subr.mxu0 0.0
    %3672 = vmatpush1.msra.mxu0 0.0
    %3673 = vmatprep.subr.mxu0 0.0
    %3674 = vmatpush1.msra.mxu0 0.0
    %3675 = vmatprep.subr.mxu0 %v3096
    %3676 = vmatpush1.msra.mxu0 %v3095
    %3677 = vmatprep.subr.mxu0 %v3080
    %3678 = vmatpush1.msra.mxu0 %v3079
    %3679 = vmatprep.subr.mxu0 %v3064
    %3680 = vmatpush1.msra.mxu0 %v3063
    %3681 = vmatprep.subr.mxu0 %v3048
    %3682 = vmatpush1.msra.mxu0 %v3047
    %3683 = vmatprep.subr.mxu0 0.0
    %3684 = vmatpush2.msra.mxu0 0.0
    %3685 = vmatprep.subr.mxu0 0.0
    %3686 = vmatpush2.msra.mxu0 0.0
    %3687 = vmatprep.subr.mxu0 0.0
    %3688 = vmatpush2.msra.mxu0 0.0
    %3689 = vmatprep.subr.mxu0 0.0
    %3690 = vmatpush2.msra.mxu0 0.0
    %3691 = vmatprep.subr.mxu0 0.0
    %3692 = vmatpush2.msra.mxu0 0.0
    %3693 = vmatprep.subr.mxu0 0.0
    %3694 = vmatpush2.msra.mxu0 0.0
    %3695 = vmatprep.subr.mxu0 0.0
    %3696 = vmatpush2.msra.mxu0 0.0
    %3697 = vmatprep.subr.mxu0 0.0
    %3698 = vmatpush2.msra.mxu0 0.0
    %3699 = vmatprep.subr.mxu0 0.0
    %3700 = vmatpush2.msra.mxu0 0.0
    %3701 = vmatprep.subr.mxu0 0.0
    %3702 = vmatpush2.msra.mxu0 0.0
    %3703 = vmatprep.subr.mxu0 0.0
    %3704 = vmatpush2.msra.mxu0 0.0
    %3705 = vmatprep.subr.mxu0 0.0
    %3706 = vmatpush2.msra.mxu0 0.0
    %3707 = vmatprep.subr.mxu0 0.0
    %3708 = vmatpush2.msra.mxu0 0.0
    %3709 = vmatprep.subr.mxu0 0.0
    %3710 = vmatpush2.msra.mxu0 0.0
    %3711 = vmatprep.subr.mxu0 0.0
    %3712 = vmatpush2.msra.mxu0 0.0
    %3713 = vmatprep.subr.mxu0 0.0
    %3714 = vmatpush2.msra.mxu0 0.0
    %3715 = vmatprep.mubr.f32.mxu0 0.0
    %3716 = vmatmul.mubr.f32.gmra.mxu0 %v3184
    %v3717 = vpop.f32.mrf.mxu0
    %v3718 = vadd.f32 %v3154, %v3717
    %v3719 = vpop.f32.mrf.mxu0
    %v3720 = vadd.f32 %v3158, %v3719
    %3721 = vmatprep.mubr.f32.mxu0 0.0
    %3722 = vmatmul.mubr.f32.gmra.mxu0 %v3187
    %v3723 = vpop.f32.mrf.mxu0
    %v3724 = vadd.f32 %v3154, %v3723
    %v3725 = vpop.f32.mrf.mxu0
    %v3726 = vadd.f32 %v3158, %v3725
    %3727 = vdwg.mxu0
    %3728 = vmatprep.subr.mxu0 0.0
    %3729 = vmatpush1.msra.mxu0 0.0
    %3730 = vmatprep.subr.mxu0 0.0
    %3731 = vmatpush1.msra.mxu0 0.0
    %3732 = vmatprep.subr.mxu0 0.0
    %3733 = vmatpush1.msra.mxu0 0.0
    %3734 = vmatprep.subr.mxu0 0.0
    %3735 = vmatpush1.msra.mxu0 0.0
    %3736 = vmatprep.subr.mxu0 0.0
    %3737 = vmatpush1.msra.mxu0 0.0
    %3738 = vmatprep.subr.mxu0 0.0
    %3739 = vmatpush1.msra.mxu0 0.0
    %3740 = vmatprep.subr.mxu0 0.0
    %3741 = vmatpush1.msra.mxu0 0.0
    %3742 = vmatprep.subr.mxu0 0.0
    %3743 = vmatpush1.msra.mxu0 0.0
    %3744 = vmatprep.subr.mxu0 0.0
    %3745 = vmatpush1.msra.mxu0 0.0
    %3746 = vmatprep.subr.mxu0 0.0
    %3747 = vmatpush1.msra.mxu0 0.0
    %3748 = vmatprep.subr.mxu0 0.0
    %3749 = vmatpush1.msra.mxu0 0.0
    %3750 = vmatprep.subr.mxu0 0.0
    %3751 = vmatpush1.msra.mxu0 0.0
    %3752 = vmatprep.subr.mxu0 %v3098
    %3753 = vmatpush1.msra.mxu0 %v3097
    %3754 = vmatprep.subr.mxu0 %v3082
    %3755 = vmatpush1.msra.mxu0 %v3081
    %3756 = vmatprep.subr.mxu0 %v3066
    %3757 = vmatpush1.msra.mxu0 %v3065
    %3758 = vmatprep.subr.mxu0 %v3050
    %3759 = vmatpush1.msra.mxu0 %v3049
    %3760 = vmatprep.subr.mxu0 0.0
    %3761 = vmatpush2.msra.mxu0 0.0
    %3762 = vmatprep.subr.mxu0 0.0
    %3763 = vmatpush2.msra.mxu0 0.0
    %3764 = vmatprep.subr.mxu0 0.0
    %3765 = vmatpush2.msra.mxu0 0.0
    %3766 = vmatprep.subr.mxu0 0.0
    %3767 = vmatpush2.msra.mxu0 0.0
    %3768 = vmatprep.subr.mxu0 0.0
    %3769 = vmatpush2.msra.mxu0 0.0
    %3770 = vmatprep.subr.mxu0 0.0
    %3771 = vmatpush2.msra.mxu0 0.0
    %3772 = vmatprep.subr.mxu0 0.0
    %3773 = vmatpush2.msra.mxu0 0.0
    %3774 = vmatprep.subr.mxu0 0.0
    %3775 = vmatpush2.msra.mxu0 0.0
    %3776 = vmatprep.subr.mxu0 0.0
    %3777 = vmatpush2.msra.mxu0 0.0
    %3778 = vmatprep.subr.mxu0 0.0
    %3779 = vmatpush2.msra.mxu0 0.0
    %3780 = vmatprep.subr.mxu0 0.0
    %3781 = vmatpush2.msra.mxu0 0.0
    %3782 = vmatprep.subr.mxu0 0.0
    %3783 = vmatpush2.msra.mxu0 0.0
    %3784 = vmatprep.subr.mxu0 0.0
    %3785 = vmatpush2.msra.mxu0 0.0
    %3786 = vmatprep.subr.mxu0 0.0
    %3787 = vmatpush2.msra.mxu0 0.0
    %3788 = vmatprep.subr.mxu0 0.0
    %3789 = vmatpush2.msra.mxu0 0.0
    %3790 = vmatprep.subr.mxu0 0.0
    %3791 = vmatpush2.msra.mxu0 0.0
    %3792 = vmatprep.mubr.f32.mxu0 0.0
    %3793 = vmatmul.mubr.f32.gmra.mxu0 %v3184
    %v3794 = vpop.f32.mrf.mxu0
    %v3795 = vadd.f32 %v3162, %v3794
    %v3796 = vpop.f32.mrf.mxu0
    %v3797 = vadd.f32 %v3166, %v3796
    %3798 = vmatprep.mubr.f32.mxu0 0.0
    %3799 = vmatmul.mubr.f32.gmra.mxu0 %v3187
    %v3800 = vpop.f32.mrf.mxu0
    %v3801 = vadd.f32 %v3162, %v3800
    %v3802 = vpop.f32.mrf.mxu0
    %v3803 = vadd.f32 %v3166, %v3802
    %3804 = vdwg.mxu0
    %v3805 = vmax.f32 %v3256, 0.0
    %v3806 = vmax.f32 %v3258, 0.0
    %v3807 = vmax.f32 %v3333, 0.0
    %v3808 = vmax.f32 %v3335, 0.0
    %v3809 = vmax.f32 %v3410, 0.0
    %v3810 = vmax.f32 %v3412, 0.0
    %v3811 = vmax.f32 %v3487, 0.0
    %v3812 = vmax.f32 %v3489, 0.0
    %v3813 = vmax.f32 %v3564, 0.0
    %v3814 = vmax.f32 %v3566, 0.0
    %v3815 = vmax.f32 %v3641, 0.0
    %v3816 = vmax.f32 %v3643, 0.0
    %v3817 = vmax.f32 %v3718, 0.0
    %v3818 = vmax.f32 %v3720, 0.0
    %v3819 = vmax.f32 %v3795, 0.0
    %v3820 = vmax.f32 %v3797, 0.0
    %v3821 = vmax.f32 %v3262, 0.0
    %v3822 = vmax.f32 %v3264, 0.0
    %v3823 = vmax.f32 %v3339, 0.0
    %v3824 = vmax.f32 %v3341, 0.0
    %v3825 = vmax.f32 %v3416, 0.0
    %v3826 = vmax.f32 %v3418, 0.0
    %v3827 = vmax.f32 %v3493, 0.0
    %v3828 = vmax.f32 %v3495, 0.0
    %v3829 = vmax.f32 %v3570, 0.0
    %v3830 = vmax.f32 %v3572, 0.0
    %v3831 = vmax.f32 %v3647, 0.0
    %v3832 = vmax.f32 %v3649, 0.0
    %v3833 = vmax.f32 %v3724, 0.0
    %v3834 = vmax.f32 %v3726, 0.0
    %v3835 = vmax.f32 %v3801, 0.0
    %v3836 = vmax.f32 %v3803, 0.0
    %v3837 = vld [vmem:[%s10] sm:$0xff]
    %v3838 = vld [vmem:[%s10 + $0x8] sm:$0xff]
    %v3839 = vld [vmem:[%s10 + $0x10] sm:$0xff]
    %v3840 = vld [vmem:[%s10 + $0x18] sm:$0xff]
    %v3841 = vld [vmem:[%s10 + $0x20] sm:$0xff]
    %v3842 = vld [vmem:[%s10 + $0x28] sm:$0xff]
    %v3843 = vld [vmem:[%s10 + $0x30] sm:$0xff]
    %v3844 = vld [vmem:[%s10 + $0x38] sm:$0xff]
    %v3845 = vld [vmem:[%s10 + $0x40] sm:$0xff]
    %v3846 = vld [vmem:[%s10 + $0x48] sm:$0xff]
    %v3847 = vld [vmem:[%s10 + $0x50] sm:$0xff]
    %v3848 = vld [vmem:[%s10 + $0x58] sm:$0xff]
    %v3849 = vld [vmem:[%s10 + $0x60] sm:$0xff]
    %v3850 = vld [vmem:[%s10 + $0x68] sm:$0xff]
    %v3851 = vld [vmem:[%s10 + $0x70] sm:$0xff]
    %v3852 = vld [vmem:[%s10 + $0x78] sm:$0xff]
    %v3853 = vld [vmem:[%s10 + $0x80] sm:$0xff]
    %v3854 = vld [vmem:[%s10 + $0x88] sm:$0xff]
    %v3855 = vld [vmem:[%s10 + $0x90] sm:$0xff]
    %v3856 = vld [vmem:[%s10 + $0x98] sm:$0xff]
    %v3857 = vld [vmem:[%s10 + $0xa0] sm:$0xff]
    %v3858 = vld [vmem:[%s10 + $0xa8] sm:$0xff]
    %v3859 = vld [vmem:[%s10 + $0xb0] sm:$0xff]
    %v3860 = vld [vmem:[%s10 + $0xb8] sm:$0xff]
    %v3861 = vld [vmem:[%s10 + $0xc0] sm:$0xff]
    %v3862 = vld [vmem:[%s10 + $0xc8] sm:$0xff]
    %v3863 = vld [vmem:[%s10 + $0xd0] sm:$0xff]
    %v3864 = vld [vmem:[%s10 + $0xd8] sm:$0xff]
    %v3865 = vld [vmem:[%s10 + $0xe0] sm:$0xff]
    %v3866 = vld [vmem:[%s10 + $0xe8] sm:$0xff]
    %v3867 = vld [vmem:[%s10 + $0xf0] sm:$0xff]
    %v3868 = vld [vmem:[%s10 + $0xf8] sm:$0xff]
    %v3869 = vld [vmem:[%s10 + $0x100] sm:$0xff]
    %v3870 = vld [vmem:[%s10 + $0x108] sm:$0xff]
    %v3871 = vld [vmem:[%s10 + $0x110] sm:$0xff]
    %v3872 = vld [vmem:[%s10 + $0x118] sm:$0xff]
    %v3873 = vld [vmem:[%s10 + $0x120] sm:$0xff]
    %v3874 = vld [vmem:[%s10 + $0x128] sm:$0xff]
    %v3875 = vld [vmem:[%s10 + $0x130] sm:$0xff]
    %v3876 = vld [vmem:[%s10 + $0x138] sm:$0xff]
    %v3877 = vld [vmem:[%s10 + $0x140] sm:$0xff]
    %v3878 = vld [vmem:[%s10 + $0x148] sm:$0xff]
    %v3879 = vld [vmem:[%s10 + $0x150] sm:$0xff]
    %v3880 = vld [vmem:[%s10 + $0x158] sm:$0xff]
    %v3881 = vld [vmem:[%s10 + $0x160] sm:$0xff]
    %v3882 = vld [vmem:[%s10 + $0x168] sm:$0xff]
    %v3883 = vld [vmem:[%s10 + $0x170] sm:$0xff]
    %v3884 = vld [vmem:[%s10 + $0x178] sm:$0xff]
    %v3885 = vld [vmem:[%s10 + $0x180] sm:$0xff]
    %v3886 = vld [vmem:[%s10 + $0x188] sm:$0xff]
    %v3887 = vld [vmem:[%s10 + $0x190] sm:$0xff]
    %v3888 = vld [vmem:[%s10 + $0x198] sm:$0xff]
    %v3889 = vld [vmem:[%s10 + $0x1a0] sm:$0xff]
    %v3890 = vld [vmem:[%s10 + $0x1a8] sm:$0xff]
    %v3891 = vld [vmem:[%s10 + $0x1b0] sm:$0xff]
    %v3892 = vld [vmem:[%s10 + $0x1b8] sm:$0xff]
    %v3893 = vld [vmem:[%s10 + $0x1c0] sm:$0xff]
    %v3894 = vld [vmem:[%s10 + $0x1c8] sm:$0xff]
    %v3895 = vld [vmem:[%s10 + $0x1d0] sm:$0xff]
    %v3896 = vld [vmem:[%s10 + $0x1d8] sm:$0xff]
    %v3897 = vld [vmem:[%s10 + $0x1e0] sm:$0xff]
    %v3898 = vld [vmem:[%s10 + $0x1e8] sm:$0xff]
    %v3899 = vld [vmem:[%s10 + $0x1f0] sm:$0xff]
    %v3900 = vld [vmem:[%s10 + $0x1f8] sm:$0xff]
    %v3901 = vld [vmem:[%s10 + $0x200] sm:$0xff]
    %v3902 = vld [vmem:[%s10 + $0x208] sm:$0xff]
    %v3903 = vld [vmem:[%s10 + $0x210] sm:$0xff]
    %v3904 = vld [vmem:[%s10 + $0x218] sm:$0xff]
    %v3905 = vld [vmem:[%s10 + $0x220] sm:$0xff]
    %v3906 = vld [vmem:[%s10 + $0x228] sm:$0xff]
    %v3907 = vld [vmem:[%s10 + $0x230] sm:$0xff]
    %v3908 = vld [vmem:[%s10 + $0x238] sm:$0xff]
    %v3909 = vld [vmem:[%s10 + $0x240] sm:$0xff]
    %v3910 = vld [vmem:[%s10 + $0x248] sm:$0xff]
    %v3911 = vld [vmem:[%s10 + $0x250] sm:$0xff]
    %v3912 = vld [vmem:[%s10 + $0x258] sm:$0xff]
    %v3913 = vld [vmem:[%s10 + $0x260] sm:$0xff]
    %v3914 = vld [vmem:[%s10 + $0x268] sm:$0xff]
    %v3915 = vld [vmem:[%s10 + $0x270] sm:$0xff]
    %v3916 = vld [vmem:[%s10 + $0x278] sm:$0xff]
    %v3917 = vld [vmem:[%s10 + $0x280] sm:$0xff]
    %v3918 = vld [vmem:[%s10 + $0x288] sm:$0xff]
    %v3919 = vld [vmem:[%s10 + $0x290] sm:$0xff]
    %v3920 = vld [vmem:[%s10 + $0x298] sm:$0xff]
    %v3921 = vld [vmem:[%s10 + $0x2a0] sm:$0xff]
    %v3922 = vld [vmem:[%s10 + $0x2a8] sm:$0xff]
    %v3923 = vld [vmem:[%s10 + $0x2b0] sm:$0xff]
    %v3924 = vld [vmem:[%s10 + $0x2b8] sm:$0xff]
    %v3925 = vld [vmem:[%s10 + $0x2c0] sm:$0xff]
    %v3926 = vld [vmem:[%s10 + $0x2c8] sm:$0xff]
    %v3927 = vld [vmem:[%s10 + $0x2d0] sm:$0xff]
    %v3928 = vld [vmem:[%s10 + $0x2d8] sm:$0xff]
    %v3929 = vld [vmem:[%s10 + $0x2e0] sm:$0xff]
    %v3930 = vld [vmem:[%s10 + $0x2e8] sm:$0xff]
    %v3931 = vld [vmem:[%s10 + $0x2f0] sm:$0xff]
    %v3932 = vld [vmem:[%s10 + $0x2f8] sm:$0xff]
    %v3933 = vld [vmem:[%s10 + $0x300] sm:$0xff]
    %v3934 = vld [vmem:[%s10 + $0x308] sm:$0xff]
    %v3935 = vld [vmem:[%s10 + $0x310] sm:$0xff]
    %v3936 = vld [vmem:[%s10 + $0x318] sm:$0xff]
    %v3937 = vld [vmem:[%s10 + $0x320] sm:$0xff]
    %v3938 = vld [vmem:[%s10 + $0x328] sm:$0xff]
    %v3939 = vld [vmem:[%s10 + $0x330] sm:$0xff]
    %v3940 = vld [vmem:[%s10 + $0x338] sm:$0xff]
    %v3941 = vld [vmem:[%s10 + $0x340] sm:$0xff]
    %v3942 = vld [vmem:[%s10 + $0x348] sm:$0xff]
    %v3943 = vld [vmem:[%s10 + $0x350] sm:$0xff]
    %v3944 = vld [vmem:[%s10 + $0x358] sm:$0xff]
    %v3945 = vld [vmem:[%s10 + $0x360] sm:$0xff]
    %v3946 = vld [vmem:[%s10 + $0x368] sm:$0xff]
    %v3947 = vld [vmem:[%s10 + $0x370] sm:$0xff]
    %v3948 = vld [vmem:[%s10 + $0x378] sm:$0xff]
    %v3949 = vld [vmem:[%s10 + $0x380] sm:$0xff]
    %v3950 = vld [vmem:[%s10 + $0x388] sm:$0xff]
    %v3951 = vld [vmem:[%s10 + $0x390] sm:$0xff]
    %v3952 = vld [vmem:[%s10 + $0x398] sm:$0xff]
    %v3953 = vld [vmem:[%s10 + $0x3a0] sm:$0xff]
    %v3954 = vld [vmem:[%s10 + $0x3a8] sm:$0xff]
    %v3955 = vld [vmem:[%s10 + $0x3b0] sm:$0xff]
    %v3956 = vld [vmem:[%s10 + $0x3b8] sm:$0xff]
    %v3957 = vld [vmem:[%s10 + $0x3c0] sm:$0xff]
    %v3958 = vld [vmem:[%s10 + $0x3c8] sm:$0xff]
    %v3959 = vld [vmem:[%s10 + $0x3d0] sm:$0xff]
    %v3960 = vld [vmem:[%s10 + $0x3d8] sm:$0xff]
    %v3961 = vld [vmem:[%s10 + $0x3e0] sm:$0xff]
    %v3962 = vld [vmem:[%s10 + $0x3e8] sm:$0xff]
    %v3963 = vld [vmem:[%s10 + $0x3f0] sm:$0xff]
    %v3964 = vld [vmem:[%s10 + $0x3f8] sm:$0xff]
    %v3965 = vld [vmem:[%s10 + $0x400] sm:$0xff]
    %v3966 = vld [vmem:[%s10 + $0x408] sm:$0xff]
    %v3967 = vld [vmem:[%s10 + $0x410] sm:$0xff]
    %v3968 = vld [vmem:[%s10 + $0x418] sm:$0xff]
    %v3969 = vld [vmem:[%s10 + $0x420] sm:$0xff]
    %v3970 = vld [vmem:[%s10 + $0x428] sm:$0xff]
    %v3971 = vld [vmem:[%s10 + $0x430] sm:$0xff]
    %v3972 = vld [vmem:[%s10 + $0x438] sm:$0xff]
    %v3973 = vld [vmem:[%s10 + $0x440] sm:$0xff]
    %v3974 = vld [vmem:[%s10 + $0x448] sm:$0xff]
    %v3975 = vld [vmem:[%s10 + $0x450] sm:$0xff]
    %v3976 = vld [vmem:[%s10 + $0x458] sm:$0xff]
    %v3977 = vld [vmem:[%s10 + $0x460] sm:$0xff]
    %v3978 = vld [vmem:[%s10 + $0x468] sm:$0xff]
    %v3979 = vld [vmem:[%s10 + $0x470] sm:$0xff]
    %v3980 = vld [vmem:[%s10 + $0x478] sm:$0xff]
    %v3981 = vld [vmem:[%s10 + $0x480] sm:$0xff]
    %v3982 = vld [vmem:[%s10 + $0x488] sm:$0xff]
    %v3983 = vld [vmem:[%s10 + $0x490] sm:$0xff]
    %v3984 = vld [vmem:[%s10 + $0x498] sm:$0xff]
    %v3985 = vld [vmem:[%s10 + $0x4a0] sm:$0xff]
    %v3986 = vld [vmem:[%s10 + $0x4a8] sm:$0xff]
    %v3987 = vld [vmem:[%s10 + $0x4b0] sm:$0xff]
    %v3988 = vld [vmem:[%s10 + $0x4b8] sm:$0xff]
    %v3989 = vld [vmem:[%s10 + $0x4c0] sm:$0xff]
    %v3990 = vld [vmem:[%s10 + $0x4c8] sm:$0xff]
    %v3991 = vld [vmem:[%s10 + $0x4d0] sm:$0xff]
    %v3992 = vld [vmem:[%s10 + $0x4d8] sm:$0xff]
    %v3993 = vld [vmem:[%s10 + $0x4e0] sm:$0xff]
    %v3994 = vld [vmem:[%s10 + $0x4e8] sm:$0xff]
    %v3995 = vld [vmem:[%s10 + $0x4f0] sm:$0xff]
    %v3996 = vld [vmem:[%s10 + $0x4f8] sm:$0xff]
    %v3997 = vld [vmem:[%s10 + $0x500] sm:$0xff]
    %v3998 = vld [vmem:[%s10 + $0x508] sm:$0xff]
    %v3999 = vld [vmem:[%s10 + $0x510] sm:$0xff]
    %v4000 = vld [vmem:[%s10 + $0x518] sm:$0xff]
    %v4001 = vld [vmem:[%s10 + $0x520] sm:$0xff]
    %v4002 = vld [vmem:[%s10 + $0x528] sm:$0xff]
    %v4003 = vld [vmem:[%s10 + $0x530] sm:$0xff]
    %v4004 = vld [vmem:[%s10 + $0x538] sm:$0xff]
    %v4005 = vld [vmem:[%s10 + $0x540] sm:$0xff]
    %v4006 = vld [vmem:[%s10 + $0x548] sm:$0xff]
    %v4007 = vld [vmem:[%s10 + $0x550] sm:$0xff]
    %v4008 = vld [vmem:[%s10 + $0x558] sm:$0xff]
    %v4009 = vld [vmem:[%s10 + $0x560] sm:$0xff]
    %v4010 = vld [vmem:[%s10 + $0x568] sm:$0xff]
    %v4011 = vld [vmem:[%s10 + $0x570] sm:$0xff]
    %v4012 = vld [vmem:[%s10 + $0x578] sm:$0xff]
    %v4013 = vld [vmem:[%s10 + $0x580] sm:$0xff]
    %v4014 = vld [vmem:[%s10 + $0x588] sm:$0xff]
    %v4015 = vld [vmem:[%s10 + $0x590] sm:$0xff]
    %v4016 = vld [vmem:[%s10 + $0x598] sm:$0xff]
    %v4017 = vld [vmem:[%s10 + $0x5a0] sm:$0xff]
    %v4018 = vld [vmem:[%s10 + $0x5a8] sm:$0xff]
    %v4019 = vld [vmem:[%s10 + $0x5b0] sm:$0xff]
    %v4020 = vld [vmem:[%s10 + $0x5b8] sm:$0xff]
    %v4021 = vld [vmem:[%s10 + $0x5c0] sm:$0xff]
    %v4022 = vld [vmem:[%s10 + $0x5c8] sm:$0xff]
    %v4023 = vld [vmem:[%s10 + $0x5d0] sm:$0xff]
    %v4024 = vld [vmem:[%s10 + $0x5d8] sm:$0xff]
    %v4025 = vld [vmem:[%s10 + $0x5e0] sm:$0xff]
    %v4026 = vld [vmem:[%s10 + $0x5e8] sm:$0xff]
    %v4027 = vld [vmem:[%s10 + $0x5f0] sm:$0xff]
    %v4028 = vld [vmem:[%s10 + $0x5f8] sm:$0xff]
    %v4029 = vld [vmem:[%s10 + $0x600] sm:$0xff]
    %v4030 = vld [vmem:[%s10 + $0x608] sm:$0xff]
    %v4031 = vld [vmem:[%s10 + $0x610] sm:$0xff]
    %v4032 = vld [vmem:[%s10 + $0x618] sm:$0xff]
    %v4033 = vld [vmem:[%s10 + $0x620] sm:$0xff]
    %v4034 = vld [vmem:[%s10 + $0x628] sm:$0xff]
    %v4035 = vld [vmem:[%s10 + $0x630] sm:$0xff]
    %v4036 = vld [vmem:[%s10 + $0x638] sm:$0xff]
    %v4037 = vld [vmem:[%s10 + $0x640] sm:$0xff]
    %v4038 = vld [vmem:[%s10 + $0x648] sm:$0xff]
    %v4039 = vld [vmem:[%s10 + $0x650] sm:$0xff]
    %v4040 = vld [vmem:[%s10 + $0x658] sm:$0xff]
    %v4041 = vld [vmem:[%s10 + $0x660] sm:$0xff]
    %v4042 = vld [vmem:[%s10 + $0x668] sm:$0xff]
    %v4043 = vld [vmem:[%s10 + $0x670] sm:$0xff]
    %v4044 = vld [vmem:[%s10 + $0x678] sm:$0xff]
    %v4045 = vld [vmem:[%s10 + $0x680] sm:$0xff]
    %v4046 = vld [vmem:[%s10 + $0x688] sm:$0xff]
    %v4047 = vld [vmem:[%s10 + $0x690] sm:$0xff]
    %v4048 = vld [vmem:[%s10 + $0x698] sm:$0xff]
    %v4049 = vld [vmem:[%s10 + $0x6a0] sm:$0xff]
    %v4050 = vld [vmem:[%s10 + $0x6a8] sm:$0xff]
    %v4051 = vld [vmem:[%s10 + $0x6b0] sm:$0xff]
    %v4052 = vld [vmem:[%s10 + $0x6b8] sm:$0xff]
    %v4053 = vld [vmem:[%s10 + $0x6c0] sm:$0xff]
    %v4054 = vld [vmem:[%s10 + $0x6c8] sm:$0xff]
    %v4055 = vld [vmem:[%s10 + $0x6d0] sm:$0xff]
    %v4056 = vld [vmem:[%s10 + $0x6d8] sm:$0xff]
    %v4057 = vld [vmem:[%s10 + $0x6e0] sm:$0xff]
    %v4058 = vld [vmem:[%s10 + $0x6e8] sm:$0xff]
    %v4059 = vld [vmem:[%s10 + $0x6f0] sm:$0xff]
    %v4060 = vld [vmem:[%s10 + $0x6f8] sm:$0xff]
    %v4061 = vld [vmem:[%s10 + $0x700] sm:$0xff]
    %v4062 = vld [vmem:[%s10 + $0x708] sm:$0xff]
    %v4063 = vld [vmem:[%s10 + $0x710] sm:$0xff]
    %v4064 = vld [vmem:[%s10 + $0x718] sm:$0xff]
    %v4065 = vld [vmem:[%s10 + $0x720] sm:$0xff]
    %v4066 = vld [vmem:[%s10 + $0x728] sm:$0xff]
    %v4067 = vld [vmem:[%s10 + $0x730] sm:$0xff]
    %v4068 = vld [vmem:[%s10 + $0x738] sm:$0xff]
    %v4069 = vld [vmem:[%s10 + $0x740] sm:$0xff]
    %v4070 = vld [vmem:[%s10 + $0x748] sm:$0xff]
    %v4071 = vld [vmem:[%s10 + $0x750] sm:$0xff]
    %v4072 = vld [vmem:[%s10 + $0x758] sm:$0xff]
    %v4073 = vld [vmem:[%s10 + $0x760] sm:$0xff]
    %v4074 = vld [vmem:[%s10 + $0x768] sm:$0xff]
    %v4075 = vld [vmem:[%s10 + $0x770] sm:$0xff]
    %v4076 = vld [vmem:[%s10 + $0x778] sm:$0xff]
    %v4077 = vld [vmem:[%s10 + $0x780] sm:$0xff]
    %v4078 = vld [vmem:[%s10 + $0x788] sm:$0xff]
    %v4079 = vld [vmem:[%s10 + $0x790] sm:$0xff]
    %v4080 = vld [vmem:[%s10 + $0x798] sm:$0xff]
    %v4081 = vld [vmem:[%s10 + $0x7a0] sm:$0xff]
    %v4082 = vld [vmem:[%s10 + $0x7a8] sm:$0xff]
    %v4083 = vld [vmem:[%s10 + $0x7b0] sm:$0xff]
    %v4084 = vld [vmem:[%s10 + $0x7b8] sm:$0xff]
    %v4085 = vld [vmem:[%s10 + $0x7c0] sm:$0xff]
    %v4086 = vld [vmem:[%s10 + $0x7c8] sm:$0xff]
    %v4087 = vld [vmem:[%s10 + $0x7d0] sm:$0xff]
    %v4088 = vld [vmem:[%s10 + $0x7d8] sm:$0xff]
    %v4089 = vld [vmem:[%s10 + $0x7e0] sm:$0xff]
    %v4090 = vld [vmem:[%s10 + $0x7e8] sm:$0xff]
    %v4091 = vld [vmem:[%s10 + $0x7f0] sm:$0xff]
    %v4092 = vld [vmem:[%s10 + $0x7f8] sm:$0xff]
    %v4093 = vld [vmem:[%s11] sm:$0x1]
    %v4095 = vlaneseq
    %v4096 = vshrl.u32 %v4095, 7
    %v4097 = vsub.s32 0, %v4096
    %v4098 = vrot.slane %v4093, %v4097
    %4100 = vmatprep.subr.mxu0 0.0
    %4101 = vmatpush1.msra.mxu0 %v3852
    %4102 = vmatprep.subr.mxu0 0.0
    %4103 = vmatpush1.msra.mxu0 %v3851
    %4104 = vmatprep.subr.mxu0 0.0
    %4105 = vmatpush1.msra.mxu0 %v3850
    %4106 = vmatprep.subr.mxu0 0.0
    %4107 = vmatpush1.msra.mxu0 %v3849
    %4108 = vmatprep.subr.mxu0 0.0
    %4109 = vmatpush1.msra.mxu0 %v3848
    %4110 = vmatprep.subr.mxu0 0.0
    %4111 = vmatpush1.msra.mxu0 %v3847
    %4112 = vmatprep.subr.mxu0 0.0
    %4113 = vmatpush1.msra.mxu0 %v3846
    %4114 = vmatprep.subr.mxu0 0.0
    %4115 = vmatpush1.msra.mxu0 %v3845
    %4116 = vmatprep.subr.mxu0 0.0
    %4117 = vmatpush1.msra.mxu0 %v3844
    %4118 = vmatprep.subr.mxu0 0.0
    %4119 = vmatpush1.msra.mxu0 %v3843
    %4120 = vmatprep.subr.mxu0 0.0
    %4121 = vmatpush1.msra.mxu0 %v3842
    %4122 = vmatprep.subr.mxu0 0.0
    %4123 = vmatpush1.msra.mxu0 %v3841
    %4124 = vmatprep.subr.mxu0 0.0
    %4125 = vmatpush1.msra.mxu0 %v3840
    %4126 = vmatprep.subr.mxu0 0.0
    %4127 = vmatpush1.msra.mxu0 %v3839
    %4128 = vmatprep.subr.mxu0 0.0
    %4129 = vmatpush1.msra.mxu0 %v3838
    %4130 = vmatprep.subr.mxu0 0.0
    %4131 = vmatpush1.msra.mxu0 %v3837
    %4132 = vmatprep.subr.mxu0 0.0
    %4133 = vmatpush2.msra.mxu0 %v3868
    %4134 = vmatprep.subr.mxu0 0.0
    %4135 = vmatpush2.msra.mxu0 %v3867
    %4136 = vmatprep.subr.mxu0 0.0
    %4137 = vmatpush2.msra.mxu0 %v3866
    %4138 = vmatprep.subr.mxu0 0.0
    %4139 = vmatpush2.msra.mxu0 %v3865
    %4140 = vmatprep.subr.mxu0 0.0
    %4141 = vmatpush2.msra.mxu0 %v3864
    %4142 = vmatprep.subr.mxu0 0.0
    %4143 = vmatpush2.msra.mxu0 %v3863
    %4144 = vmatprep.subr.mxu0 0.0
    %4145 = vmatpush2.msra.mxu0 %v3862
    %4146 = vmatprep.subr.mxu0 0.0
    %4147 = vmatpush2.msra.mxu0 %v3861
    %4148 = vmatprep.subr.mxu0 0.0
    %4149 = vmatpush2.msra.mxu0 %v3860
    %4150 = vmatprep.subr.mxu0 0.0
    %4151 = vmatpush2.msra.mxu0 %v3859
    %4152 = vmatprep.subr.mxu0 0.0
    %4153 = vmatpush2.msra.mxu0 %v3858
    %4154 = vmatprep.subr.mxu0 0.0
    %4155 = vmatpush2.msra.mxu0 %v3857
    %4156 = vmatprep.subr.mxu0 0.0
    %4157 = vmatpush2.msra.mxu0 %v3856
    %4158 = vmatprep.subr.mxu0 0.0
    %4159 = vmatpush2.msra.mxu0 %v3855
    %4160 = vmatprep.subr.mxu0 0.0
    %4161 = vmatpush2.msra.mxu0 %v3854
    %4162 = vmatprep.subr.mxu0 0.0
    %4163 = vmatpush2.msra.mxu0 %v3853
    %4164 = vmatprep.mubr.f32.mxu0 %v3806
    %4165 = vmatmul.mubr.f32.gmra.mxu0 %v3805
    %v4166 = vpop.f32.mrf.mxu0
    %v4167 = vadd.f32 %v4098, %v4166
    %v4168 = vpop.f32.mrf.mxu0
    %4169 = vmatprep.mubr.f32.mxu0 %v3822
    %4170 = vmatmul.mubr.f32.gmra.mxu0 %v3821
    %v4171 = vpop.f32.mrf.mxu0
    %v4172 = vadd.f32 %v4098, %v4171
    %v4173 = vpop.f32.mrf.mxu0
    %4174 = vdwg.mxu0
    %4175 = vmatprep.subr.mxu0 0.0
    %4176 = vmatpush1.msra.mxu0 %v3884
    %4177 = vmatprep.subr.mxu0 0.0
    %4178 = vmatpush1.msra.mxu0 %v3883
    %4179 = vmatprep.subr.mxu0 0.0
    %4180 = vmatpush1.msra.mxu0 %v3882
    %4181 = vmatprep.subr.mxu0 0.0
    %4182 = vmatpush1.msra.mxu0 %v3881
    %4183 = vmatprep.subr.mxu0 0.0
    %4184 = vmatpush1.msra.mxu0 %v3880
    %4185 = vmatprep.subr.mxu0 0.0
    %4186 = vmatpush1.msra.mxu0 %v3879
    %4187 = vmatprep.subr.mxu0 0.0
    %4188 = vmatpush1.msra.mxu0 %v3878
    %4189 = vmatprep.subr.mxu0 0.0
    %4190 = vmatpush1.msra.mxu0 %v3877
    %4191 = vmatprep.subr.mxu0 0.0
    %4192 = vmatpush1.msra.mxu0 %v3876
    %4193 = vmatprep.subr.mxu0 0.0
    %4194 = vmatpush1.msra.mxu0 %v3875
    %4195 = vmatprep.subr.mxu0 0.0
    %4196 = vmatpush1.msra.mxu0 %v3874
    %4197 = vmatprep.subr.mxu0 0.0
    %4198 = vmatpush1.msra.mxu0 %v3873
    %4199 = vmatprep.subr.mxu0 0.0
    %4200 = vmatpush1.msra.mxu0 %v3872
    %4201 = vmatprep.subr.mxu0 0.0
    %4202 = vmatpush1.msra.mxu0 %v3871
    %4203 = vmatprep.subr.mxu0 0.0
    %4204 = vmatpush1.msra.mxu0 %v3870
    %4205 = vmatprep.subr.mxu0 0.0
    %4206 = vmatpush1.msra.mxu0 %v3869
    %4207 = vmatprep.subr.mxu0 0.0
    %4208 = vmatpush2.msra.mxu0 %v3900
    %4209 = vmatprep.subr.mxu0 0.0
    %4210 = vmatpush2.msra.mxu0 %v3899
    %4211 = vmatprep.subr.mxu0 0.0
    %4212 = vmatpush2.msra.mxu0 %v3898
    %4213 = vmatprep.subr.mxu0 0.0
    %4214 = vmatpush2.msra.mxu0 %v3897
    %4215 = vmatprep.subr.mxu0 0.0
    %4216 = vmatpush2.msra.mxu0 %v3896
    %4217 = vmatprep.subr.mxu0 0.0
    %4218 = vmatpush2.msra.mxu0 %v3895
    %4219 = vmatprep.subr.mxu0 0.0
    %4220 = vmatpush2.msra.mxu0 %v3894
    %4221 = vmatprep.subr.mxu0 0.0
    %4222 = vmatpush2.msra.mxu0 %v3893
    %4223 = vmatprep.subr.mxu0 0.0
    %4224 = vmatpush2.msra.mxu0 %v3892
    %4225 = vmatprep.subr.mxu0 0.0
    %4226 = vmatpush2.msra.mxu0 %v3891
    %4227 = vmatprep.subr.mxu0 0.0
    %4228 = vmatpush2.msra.mxu0 %v3890
    %4229 = vmatprep.subr.mxu0 0.0
    %4230 = vmatpush2.msra.mxu0 %v3889
    %4231 = vmatprep.subr.mxu0 0.0
    %4232 = vmatpush2.msra.mxu0 %v3888
    %4233 = vmatprep.subr.mxu0 0.0
    %4234 = vmatpush2.msra.mxu0 %v3887
    %4235 = vmatprep.subr.mxu0 0.0
    %4236 = vmatpush2.msra.mxu0 %v3886
    %4237 = vmatprep.subr.mxu0 0.0
    %4238 = vmatpush2.msra.mxu0 %v3885
    %4239 = vmatprep.mubr.f32.mxu0 %v3808
    %4240 = vmatmul.mubr.f32.gmra.mxu0 %v3807
    %v4241 = vpop.f32.mrf.mxu0
    %v4242 = vadd.f32 %v4167, %v4241
    %v4243 = vpop.f32.mrf.mxu0
    %4244 = vmatprep.mubr.f32.mxu0 %v3824
    %4245 = vmatmul.mubr.f32.gmra.mxu0 %v3823
    %v4246 = vpop.f32.mrf.mxu0
    %v4247 = vadd.f32 %v4172, %v4246
    %v4248 = vpop.f32.mrf.mxu0
    %4249 = vdwg.mxu0
    %4250 = vmatprep.subr.mxu0 0.0
    %4251 = vmatpush1.msra.mxu0 %v3916
    %4252 = vmatprep.subr.mxu0 0.0
    %4253 = vmatpush1.msra.mxu0 %v3915
    %4254 = vmatprep.subr.mxu0 0.0
    %4255 = vmatpush1.msra.mxu0 %v3914
    %4256 = vmatprep.subr.mxu0 0.0
    %4257 = vmatpush1.msra.mxu0 %v3913
    %4258 = vmatprep.subr.mxu0 0.0
    %4259 = vmatpush1.msra.mxu0 %v3912
    %4260 = vmatprep.subr.mxu0 0.0
    %4261 = vmatpush1.msra.mxu0 %v3911
    %4262 = vmatprep.subr.mxu0 0.0
    %4263 = vmatpush1.msra.mxu0 %v3910
    %4264 = vmatprep.subr.mxu0 0.0
    %4265 = vmatpush1.msra.mxu0 %v3909
    %4266 = vmatprep.subr.mxu0 0.0
    %4267 = vmatpush1.msra.mxu0 %v3908
    %4268 = vmatprep.subr.mxu0 0.0
    %4269 = vmatpush1.msra.mxu0 %v3907
    %4270 = vmatprep.subr.mxu0 0.0
    %4271 = vmatpush1.msra.mxu0 %v3906
    %4272 = vmatprep.subr.mxu0 0.0
    %4273 = vmatpush1.msra.mxu0 %v3905
    %4274 = vmatprep.subr.mxu0 0.0
    %4275 = vmatpush1.msra.mxu0 %v3904
    %4276 = vmatprep.subr.mxu0 0.0
    %4277 = vmatpush1.msra.mxu0 %v3903
    %4278 = vmatprep.subr.mxu0 0.0
    %4279 = vmatpush1.msra.mxu0 %v3902
    %4280 = vmatprep.subr.mxu0 0.0
    %4281 = vmatpush1.msra.mxu0 %v3901
    %4282 = vmatprep.subr.mxu0 0.0
    %4283 = vmatpush2.msra.mxu0 %v3932
    %4284 = vmatprep.subr.mxu0 0.0
    %4285 = vmatpush2.msra.mxu0 %v3931
    %4286 = vmatprep.subr.mxu0 0.0
    %4287 = vmatpush2.msra.mxu0 %v3930
    %4288 = vmatprep.subr.mxu0 0.0
    %4289 = vmatpush2.msra.mxu0 %v3929
    %4290 = vmatprep.subr.mxu0 0.0
    %4291 = vmatpush2.msra.mxu0 %v3928
    %4292 = vmatprep.subr.mxu0 0.0
    %4293 = vmatpush2.msra.mxu0 %v3927
    %4294 = vmatprep.subr.mxu0 0.0
    %4295 = vmatpush2.msra.mxu0 %v3926
    %4296 = vmatprep.subr.mxu0 0.0
    %4297 = vmatpush2.msra.mxu0 %v3925
    %4298 = vmatprep.subr.mxu0 0.0
    %4299 = vmatpush2.msra.mxu0 %v3924
    %4300 = vmatprep.subr.mxu0 0.0
    %4301 = vmatpush2.msra.mxu0 %v3923
    %4302 = vmatprep.subr.mxu0 0.0
    %4303 = vmatpush2.msra.mxu0 %v3922
    %4304 = vmatprep.subr.mxu0 0.0
    %4305 = vmatpush2.msra.mxu0 %v3921
    %4306 = vmatprep.subr.mxu0 0.0
    %4307 = vmatpush2.msra.mxu0 %v3920
    %4308 = vmatprep.subr.mxu0 0.0
    %4309 = vmatpush2.msra.mxu0 %v3919
    %4310 = vmatprep.subr.mxu0 0.0
    %4311 = vmatpush2.msra.mxu0 %v3918
    %4312 = vmatprep.subr.mxu0 0.0
    %4313 = vmatpush2.msra.mxu0 %v3917
    %4314 = vmatprep.mubr.f32.mxu0 %v3810
    %4315 = vmatmul.mubr.f32.gmra.mxu0 %v3809
    %v4316 = vpop.f32.mrf.mxu0
    %v4317 = vadd.f32 %v4242, %v4316
    %v4318 = vpop.f32.mrf.mxu0
    %4319 = vmatprep.mubr.f32.mxu0 %v3826
    %4320 = vmatmul.mubr.f32.gmra.mxu0 %v3825
    %v4321 = vpop.f32.mrf.mxu0
    %v4322 = vadd.f32 %v4247, %v4321
    %v4323 = vpop.f32.mrf.mxu0
    %4324 = vdwg.mxu0
    %4325 = vmatprep.subr.mxu0 0.0
    %4326 = vmatpush1.msra.mxu0 %v3948
    %4327 = vmatprep.subr.mxu0 0.0
    %4328 = vmatpush1.msra.mxu0 %v3947
    %4329 = vmatprep.subr.mxu0 0.0
    %4330 = vmatpush1.msra.mxu0 %v3946
    %4331 = vmatprep.subr.mxu0 0.0
    %4332 = vmatpush1.msra.mxu0 %v3945
    %4333 = vmatprep.subr.mxu0 0.0
    %4334 = vmatpush1.msra.mxu0 %v3944
    %4335 = vmatprep.subr.mxu0 0.0
    %4336 = vmatpush1.msra.mxu0 %v3943
    %4337 = vmatprep.subr.mxu0 0.0
    %4338 = vmatpush1.msra.mxu0 %v3942
    %4339 = vmatprep.subr.mxu0 0.0
    %4340 = vmatpush1.msra.mxu0 %v3941
    %4341 = vmatprep.subr.mxu0 0.0
    %4342 = vmatpush1.msra.mxu0 %v3940
    %4343 = vmatprep.subr.mxu0 0.0
    %4344 = vmatpush1.msra.mxu0 %v3939
    %4345 = vmatprep.subr.mxu0 0.0
    %4346 = vmatpush1.msra.mxu0 %v3938
    %4347 = vmatprep.subr.mxu0 0.0
    %4348 = vmatpush1.msra.mxu0 %v3937
    %4349 = vmatprep.subr.mxu0 0.0
    %4350 = vmatpush1.msra.mxu0 %v3936
    %4351 = vmatprep.subr.mxu0 0.0
    %4352 = vmatpush1.msra.mxu0 %v3935
    %4353 = vmatprep.subr.mxu0 0.0
    %4354 = vmatpush1.msra.mxu0 %v3934
    %4355 = vmatprep.subr.mxu0 0.0
    %4356 = vmatpush1.msra.mxu0 %v3933
    %4357 = vmatprep.subr.mxu0 0.0
    %4358 = vmatpush2.msra.mxu0 %v3964
    %4359 = vmatprep.subr.mxu0 0.0
    %4360 = vmatpush2.msra.mxu0 %v3963
    %4361 = vmatprep.subr.mxu0 0.0
    %4362 = vmatpush2.msra.mxu0 %v3962
    %4363 = vmatprep.subr.mxu0 0.0
    %4364 = vmatpush2.msra.mxu0 %v3961
    %4365 = vmatprep.subr.mxu0 0.0
    %4366 = vmatpush2.msra.mxu0 %v3960
    %4367 = vmatprep.subr.mxu0 0.0
    %4368 = vmatpush2.msra.mxu0 %v3959
    %4369 = vmatprep.subr.mxu0 0.0
    %4370 = vmatpush2.msra.mxu0 %v3958
    %4371 = vmatprep.subr.mxu0 0.0
    %4372 = vmatpush2.msra.mxu0 %v3957
    %4373 = vmatprep.subr.mxu0 0.0
    %4374 = vmatpush2.msra.mxu0 %v3956
    %4375 = vmatprep.subr.mxu0 0.0
    %4376 = vmatpush2.msra.mxu0 %v3955
    %4377 = vmatprep.subr.mxu0 0.0
    %4378 = vmatpush2.msra.mxu0 %v3954
    %4379 = vmatprep.subr.mxu0 0.0
    %4380 = vmatpush2.msra.mxu0 %v3953
    %4381 = vmatprep.subr.mxu0 0.0
    %4382 = vmatpush2.msra.mxu0 %v3952
    %4383 = vmatprep.subr.mxu0 0.0
    %4384 = vmatpush2.msra.mxu0 %v3951
    %4385 = vmatprep.subr.mxu0 0.0
    %4386 = vmatpush2.msra.mxu0 %v3950
    %4387 = vmatprep.subr.mxu0 0.0
    %4388 = vmatpush2.msra.mxu0 %v3949
    %4389 = vmatprep.mubr.f32.mxu0 %v3812
    %4390 = vmatmul.mubr.f32.gmra.mxu0 %v3811
    %v4391 = vpop.f32.mrf.mxu0
    %v4392 = vadd.f32 %v4317, %v4391
    %v4393 = vpop.f32.mrf.mxu0
    %4394 = vmatprep.mubr.f32.mxu0 %v3828
    %4395 = vmatmul.mubr.f32.gmra.mxu0 %v3827
    %v4396 = vpop.f32.mrf.mxu0
    %v4397 = vadd.f32 %v4322, %v4396
    %v4398 = vpop.f32.mrf.mxu0
    %4399 = vdwg.mxu0
    %4400 = vmatprep.subr.mxu0 0.0
    %4401 = vmatpush1.msra.mxu0 %v3980
    %4402 = vmatprep.subr.mxu0 0.0
    %4403 = vmatpush1.msra.mxu0 %v3979
    %4404 = vmatprep.subr.mxu0 0.0
    %4405 = vmatpush1.msra.mxu0 %v3978
    %4406 = vmatprep.subr.mxu0 0.0
    %4407 = vmatpush1.msra.mxu0 %v3977
    %4408 = vmatprep.subr.mxu0 0.0
    %4409 = vmatpush1.msra.mxu0 %v3976
    %4410 = vmatprep.subr.mxu0 0.0
    %4411 = vmatpush1.msra.mxu0 %v3975
    %4412 = vmatprep.subr.mxu0 0.0
    %4413 = vmatpush1.msra.mxu0 %v3974
    %4414 = vmatprep.subr.mxu0 0.0
    %4415 = vmatpush1.msra.mxu0 %v3973
    %4416 = vmatprep.subr.mxu0 0.0
    %4417 = vmatpush1.msra.mxu0 %v3972
    %4418 = vmatprep.subr.mxu0 0.0
    %4419 = vmatpush1.msra.mxu0 %v3971
    %4420 = vmatprep.subr.mxu0 0.0
    %4421 = vmatpush1.msra.mxu0 %v3970
    %4422 = vmatprep.subr.mxu0 0.0
    %4423 = vmatpush1.msra.mxu0 %v3969
    %4424 = vmatprep.subr.mxu0 0.0
    %4425 = vmatpush1.msra.mxu0 %v3968
    %4426 = vmatprep.subr.mxu0 0.0
    %4427 = vmatpush1.msra.mxu0 %v3967
    %4428 = vmatprep.subr.mxu0 0.0
    %4429 = vmatpush1.msra.mxu0 %v3966
    %4430 = vmatprep.subr.mxu0 0.0
    %4431 = vmatpush1.msra.mxu0 %v3965
    %4432 = vmatprep.subr.mxu0 0.0
    %4433 = vmatpush2.msra.mxu0 %v3996
    %4434 = vmatprep.subr.mxu0 0.0
    %4435 = vmatpush2.msra.mxu0 %v3995
    %4436 = vmatprep.subr.mxu0 0.0
    %4437 = vmatpush2.msra.mxu0 %v3994
    %4438 = vmatprep.subr.mxu0 0.0
    %4439 = vmatpush2.msra.mxu0 %v3993
    %4440 = vmatprep.subr.mxu0 0.0
    %4441 = vmatpush2.msra.mxu0 %v3992
    %4442 = vmatprep.subr.mxu0 0.0
    %4443 = vmatpush2.msra.mxu0 %v3991
    %4444 = vmatprep.subr.mxu0 0.0
    %4445 = vmatpush2.msra.mxu0 %v3990
    %4446 = vmatprep.subr.mxu0 0.0
    %4447 = vmatpush2.msra.mxu0 %v3989
    %4448 = vmatprep.subr.mxu0 0.0
    %4449 = vmatpush2.msra.mxu0 %v3988
    %4450 = vmatprep.subr.mxu0 0.0
    %4451 = vmatpush2.msra.mxu0 %v3987
    %4452 = vmatprep.subr.mxu0 0.0
    %4453 = vmatpush2.msra.mxu0 %v3986
    %4454 = vmatprep.subr.mxu0 0.0
    %4455 = vmatpush2.msra.mxu0 %v3985
    %4456 = vmatprep.subr.mxu0 0.0
    %4457 = vmatpush2.msra.mxu0 %v3984
    %4458 = vmatprep.subr.mxu0 0.0
    %4459 = vmatpush2.msra.mxu0 %v3983
    %4460 = vmatprep.subr.mxu0 0.0
    %4461 = vmatpush2.msra.mxu0 %v3982
    %4462 = vmatprep.subr.mxu0 0.0
    %4463 = vmatpush2.msra.mxu0 %v3981
    %4464 = vmatprep.mubr.f32.mxu0 %v3814
    %4465 = vmatmul.mubr.f32.gmra.mxu0 %v3813
    %v4466 = vpop.f32.mrf.mxu0
    %v4467 = vadd.f32 %v4392, %v4466
    %v4468 = vpop.f32.mrf.mxu0
    %4469 = vmatprep.mubr.f32.mxu0 %v3830
    %4470 = vmatmul.mubr.f32.gmra.mxu0 %v3829
    %v4471 = vpop.f32.mrf.mxu0
    %v4472 = vadd.f32 %v4397, %v4471
    %v4473 = vpop.f32.mrf.mxu0
    %4474 = vdwg.mxu0
    %4475 = vmatprep.subr.mxu0 0.0
    %4476 = vmatpush1.msra.mxu0 %v4012
    %4477 = vmatprep.subr.mxu0 0.0
    %4478 = vmatpush1.msra.mxu0 %v4011
    %4479 = vmatprep.subr.mxu0 0.0
    %4480 = vmatpush1.msra.mxu0 %v4010
    %4481 = vmatprep.subr.mxu0 0.0
    %4482 = vmatpush1.msra.mxu0 %v4009
    %4483 = vmatprep.subr.mxu0 0.0
    %4484 = vmatpush1.msra.mxu0 %v4008
    %4485 = vmatprep.subr.mxu0 0.0
    %4486 = vmatpush1.msra.mxu0 %v4007
    %4487 = vmatprep.subr.mxu0 0.0
    %4488 = vmatpush1.msra.mxu0 %v4006
    %4489 = vmatprep.subr.mxu0 0.0
    %4490 = vmatpush1.msra.mxu0 %v4005
    %4491 = vmatprep.subr.mxu0 0.0
    %4492 = vmatpush1.msra.mxu0 %v4004
    %4493 = vmatprep.subr.mxu0 0.0
    %4494 = vmatpush1.msra.mxu0 %v4003
    %4495 = vmatprep.subr.mxu0 0.0
    %4496 = vmatpush1.msra.mxu0 %v4002
    %4497 = vmatprep.subr.mxu0 0.0
    %4498 = vmatpush1.msra.mxu0 %v4001
    %4499 = vmatprep.subr.mxu0 0.0
    %4500 = vmatpush1.msra.mxu0 %v4000
    %4501 = vmatprep.subr.mxu0 0.0
    %4502 = vmatpush1.msra.mxu0 %v3999
    %4503 = vmatprep.subr.mxu0 0.0
    %4504 = vmatpush1.msra.mxu0 %v3998
    %4505 = vmatprep.subr.mxu0 0.0
    %4506 = vmatpush1.msra.mxu0 %v3997
    %4507 = vmatprep.subr.mxu0 0.0
    %4508 = vmatpush2.msra.mxu0 %v4028
    %4509 = vmatprep.subr.mxu0 0.0
    %4510 = vmatpush2.msra.mxu0 %v4027
    %4511 = vmatprep.subr.mxu0 0.0
    %4512 = vmatpush2.msra.mxu0 %v4026
    %4513 = vmatprep.subr.mxu0 0.0
    %4514 = vmatpush2.msra.mxu0 %v4025
    %4515 = vmatprep.subr.mxu0 0.0
    %4516 = vmatpush2.msra.mxu0 %v4024
    %4517 = vmatprep.subr.mxu0 0.0
    %4518 = vmatpush2.msra.mxu0 %v4023
    %4519 = vmatprep.subr.mxu0 0.0
    %4520 = vmatpush2.msra.mxu0 %v4022
    %4521 = vmatprep.subr.mxu0 0.0
    %4522 = vmatpush2.msra.mxu0 %v4021
    %4523 = vmatprep.subr.mxu0 0.0
    %4524 = vmatpush2.msra.mxu0 %v4020
    %4525 = vmatprep.subr.mxu0 0.0
    %4526 = vmatpush2.msra.mxu0 %v4019
    %4527 = vmatprep.subr.mxu0 0.0
    %4528 = vmatpush2.msra.mxu0 %v4018
    %4529 = vmatprep.subr.mxu0 0.0
    %4530 = vmatpush2.msra.mxu0 %v4017
    %4531 = vmatprep.subr.mxu0 0.0
    %4532 = vmatpush2.msra.mxu0 %v4016
    %4533 = vmatprep.subr.mxu0 0.0
    %4534 = vmatpush2.msra.mxu0 %v4015
    %4535 = vmatprep.subr.mxu0 0.0
    %4536 = vmatpush2.msra.mxu0 %v4014
    %4537 = vmatprep.subr.mxu0 0.0
    %4538 = vmatpush2.msra.mxu0 %v4013
    %4539 = vmatprep.mubr.f32.mxu0 %v3816
    %4540 = vmatmul.mubr.f32.gmra.mxu0 %v3815
    %v4541 = vpop.f32.mrf.mxu0
    %v4542 = vadd.f32 %v4467, %v4541
    %v4543 = vpop.f32.mrf.mxu0
    %4544 = vmatprep.mubr.f32.mxu0 %v3832
    %4545 = vmatmul.mubr.f32.gmra.mxu0 %v3831
    %v4546 = vpop.f32.mrf.mxu0
    %v4547 = vadd.f32 %v4472, %v4546
    %v4548 = vpop.f32.mrf.mxu0
    %4549 = vdwg.mxu0
    %4550 = vmatprep.subr.mxu0 0.0
    %4551 = vmatpush1.msra.mxu0 %v4044
    %4552 = vmatprep.subr.mxu0 0.0
    %4553 = vmatpush1.msra.mxu0 %v4043
    %4554 = vmatprep.subr.mxu0 0.0
    %4555 = vmatpush1.msra.mxu0 %v4042
    %4556 = vmatprep.subr.mxu0 0.0
    %4557 = vmatpush1.msra.mxu0 %v4041
    %4558 = vmatprep.subr.mxu0 0.0
    %4559 = vmatpush1.msra.mxu0 %v4040
    %4560 = vmatprep.subr.mxu0 0.0
    %4561 = vmatpush1.msra.mxu0 %v4039
    %4562 = vmatprep.subr.mxu0 0.0
    %4563 = vmatpush1.msra.mxu0 %v4038
    %4564 = vmatprep.subr.mxu0 0.0
    %4565 = vmatpush1.msra.mxu0 %v4037
    %4566 = vmatprep.subr.mxu0 0.0
    %4567 = vmatpush1.msra.mxu0 %v4036
    %4568 = vmatprep.subr.mxu0 0.0
    %4569 = vmatpush1.msra.mxu0 %v4035
    %4570 = vmatprep.subr.mxu0 0.0
    %4571 = vmatpush1.msra.mxu0 %v4034
    %4572 = vmatprep.subr.mxu0 0.0
    %4573 = vmatpush1.msra.mxu0 %v4033
    %4574 = vmatprep.subr.mxu0 0.0
    %4575 = vmatpush1.msra.mxu0 %v4032
    %4576 = vmatprep.subr.mxu0 0.0
    %4577 = vmatpush1.msra.mxu0 %v4031
    %4578 = vmatprep.subr.mxu0 0.0
    %4579 = vmatpush1.msra.mxu0 %v4030
    %4580 = vmatprep.subr.mxu0 0.0
    %4581 = vmatpush1.msra.mxu0 %v4029
    %4582 = vmatprep.subr.mxu0 0.0
    %4583 = vmatpush2.msra.mxu0 %v4060
    %4584 = vmatprep.subr.mxu0 0.0
    %4585 = vmatpush2.msra.mxu0 %v4059
    %4586 = vmatprep.subr.mxu0 0.0
    %4587 = vmatpush2.msra.mxu0 %v4058
    %4588 = vmatprep.subr.mxu0 0.0
    %4589 = vmatpush2.msra.mxu0 %v4057
    %4590 = vmatprep.subr.mxu0 0.0
    %4591 = vmatpush2.msra.mxu0 %v4056
    %4592 = vmatprep.subr.mxu0 0.0
    %4593 = vmatpush2.msra.mxu0 %v4055
    %4594 = vmatprep.subr.mxu0 0.0
    %4595 = vmatpush2.msra.mxu0 %v4054
    %4596 = vmatprep.subr.mxu0 0.0
    %4597 = vmatpush2.msra.mxu0 %v4053
    %4598 = vmatprep.subr.mxu0 0.0
    %4599 = vmatpush2.msra.mxu0 %v4052
    %4600 = vmatprep.subr.mxu0 0.0
    %4601 = vmatpush2.msra.mxu0 %v4051
    %4602 = vmatprep.subr.mxu0 0.0
    %4603 = vmatpush2.msra.mxu0 %v4050
    %4604 = vmatprep.subr.mxu0 0.0
    %4605 = vmatpush2.msra.mxu0 %v4049
    %4606 = vmatprep.subr.mxu0 0.0
    %4607 = vmatpush2.msra.mxu0 %v4048
    %4608 = vmatprep.subr.mxu0 0.0
    %4609 = vmatpush2.msra.mxu0 %v4047
    %4610 = vmatprep.subr.mxu0 0.0
    %4611 = vmatpush2.msra.mxu0 %v4046
    %4612 = vmatprep.subr.mxu0 0.0
    %4613 = vmatpush2.msra.mxu0 %v4045
    %4614 = vmatprep.mubr.f32.mxu0 %v3818
    %4615 = vmatmul.mubr.f32.gmra.mxu0 %v3817
    %v4616 = vpop.f32.mrf.mxu0
    %v4617 = vadd.f32 %v4542, %v4616
    %v4618 = vpop.f32.mrf.mxu0
    %4619 = vmatprep.mubr.f32.mxu0 %v3834
    %4620 = vmatmul.mubr.f32.gmra.mxu0 %v3833
    %v4621 = vpop.f32.mrf.mxu0
    %v4622 = vadd.f32 %v4547, %v4621
    %v4623 = vpop.f32.mrf.mxu0
    %4624 = vdwg.mxu0
    %4625 = vmatprep.subr.mxu0 0.0
    %4626 = vmatpush1.msra.mxu0 %v4076
    %4627 = vmatprep.subr.mxu0 0.0
    %4628 = vmatpush1.msra.mxu0 %v4075
    %4629 = vmatprep.subr.mxu0 0.0
    %4630 = vmatpush1.msra.mxu0 %v4074
    %4631 = vmatprep.subr.mxu0 0.0
    %4632 = vmatpush1.msra.mxu0 %v4073
    %4633 = vmatprep.subr.mxu0 0.0
    %4634 = vmatpush1.msra.mxu0 %v4072
    %4635 = vmatprep.subr.mxu0 0.0
    %4636 = vmatpush1.msra.mxu0 %v4071
    %4637 = vmatprep.subr.mxu0 0.0
    %4638 = vmatpush1.msra.mxu0 %v4070
    %4639 = vmatprep.subr.mxu0 0.0
    %4640 = vmatpush1.msra.mxu0 %v4069
    %4641 = vmatprep.subr.mxu0 0.0
    %4642 = vmatpush1.msra.mxu0 %v4068
    %4643 = vmatprep.subr.mxu0 0.0
    %4644 = vmatpush1.msra.mxu0 %v4067
    %4645 = vmatprep.subr.mxu0 0.0
    %4646 = vmatpush1.msra.mxu0 %v4066
    %4647 = vmatprep.subr.mxu0 0.0
    %4648 = vmatpush1.msra.mxu0 %v4065
    %4649 = vmatprep.subr.mxu0 0.0
    %4650 = vmatpush1.msra.mxu0 %v4064
    %4651 = vmatprep.subr.mxu0 0.0
    %4652 = vmatpush1.msra.mxu0 %v4063
    %4653 = vmatprep.subr.mxu0 0.0
    %4654 = vmatpush1.msra.mxu0 %v4062
    %4655 = vmatprep.subr.mxu0 0.0
    %4656 = vmatpush1.msra.mxu0 %v4061
    %4657 = vmatprep.subr.mxu0 0.0
    %4658 = vmatpush2.msra.mxu0 %v4092
    %4659 = vmatprep.subr.mxu0 0.0
    %4660 = vmatpush2.msra.mxu0 %v4091
    %4661 = vmatprep.subr.mxu0 0.0
    %4662 = vmatpush2.msra.mxu0 %v4090
    %4663 = vmatprep.subr.mxu0 0.0
    %4664 = vmatpush2.msra.mxu0 %v4089
    %4665 = vmatprep.subr.mxu0 0.0
    %4666 = vmatpush2.msra.mxu0 %v4088
    %4667 = vmatprep.subr.mxu0 0.0
    %4668 = vmatpush2.msra.mxu0 %v4087
    %4669 = vmatprep.subr.mxu0 0.0
    %4670 = vmatpush2.msra.mxu0 %v4086
    %4671 = vmatprep.subr.mxu0 0.0
    %4672 = vmatpush2.msra.mxu0 %v4085
    %4673 = vmatprep.subr.mxu0 0.0
    %4674 = vmatpush2.msra.mxu0 %v4084
    %4675 = vmatprep.subr.mxu0 0.0
    %4676 = vmatpush2.msra.mxu0 %v4083
    %4677 = vmatprep.subr.mxu0 0.0
    %4678 = vmatpush2.msra.mxu0 %v4082
    %4679 = vmatprep.subr.mxu0 0.0
    %4680 = vmatpush2.msra.mxu0 %v4081
    %4681 = vmatprep.subr.mxu0 0.0
    %4682 = vmatpush2.msra.mxu0 %v4080
    %4683 = vmatprep.subr.mxu0 0.0
    %4684 = vmatpush2.msra.mxu0 %v4079
    %4685 = vmatprep.subr.mxu0 0.0
    %4686 = vmatpush2.msra.mxu0 %v4078
    %4687 = vmatprep.subr.mxu0 0.0
    %4688 = vmatpush2.msra.mxu0 %v4077
    %4689 = vmatprep.mubr.f32.mxu0 %v3820
    %4690 = vmatmul.mubr.f32.gmra.mxu0 %v3819
    %v4691 = vpop.f32.mrf.mxu0
    %v4692 = vadd.f32 %v4617, %v4691
    %v4693 = vpop.f32.mrf.mxu0
    %4694 = vmatprep.mubr.f32.mxu0 %v3836
    %4695 = vmatmul.mubr.f32.gmra.mxu0 %v3835
    %v4696 = vpop.f32.mrf.mxu0
    %v4697 = vadd.f32 %v4622, %v4696
    %v4698 = vpop.f32.mrf.mxu0
    %4699 = vdwg.mxu0
    %v4700 = vadd.f32 %v3033, %v4692
    %v4701 = vadd.f32 %v3034, %v4697
    %v4702 = vsel %vm61, %v4700, 0.0
    %4703 = vadd.xlane.f32.xlu0 %v4702
    %v4704 = vpop.xlane.xlu0 %4703
    %v4705 = vsel %vm61, %v4701, 0.0
    %4706 = vadd.xlane.f32.xlu0 %v4705
    %v4707 = vpop.xlane.xlu0 %4706
    %v4708 = vmul.f32 %v4704, %v2996
    %v4709 = vmul.f32 %v4707, %v2996
    %v4710 = vsub.f32 %v4700, %v4708
    %v4711 = vsub.f32 %v4701, %v4709
    %v4712 = vmul.f32 %v4710, %v4710
    %v4713 = vmul.f32 %v4711, %v4711
    %v4714 = vsel %vm61, %v4712, 0.0
    %4715 = vadd.xlane.f32.xlu0 %v4714
    %v4716 = vpop.xlane.xlu0 %4715
    %v4717 = vsel %vm61, %v4713, 0.0
    %4718 = vadd.xlane.f32.xlu0 %v4717
    %v4719 = vpop.xlane.xlu0 %4718
    %v4720 = vmul.f32 %v4716, %v2996
    %v4721 = vmul.f32 %v4719, %v2996
    %v4722 = vadd.f32 %v4720, 1e-05
    %v4723 = vadd.f32 %v4721, 1e-05
    %v4724 = vrsqrt.pop %v4722
    %v4725 = vrsqrt.pop %v4723
    %v4726 = vmul.f32 %v4710, %v4724
    %v4727 = vmul.f32 %v4711, %v4725
    %v4728 = vld [vmem:[%s12] sm:$0x1]
    %v4730 = vlaneseq
    %v4731 = vshrl.u32 %v4730, 7
    %v4732 = vsub.s32 0, %v4731
    %v4733 = vrot.slane %v4728, %v4732
    %v4735 = vmul.f32 %v4726, %v4733
    %v4736 = vmul.f32 %v4727, %v4733
    %v4737 = vld [vmem:[%s13] sm:$0x1]
    %v4739 = vlaneseq
    %v4740 = vshrl.u32 %v4739, 7
    %v4741 = vsub.s32 0, %v4740
    %v4742 = vrot.slane %v4737, %v4741
    %v4744 = vadd.f32 %v4735, %v4742
    %v4745 = vadd.f32 %v4736, %v4742
    %4746 = vst.msk [vmem:[#allocation2] sm:$0xff] %vm61, %v4744
    %4747 = vst.msk [vmem:[#allocation2 + $0x8] sm:$0xff] %vm61, %v4745
    // Predicated region
    $region58: #{tpu_custom_call.1} parent=1 // pred_check
      _
    $region59: #{tpu_custom_call.1} parent=1 // pred_check_branch
      %4749 = sbr.rel (0) target = $region61
    $region60: #{tpu_custom_call.1} parent=1 // pred_region
      %s4751 = ssub.s32 256, 256
      %4752 = vsyncadd [#allocation3], %s4751
      %s4753 = sshll.u32 [#allocation2], 4
      %s4754 = int_to_ptr.vmem [resolvable:$true] %s4753
      %4759 = dma.vmem_to_hbm [thread:$0]  %s4754, 256, %s14, [#allocation3], 128, 128, 8
    $region61: #{tpu_custom_call.1} parent=1 // pred_fallthru
      _
    // Predicated region
    $region62: #{tpu_custom_call.1} parent=1 // pred_check
      _
    $region63: #{tpu_custom_call.1} parent=1 // pred_check_branch
      %4761 = sbr.rel (0) target = $region65
    $region64: #{tpu_custom_call.1} parent=1 // pred_region
      %4762 = dma.done [#allocation3], 256
    $region65: #{tpu_custom_call.1} parent=1 // pred_fallthru
      _
    %4763 = vsyncpa [#allocation3], 1

</llo_original>
